<compile_context>
chip_gen: v6e
topology: v6e:2x2x1
jax: 0.10.0
libtpu: 0.0.40
codegen_flags: <defaults>
</compile_context>

<pallas_src>
import jax
import jax.numpy as jnp
from jax import lax
from jax.experimental import pallas as pl
from jax.experimental.pallas import tpu as pltpu

BN_EPS = 1e-5
_VMEM_LIMIT = 48 * 1024 * 1024  # explicit scoped-VMEM budget; <= v7x's 64 MiB physical


# ---------------------------------------------------------------------------
# Tile pickers.
# ---------------------------------------------------------------------------
def _pick_row_tile(N, H, W, target_rows=2048):
    """Even divisor `th` of H (output image rows per grid step).

    Constraints: th even (2-row halo block alignment) and th*W % 8 == 0 (the
    (th*W, Cout) conv output block needs 8-row alignment).  Prefers the largest
    tile under `target_rows` matmul rows that still leaves >= 2 grid steps."""
    cands = [th for th in range(2, H + 1, 2)
             if H % th == 0 and (th * W) % 8 == 0]
    if not cands:
        raise NotImplementedError(
            f"ConvBlock Pallas kernel needs an even row tile with th*W % 8 == 0 "
            f"(got H={H}, W={W})")  # TODO(synk): generalize to odd / tiny maps
    small = [th for th in cands if th * W <= target_rows]
    cands = small if small else [min(cands)]
    pref = [th for th in cands if N * (H // th) >= 2]   # keep both v7x TCs busy
    return max(pref) if pref else max(cands)


def _pick_ew_tile(M, target_rows=4096):
    """Row tile for the elementwise BN+ELU pass: large, divides M, multiple of 8,
    and leaves >= 2 grid steps when M allows."""
    cap = min(target_rows, M)
    if M // cap < 2 and M >= 16:
        cap = max(M // 2, 8)
    best = 0
    for r in range(8, cap + 1, 8):
        if M % r == 0:
            best = r
    return best if best else M


# ---------------------------------------------------------------------------
# Pass 1: direct 3x3 conv on a row tile (+2-row halo) and per-tile BN partials.
# ---------------------------------------------------------------------------
def _make_conv_stats_kernel(th, W, Cin, Cout):
    def kernel(x_ref, halo_ref, w_ref, conv_ref, stats_ref, xt_ref):
        # x_ref:    (th, W+2, Cin)   padded input rows [h*th, h*th+th)
        # halo_ref: (2,  W+2, Cin)   padded input rows [h*th+th, h*th+th+2)
        # w_ref:    (9, Cin, Cout)   3x3 taps, (ky*3 + kx) major
        # conv_ref: (th*W, Cout)     conv output tile (bf16 / f32)
        # stats_ref:(8, Cout)        row 0 = tile sum, row 1 = tile sum-of-squares
        # xt_ref:   (th+2, W+2, Cin) VMEM scratch: stitched tile + halo
        xt_ref[0:th] = x_ref[...]
        xt_ref[th:th + 2] = halo_ref[...]

        acc = jnp.zeros((th * W, Cout), jnp.float32)
        for ky in range(3):
            for kx in range(3):
                lhs = xt_ref[ky:ky + th, kx:kx + W, :].reshape(th * W, Cin)
                acc = acc + jnp.dot(lhs, w_ref[ky * 3 + kx],
                                    preferred_element_type=jnp.float32)
        conv_ref[...] = acc.astype(conv_ref.dtype)

        psum = jnp.sum(acc, axis=0, keepdims=True)          # (1, Cout)
        psq = jnp.sum(acc * acc, axis=0, keepdims=True)     # (1, Cout)
        row = lax.broadcasted_iota(jnp.int32, (8, Cout), 0)
        stats_ref[...] = (jnp.where(row == 0, psum, 0.0)
                          + jnp.where(row == 1, psq, 0.0))
    return kernel


# ---------------------------------------------------------------------------
# Pass 2: fused BN affine (one FMA) + ELU.
# ---------------------------------------------------------------------------
def _bn_elu_kernel(y_ref, scale_ref, shift_ref, o_ref):
    y = y_ref[...].astype(jnp.float32) * scale_ref[0:1] + shift_ref[0:1]
    # ELU(alpha=1); exp(min(y,0)) keeps the untaken branch overflow-free.
    o_ref[...] = jnp.where(y > 0, y, jnp.exp(jnp.minimum(y, 0.0)) - 1.0)


# ---------------------------------------------------------------------------
# ConvBlock forward (NHWC in / NHWC out).
# ---------------------------------------------------------------------------
def conv_block_forward_nhwc(x_nhwc, w_khwio, gamma, beta, bias=None, *,
                            mxu_dtype=jnp.bfloat16):
    """Conv2d(3x3, pad=1) -> BatchNorm2d (training batch stats) -> ELU.

    `bias` is accepted for API parity with torch.nn.Conv2d but never applied:
    the training-mode BatchNorm right after subtracts the batch mean, which
    absorbs a per-channel bias exactly (verified against the reference)."""
    del bias
    N, H, W, Cin = x_nhwc.shape
    Cout = w_khwio.shape[-1]
    th = _pick_row_tile(N, H, W)
    n_ht = H // th
    n_tiles = N * n_ht
    M = N * H * W
    conv_store_dtype = (jnp.float32 if mxu_dtype in (jnp.float32, "float32")
                        else jnp.bfloat16)

    # Single wrapper-side copy: spatial zero-pad, already in the MXU dtype so the
    # pad write and all kernel DMAs move bf16 bytes.
    xp = jnp.pad(x_nhwc.astype(mxu_dtype), ((0, 0), (1, 1), (1, 1), (0, 0)))
    w9 = w_khwio.reshape(9, Cin, Cout).astype(mxu_dtype)

    halo_blk = th // 2   # halo block index step: element offset (h+1)*th, blocks of 2 rows

    conv_out, stats = pl.pallas_call(
        _make_conv_stats_kernel(th, W, Cin, Cout),
        out_shape=(jax.ShapeDtypeStruct((M, Cout), conv_store_dtype),
                   jax.ShapeDtypeStruct((n_tiles, 8, Cout), jnp.float32)),
        grid_spec=pltpu.PrefetchScalarGridSpec(
            num_scalar_prefetch=0,
            grid=(N, n_ht),
            in_specs=[
                # current th padded rows of image n
                pl.BlockSpec((None, th, W + 2, Cin), lambda n, h: (n, h, 0, 0)),
                # 2-row bottom halo (same array passed a second time)
                pl.BlockSpec((None, 2, W + 2, Cin),
                             lambda n, h: (n, (h + 1) * halo_blk, 0, 0)),
                # weights: grid-resident.  TODO(synk): single-buffer (Buffered(1))
                pl.BlockSpec((9, Cin, Cout), lambda n, h: (0, 0, 0)),
            ],
            out_specs=[
                pl.BlockSpec((th * W, Cout), lambda n, h: (n * n_ht + h, 0)),
                pl.BlockSpec((None, 8, Cout), lambda n, h: (n * n_ht + h, 0, 0)),
            ],
            scratch_shapes=[pltpu.VMEM((th + 2, W + 2, Cin), mxu_dtype)],
        ),
        compiler_params=pltpu.CompilerParams(
            dimension_semantics=("parallel", "parallel"),
            vmem_limit_bytes=_VMEM_LIMIT),
    )(xp, xp, w9)

    # Finalize exact batch statistics (tiny JAX reduce over per-tile partials).
    tot = jnp.sum(stats[:, 0, :], axis=0)
    tot_sq = jnp.sum(stats[:, 1, :], axis=0)
    mean = tot / M
    var = jnp.maximum(tot_sq / M - mean * mean, 0.0)   # biased var (PyTorch fwd)
    scale = gamma.astype(jnp.float32) * lax.rsqrt(var + BN_EPS)
    shift = beta.astype(jnp.float32) - mean * scale
    scale8 = jnp.tile(scale.reshape(1, Cout), (8, 1))
    shift8 = jnp.tile(shift.reshape(1, Cout), (8, 1))

    # Pass 2: y = conv*scale + shift, ELU.  Elementwise -> bigger independent tile.
    r2 = _pick_ew_tile(M)
    out = pl.pallas_call(
        _bn_elu_kernel,
        out_shape=jax.ShapeDtypeStruct((M, Cout), jnp.float32),
        grid_spec=pltpu.PrefetchScalarGridSpec(
            num_scalar_prefetch=0,
            grid=(M // r2,),
            in_specs=[
                pl.BlockSpec((r2, Cout), lambda i: (i, 0)),
                pl.BlockSpec((8, Cout), lambda i: (0, 0)),
                pl.BlockSpec((8, Cout), lambda i: (0, 0)),
            ],
            out_specs=pl.BlockSpec((r2, Cout), lambda i: (i, 0)),
        ),
        compiler_params=pltpu.CompilerParams(
            dimension_semantics=("parallel",),
            vmem_limit_bytes=_VMEM_LIMIT),
    )(conv_out, scale8, shift8)

    return out.reshape(N, H, W, Cout)


def unet_module_forward(x_nchw, block1_params, block2_params, *,
                        mxu_dtype=jnp.bfloat16):
    """UNetModule forward: ConvBlock(Cin,Cout) -> ConvBlock(Cout,Cout), NCHW in/out.

    Activations stay NHWC end-to-end internally; the NCHW<->NHWC transpose happens
    exactly once at the module boundary (matching the PyTorch layout contract)."""
    w1, b1, g1, be1 = block1_params
    w2, b2, g2, be2 = block2_params
    x = jnp.transpose(x_nchw, (0, 2, 3, 1))
    x = conv_block_forward_nhwc(x, w1, g1, be1, bias=b1, mxu_dtype=mxu_dtype)
    x = conv_block_forward_nhwc(x, w2, g2, be2, bias=b2, mxu_dtype=mxu_dtype)
    return jnp.transpose(x, (0, 3, 1, 2))


# ---------------------------------------------------------------------------
# Pure-JAX reference mirroring the PyTorch ConvBlock forward (training-mode BN,
# conv bias applied — it must cancel against the Pallas path that drops it).
# ---------------------------------------------------------------------------
def conv_block_reference(x_nchw, w_khwio, bias, gamma, beta):
    Cout = w_khwio.shape[-1]
    w_oihw = jnp.transpose(w_khwio, (3, 2, 0, 1))
    y = lax.conv_general_dilated(x_nchw, w_oihw, (1, 1), "SAME",
                                 dimension_numbers=("NCHW", "OIHW", "NCHW"))
    y = y + bias.reshape(1, Cout, 1, 1)
    mean = jnp.mean(y, axis=(0, 2, 3), keepdims=True)
    var = jnp.mean((y - mean) ** 2, axis=(0, 2, 3), keepdims=True)
    y = (y - mean) * lax.rsqrt(var + BN_EPS)
    y = y * gamma.reshape(1, Cout, 1, 1) + beta.reshape(1, Cout, 1, 1)
    return jnp.where(y > 0, y, jnp.exp(jnp.minimum(y, 0.0)) - 1.0)


if __name__ == "__main__":
    # UNetModule(in_channels=4, out_channels=8) == ConvBlock(4,8) -> ConvBlock(8,8)
    N, Cin, H, W = 2, 4, 16, 16
    Cout = 8

    key = jax.random.PRNGKey(0)
    kx_, kw1, kb1, kg1, kbe1, kw2, kb2, kg2, kbe2 = jax.random.split(key, 9)

    x = jax.random.normal(kx_, (N, Cin, H, W), dtype=jnp.float32)
    w1 = 0.1 * jax.random.normal(kw1, (3, 3, Cin, Cout), dtype=jnp.float32)
    b1 = 0.1 * jax.random.normal(kb1, (Cout,), dtype=jnp.float32)
    g1 = 1.0 + 0.1 * jax.random.normal(kg1, (Cout,), dtype=jnp.float32)
    be1 = 0.1 * jax.random.normal(kbe1, (Cout,), dtype=jnp.float32)
    w2 = 0.1 * jax.random.normal(kw2, (3, 3, Cout, Cout), dtype=jnp.float32)
    b2 = 0.1 * jax.random.normal(kb2, (Cout,), dtype=jnp.float32)
    g2 = 1.0 + 0.1 * jax.random.normal(kg2, (Cout,), dtype=jnp.float32)
    be2 = 0.1 * jax.random.normal(kbe2, (Cout,), dtype=jnp.float32)

    p1 = (w1, b1, g1, be1)
    p2 = (w2, b2, g2, be2)

    # Reference (applies the conv bias; it cancels under training-mode BN).
    r1 = conv_block_reference(x, w1, b1, g1, be1)
    r2 = conv_block_reference(r1, w2, b2, g2, be2)
    jax.block_until_ready(r2)

    # Exact path (f32 MXU inputs) — strict correctness check of the full module.
    y_f32 = unet_module_forward(x, p1, p2, mxu_dtype=jnp.float32)
    jax.block_until_ready(y_f32)
    assert y_f32.shape == (N, Cout, H, W)
    assert jnp.allclose(y_f32, r2, atol=2e-3, rtol=2e-3), "f32 path mismatch vs reference"

    # Default bf16 MXU path (recommended on v5e/v6e/v7x), f32 accumulation; checked
    # end-to-end (both chained ConvBlocks) with a relative-RMS criterion.
    y_bf16 = unet_module_forward(x, p1, p2)   # mxu_dtype defaults to bfloat16
    jax.block_until_ready(y_bf16)
    rel_rms = float(jnp.linalg.norm(y_bf16 - r2) / jnp.linalg.norm(r2))
    assert rel_rms < 0.03, f"bf16 path rel-RMS error too large: {rel_rms}"

    print("KERNEL_OK")
</pallas_src>

<mosaic_0001>
module attributes {stable_mosaic.version = 11 : i64} {
  func.func @kernel(%arg0: i32, %arg1: i32, %arg2: memref<1x16x18x4xf32, #tpu.memory_space<vmem>>, %arg3: memref<1x2x18x4xf32, #tpu.memory_space<vmem>>, %arg4: memref<9x4x8xf32, #tpu.memory_space<vmem>>, %arg5: memref<256x8xf32, #tpu.memory_space<vmem>>, %arg6: memref<1x8x8xf32, #tpu.memory_space<vmem>>, %arg7: memref<18x18x4xf32, #tpu.memory_space<vmem>>) attributes {dimension_semantics = [#tpu.dimension_semantics<parallel>, #tpu.dimension_semantics<parallel>], iteration_bounds = array<i64: 2, 1>, scalar_prefetch = 0 : i64, scratch_operands = 1 : i64, tpu.core_type = #tpu.core_type<tc>, window_params = [{transform_indices = @transform_0, window_bounds = array<i64: 1, 16, 18, 4>}, {transform_indices = @transform_1, window_bounds = array<i64: 1, 2, 18, 4>}, {pipeline_mode = #tpu.pipeline_mode<synchronous>, transform_indices = @transform_2, window_bounds = array<i64: 9, 4, 8>}, {transform_indices = @transform_3, window_bounds = array<i64: 256, 8>}, {transform_indices = @transform_4, window_bounds = array<i64: 1, 8, 8>}]} {
    %c0 = arith.constant 0 : index
    %c0_0 = arith.constant 0 : index
    %c0_1 = arith.constant 0 : index
    %c0_2 = arith.constant 0 : index
    %0 = vector.load %arg2[%c0, %c0_0, %c0_1, %c0_2] : memref<1x16x18x4xf32, #tpu.memory_space<vmem>>, vector<1x16x18x4xf32>
    %1 = vector.shape_cast %0 : vector<1x16x18x4xf32> to vector<16x18x4xf32>
    %c0_3 = arith.constant 0 : index
    %c0_4 = arith.constant 0 : index
    %c0_5 = arith.constant 0 : index
    %2 = vector.load %arg7[%c0_3, %c0_4, %c0_5] : memref<18x18x4xf32, #tpu.memory_space<vmem>>, vector<16x18x4xf32>
    tpu.vector_store %arg7[%c0_3, %c0_4, %c0_5], %1 {strides = array<i32>} : memref<18x18x4xf32, #tpu.memory_space<vmem>>, vector<16x18x4xf32>,
    %c0_6 = arith.constant 0 : index
    %c0_7 = arith.constant 0 : index
    %c0_8 = arith.constant 0 : index
    %c0_9 = arith.constant 0 : index
    %3 = vector.load %arg3[%c0_6, %c0_7, %c0_8, %c0_9] : memref<1x2x18x4xf32, #tpu.memory_space<vmem>>, vector<1x2x18x4xf32>
    %4 = vector.shape_cast %3 : vector<1x2x18x4xf32> to vector<2x18x4xf32>
    %c16 = arith.constant 16 : index
    %c0_10 = arith.constant 0 : index
    %c0_11 = arith.constant 0 : index
    %5 = vector.load %arg7[%c16, %c0_10, %c0_11] : memref<18x18x4xf32, #tpu.memory_space<vmem>>, vector<2x18x4xf32>
    tpu.vector_store %arg7[%c16, %c0_10, %c0_11], %4 {strides = array<i32>} : memref<18x18x4xf32, #tpu.memory_space<vmem>>, vector<2x18x4xf32>,
    %cst = arith.constant 0.000000e+00 : f32
    %6 = vector.broadcast %cst : f32 to vector<256x8xf32>
    %c0_12 = arith.constant 0 : index
    %c0_13 = arith.constant 0 : index
    %c0_14 = arith.constant 0 : index
    %7 = vector.load %arg7[%c0_12, %c0_13, %c0_14] : memref<18x18x4xf32, #tpu.memory_space<vmem>>, vector<16x16x4xf32>
    %8 = vector.shape_cast %7 : vector<16x16x4xf32> to vector<256x4xf32>
    %c0_15 = arith.constant 0 : index
    %c0_16 = arith.constant 0 : index
    %c0_17 = arith.constant 0 : index
    %9 = vector.load %arg4[%c0_15, %c0_16, %c0_17] : memref<9x4x8xf32, #tpu.memory_space<vmem>>, vector<1x4x8xf32>
    %10 = vector.shape_cast %9 : vector<1x4x8xf32> to vector<4x8xf32>
    %cst_18 = arith.constant dense<0.000000e+00> : vector<256x8xf32>
    %11 = tpu.matmul %8, %10, %cst_18 {dimension_numbers = #tpu.dot_dimension_numbers<[1], [0], [0], [1], [0, 0, 1, 1], [], []>} : vector<256x4xf32>, vector<4x8xf32>, vector<256x8xf32> -> vector<256x8xf32>
    %12 = arith.addf %6, %11 : vector<256x8xf32>
    %c0_19 = arith.constant 0 : index
    %c1 = arith.constant 1 : index
    %c0_20 = arith.constant 0 : index
    %13 = vector.load %arg7[%c0_19, %c1, %c0_20] : memref<18x18x4xf32, #tpu.memory_space<vmem>>, vector<16x16x4xf32>
    %14 = vector.shape_cast %13 : vector<16x16x4xf32> to vector<256x4xf32>
    %c1_21 = arith.constant 1 : index
    %c0_22 = arith.constant 0 : index
    %c0_23 = arith.constant 0 : index
    %15 = vector.load %arg4[%c1_21, %c0_22, %c0_23] : memref<9x4x8xf32, #tpu.memory_space<vmem>>, vector<1x4x8xf32>
    %16 = vector.shape_cast %15 : vector<1x4x8xf32> to vector<4x8xf32>
    %cst_24 = arith.constant dense<0.000000e+00> : vector<256x8xf32>
    %17 = tpu.matmul %14, %16, %cst_24 {dimension_numbers = #tpu.dot_dimension_numbers<[1], [0], [0], [1], [0, 0, 1, 1], [], []>} : vector<256x4xf32>, vector<4x8xf32>, vector<256x8xf32> -> vector<256x8xf32>
    %18 = arith.addf %12, %17 : vector<256x8xf32>
    %c0_25 = arith.constant 0 : index
    %c2 = arith.constant 2 : index
    %c0_26 = arith.constant 0 : index
    %19 = vector.load %arg7[%c0_25, %c2, %c0_26] : memref<18x18x4xf32, #tpu.memory_space<vmem>>, vector<16x16x4xf32>
    %20 = vector.shape_cast %19 : vector<16x16x4xf32> to vector<256x4xf32>
    %c2_27 = arith.constant 2 : index
    %c0_28 = arith.constant 0 : index
    %c0_29 = arith.constant 0 : index
    %21 = vector.load %arg4[%c2_27, %c0_28, %c0_29] : memref<9x4x8xf32, #tpu.memory_space<vmem>>, vector<1x4x8xf32>
    %22 = vector.shape_cast %21 : vector<1x4x8xf32> to vector<4x8xf32>
    %cst_30 = arith.constant dense<0.000000e+00> : vector<256x8xf32>
    %23 = tpu.matmul %20, %22, %cst_30 {dimension_numbers = #tpu.dot_dimension_numbers<[1], [0], [0], [1], [0, 0, 1, 1], [], []>} : vector<256x4xf32>, vector<4x8xf32>, vector<256x8xf32> -> vector<256x8xf32>
    %24 = arith.addf %18, %23 : vector<256x8xf32>
    %c1_31 = arith.constant 1 : index
    %c0_32 = arith.constant 0 : index
    %c0_33 = arith.constant 0 : index
    %25 = vector.load %arg7[%c1_31, %c0_32, %c0_33] : memref<18x18x4xf32, #tpu.memory_space<vmem>>, vector<16x16x4xf32>
    %26 = vector.shape_cast %25 : vector<16x16x4xf32> to vector<256x4xf32>
    %c3 = arith.constant 3 : index
    %c0_34 = arith.constant 0 : index
    %c0_35 = arith.constant 0 : index
    %27 = vector.load %arg4[%c3, %c0_34, %c0_35] : memref<9x4x8xf32, #tpu.memory_space<vmem>>, vector<1x4x8xf32>
    %28 = vector.shape_cast %27 : vector<1x4x8xf32> to vector<4x8xf32>
    %cst_36 = arith.constant dense<0.000000e+00> : vector<256x8xf32>
    %29 = tpu.matmul %26, %28, %cst_36 {dimension_numbers = #tpu.dot_dimension_numbers<[1], [0], [0], [1], [0, 0, 1, 1], [], []>} : vector<256x4xf32>, vector<4x8xf32>, vector<256x8xf32> -> vector<256x8xf32>
    %30 = arith.addf %24, %29 : vector<256x8xf32>
    %c1_37 = arith.constant 1 : index
    %c1_38 = arith.constant 1 : index
    %c0_39 = arith.constant 0 : index
    %31 = vector.load %arg7[%c1_37, %c1_38, %c0_39] : memref<18x18x4xf32, #tpu.memory_space<vmem>>, vector<16x16x4xf32>
    %32 = vector.shape_cast %31 : vector<16x16x4xf32> to vector<256x4xf32>
    %c4 = arith.constant 4 : index
    %c0_40 = arith.constant 0 : index
    %c0_41 = arith.constant 0 : index
    %33 = vector.load %arg4[%c4, %c0_40, %c0_41] : memref<9x4x8xf32, #tpu.memory_space<vmem>>, vector<1x4x8xf32>
    %34 = vector.shape_cast %33 : vector<1x4x8xf32> to vector<4x8xf32>
    %cst_42 = arith.constant dense<0.000000e+00> : vector<256x8xf32>
    %35 = tpu.matmul %32, %34, %cst_42 {dimension_numbers = #tpu.dot_dimension_numbers<[1], [0], [0], [1], [0, 0, 1, 1], [], []>} : vector<256x4xf32>, vector<4x8xf32>, vector<256x8xf32> -> vector<256x8xf32>
    %36 = arith.addf %30, %35 : vector<256x8xf32>
    %c1_43 = arith.constant 1 : index
    %c2_44 = arith.constant 2 : index
    %c0_45 = arith.constant 0 : index
    %37 = vector.load %arg7[%c1_43, %c2_44, %c0_45] : memref<18x18x4xf32, #tpu.memory_space<vmem>>, vector<16x16x4xf32>
    %38 = vector.shape_cast %37 : vector<16x16x4xf32> to vector<256x4xf32>
    %c5 = arith.constant 5 : index
    %c0_46 = arith.constant 0 : index
    %c0_47 = arith.constant 0 : index
    %39 = vector.load %arg4[%c5, %c0_46, %c0_47] : memref<9x4x8xf32, #tpu.memory_space<vmem>>, vector<1x4x8xf32>
    %40 = vector.shape_cast %39 : vector<1x4x8xf32> to vector<4x8xf32>
    %cst_48 = arith.constant dense<0.000000e+00> : vector<256x8xf32>
    %41 = tpu.matmul %38, %40, %cst_48 {dimension_numbers = #tpu.dot_dimension_numbers<[1], [0], [0], [1], [0, 0, 1, 1], [], []>} : vector<256x4xf32>, vector<4x8xf32>, vector<256x8xf32> -> vector<256x8xf32>
    %42 = arith.addf %36, %41 : vector<256x8xf32>
    %c2_49 = arith.constant 2 : index
    %c0_50 = arith.constant 0 : index
    %c0_51 = arith.constant 0 : index
    %43 = vector.load %arg7[%c2_49, %c0_50, %c0_51] : memref<18x18x4xf32, #tpu.memory_space<vmem>>, vector<16x16x4xf32>
    %44 = vector.shape_cast %43 : vector<16x16x4xf32> to vector<256x4xf32>
    %c6 = arith.constant 6 : index
    %c0_52 = arith.constant 0 : index
    %c0_53 = arith.constant 0 : index
    %45 = vector.load %arg4[%c6, %c0_52, %c0_53] : memref<9x4x8xf32, #tpu.memory_space<vmem>>, vector<1x4x8xf32>
    %46 = vector.shape_cast %45 : vector<1x4x8xf32> to vector<4x8xf32>
    %cst_54 = arith.constant dense<0.000000e+00> : vector<256x8xf32>
    %47 = tpu.matmul %44, %46, %cst_54 {dimension_numbers = #tpu.dot_dimension_numbers<[1], [0], [0], [1], [0, 0, 1, 1], [], []>} : vector<256x4xf32>, vector<4x8xf32>, vector<256x8xf32> -> vector<256x8xf32>
    %48 = arith.addf %42, %47 : vector<256x8xf32>
    %c2_55 = arith.constant 2 : index
    %c1_56 = arith.constant 1 : index
    %c0_57 = arith.constant 0 : index
    %49 = vector.load %arg7[%c2_55, %c1_56, %c0_57] : memref<18x18x4xf32, #tpu.memory_space<vmem>>, vector<16x16x4xf32>
    %50 = vector.shape_cast %49 : vector<16x16x4xf32> to vector<256x4xf32>
    %c7 = arith.constant 7 : index
    %c0_58 = arith.constant 0 : index
    %c0_59 = arith.constant 0 : index
    %51 = vector.load %arg4[%c7, %c0_58, %c0_59] : memref<9x4x8xf32, #tpu.memory_space<vmem>>, vector<1x4x8xf32>
    %52 = vector.shape_cast %51 : vector<1x4x8xf32> to vector<4x8xf32>
    %cst_60 = arith.constant dense<0.000000e+00> : vector<256x8xf32>
    %53 = tpu.matmul %50, %52, %cst_60 {dimension_numbers = #tpu.dot_dimension_numbers<[1], [0], [0], [1], [0, 0, 1, 1], [], []>} : vector<256x4xf32>, vector<4x8xf32>, vector<256x8xf32> -> vector<256x8xf32>
    %54 = arith.addf %48, %53 : vector<256x8xf32>
    %c2_61 = arith.constant 2 : index
    %c2_62 = arith.constant 2 : index
    %c0_63 = arith.constant 0 : index
    %55 = vector.load %arg7[%c2_61, %c2_62, %c0_63] : memref<18x18x4xf32, #tpu.memory_space<vmem>>, vector<16x16x4xf32>
    %56 = vector.shape_cast %55 : vector<16x16x4xf32> to vector<256x4xf32>
    %c8 = arith.constant 8 : index
    %c0_64 = arith.constant 0 : index
    %c0_65 = arith.constant 0 : index
    %57 = vector.load %arg4[%c8, %c0_64, %c0_65] : memref<9x4x8xf32, #tpu.memory_space<vmem>>, vector<1x4x8xf32>
    %58 = vector.shape_cast %57 : vector<1x4x8xf32> to vector<4x8xf32>
    %cst_66 = arith.constant dense<0.000000e+00> : vector<256x8xf32>
    %59 = tpu.matmul %56, %58, %cst_66 {dimension_numbers = #tpu.dot_dimension_numbers<[1], [0], [0], [1], [0, 0, 1, 1], [], []>} : vector<256x4xf32>, vector<4x8xf32>, vector<256x8xf32> -> vector<256x8xf32>
    %60 = arith.addf %54, %59 : vector<256x8xf32>
    %c0_67 = arith.constant 0 : index
    %c0_68 = arith.constant 0 : index
    %61 = vector.load %arg5[%c0_67, %c0_68] : memref<256x8xf32, #tpu.memory_space<vmem>>, vector<256x8xf32>
    tpu.vector_store %arg5[%c0_67, %c0_68], %60 {strides = array<i32>} : memref<256x8xf32, #tpu.memory_space<vmem>>, vector<256x8xf32>,
    %cst_69 = arith.constant dense<0.000000e+00> : vector<8xf32>
    %62 = vector.multi_reduction <add>, %60, %cst_69 [0] : vector<256x8xf32> to vector<8xf32>
    %63 = vector.shape_cast %62 : vector<8xf32> to vector<1x8xf32>
    %64 = arith.mulf %60, %60 : vector<256x8xf32>
    %cst_70 = arith.constant dense<0.000000e+00> : vector<8xf32>
    %65 = vector.multi_reduction <add>, %64, %cst_70 [0] : vector<256x8xf32> to vector<8xf32>
    %66 = vector.shape_cast %65 : vector<8xf32> to vector<1x8xf32>
    %67 = tpu.iota {dimensions = array<i32: 0>} : vector<8x8xi32>
    %c0_i32 = arith.constant 0 : i32
    %68 = vector.broadcast %c0_i32 : i32 to vector<8x8xi32>
    %69 = arith.cmpi eq, %67, %68 : vector<8x8xi32>
    %cst_71 = arith.constant 0.000000e+00 : f32
    %70 = vector.shape_cast %63 : vector<1x8xf32> to vector<1x8xf32>
    %71 = vector.broadcast %70 : vector<1x8xf32> to vector<8x8xf32>
    %72 = vector.broadcast %cst_71 : f32 to vector<8x8xf32>
    %73 = arith.select %69, %71, %72 : vector<8x8xi1>, vector<8x8xf32>
    %c1_i32 = arith.constant 1 : i32
    %74 = vector.broadcast %c1_i32 : i32 to vector<8x8xi32>
    %75 = arith.cmpi eq, %67, %74 : vector<8x8xi32>
    %cst_72 = arith.constant 0.000000e+00 : f32
    %76 = vector.shape_cast %66 : vector<1x8xf32> to vector<1x8xf32>
    %77 = vector.broadcast %76 : vector<1x8xf32> to vector<8x8xf32>
    %78 = vector.broadcast %cst_72 : f32 to vector<8x8xf32>
    %79 = arith.select %75, %77, %78 : vector<8x8xi1>, vector<8x8xf32>
    %80 = arith.addf %73, %79 : vector<8x8xf32>
    %c0_73 = arith.constant 0 : index
    %c0_74 = arith.constant 0 : index
    %c0_75 = arith.constant 0 : index
    %81 = vector.load %arg6[%c0_73, %c0_74, %c0_75] : memref<1x8x8xf32, #tpu.memory_space<vmem>>, vector<1x8x8xf32>
    %82 = vector.shape_cast %81 : vector<1x8x8xf32> to vector<8x8xf32>
    %83 = vector.shape_cast %80 : vector<8x8xf32> to vector<1x8x8xf32>
    tpu.vector_store %arg6[%c0_73, %c0_74, %c0_75], %83 {strides = array<i32>} : memref<1x8x8xf32, #tpu.memory_space<vmem>>, vector<1x8x8xf32>,
    return
  }
  func.func @transform_0(%arg0: i32, %arg1: i32) -> (i32, i32, i32, i32) {
    %c0_i32 = arith.constant 0 : i32
    %c0_i32_0 = arith.constant 0 : i32
    %c0_i32_1 = arith.constant 0 : i32
    return %arg0, %arg1, %c0_i32, %c0_i32_0 : i32, i32, i32, i32
  }
  func.func @transform_1(%arg0: i32, %arg1: i32) -> (i32, i32, i32, i32) {
    %c1_i32 = arith.constant 1 : i32
    %0 = arith.addi %arg1, %c1_i32 : i32
    %c8_i32 = arith.constant 8 : i32
    %1 = arith.muli %0, %c8_i32 : i32
    %c0_i32 = arith.constant 0 : i32
    %c0_i32_0 = arith.constant 0 : i32
    %c0_i32_1 = arith.constant 0 : i32
    return %arg0, %1, %c0_i32, %c0_i32_0 : i32, i32, i32, i32
  }
  func.func @transform_2(%arg0: i32, %arg1: i32) -> (i32, i32, i32) {
    %c0_i32 = arith.constant 0 : i32
    %c0_i32_0 = arith.constant 0 : i32
    %c0_i32_1 = arith.constant 0 : i32
    %c0_i32_2 = arith.constant 0 : i32
    return %c0_i32, %c0_i32_0, %c0_i32_1 : i32, i32, i32
  }
  func.func @transform_3(%arg0: i32, %arg1: i32) -> (i32, i32) {
    %c1_i32 = arith.constant 1 : i32
    %0 = arith.muli %arg0, %c1_i32 : i32
    %1 = arith.addi %0, %arg1 : i32
    %c0_i32 = arith.constant 0 : i32
    %c0_i32_0 = arith.constant 0 : i32
    return %1, %c0_i32 : i32, i32
  }
  func.func @transform_4(%arg0: i32, %arg1: i32) -> (i32, i32, i32) {
    %c1_i32 = arith.constant 1 : i32
    %0 = arith.muli %arg0, %c1_i32 : i32
    %1 = arith.addi %0, %arg1 : i32
    %c0_i32 = arith.constant 0 : i32
    %c0_i32_0 = arith.constant 0 : i32
    %c0_i32_1 = arith.constant 0 : i32
    return %1, %c0_i32, %c0_i32_0 : i32, i32, i32
  }
}

</mosaic_0001>

<llo_original>
// kernel: tpu_custom_call.1
$region0: #{tpu_custom_call.1}
  #allocation0 [shape = 'u32[]', space=smem, size = 0x4, offset = 0x4, fixed_abs, tag = 'smem constant byte address 0x4 - core index']
  #allocation1 [shape = 'u32[144,128]{1,0:T(1,128)}', space=vmem, size = 0x12000, scoped, tag = 'internal scratch']
  #allocation2 [shape = 'f32[18,18,4]{2,1,0:T(8,128)}', space=vmem, size = 0x36000, scoped, tag = 'scratch operand']
  %s0 = inlined_call_operand.vmem [shape: f32[2,18,18,4], index: 0, kind: input, shape index: {}]
  %s1 = inlined_call_operand.vmem [shape: f32[2,18,18,4], index: 1, kind: input, shape index: {}]
  %s2 = inlined_call_operand.vmem [shape: f32[9,4,8], index: 2, kind: input, shape index: {}]
  %s3 = inlined_call_operand.vmem [shape: f32[512,8], index: 3, kind: output, shape index: {0}]
  %s4 = inlined_call_operand.hbm [shape: f32[2,8,8], index: 4, kind: output, shape index: {1}]
  %5 = xla_tuple %s3, %s4
  %s6 = sld [smem:[#allocation0]]
  $region53: #{tpu_custom_call.1} parent=0
    _
  %s8 = ssub.s32 1, %s6
  %s9 = scalar_select 0, %s8, %s6
  $region1: #{tpu_custom_call.1} parent=0
    #allocation3 [shape = 'u8[8192]{0}', space=vmem, size = 0x2000, scoped, tag = 'output window, operand 1']
    #allocation4 [shape = 's32[2]{0}', space=sflag, size = 0x8, scoped, tag = 'scoped memory for tpu_custom_call.1']
    %10 = vsyncpa [#allocation4], 0
    %s11 = scalar_lea.sflag [#allocation4], 1
    %12 = vsyncpa %s11, 0
    loop: start=0, step=1, limit=4
    $region2: #{tpu_custom_call.1} parent=1 // loop_pre_header
      _
    $region3: #{tpu_custom_call.1} parent=1 // loop_header
      %s14 = sphi 0, %s18
      %p15 = scmp.ge.s32.totalorder %s14, 4
      %s21 = sphi 0, %s33
      %s22 = sphi 0, %s29
      %s23 = sphi 0, %s21
      %s24 = sphi 0, %s22
      %s25 = sphi 0, %s23
      %s26 = sphi 0, %s24
      %s38 = sphi 0, %s40
      %s41 = sphi 0, %s38
      %s42 = sphi 0, %s41
      %s58 = sphi 0, %s42
      %s70 = sphi 0, %s72
      %s73 = sphi 0, %s70
      %s74 = sphi 0, %s73
      %s90 = sphi 0, %s74
      %s94 = sphi 0, %s94
      %s96 = sphi 0, %s94
      %s97 = sphi 0, %s96
      %s111 = sphi 0, %s97
      %s119 = sphi 0, %s121
      %s122 = sphi 0, %s119
      %s123 = sphi 0, %s122
      %s139 = sphi 0, %s123
      %s147 = sphi 0, %s149
      %s150 = sphi 0, %s147
      %s151 = sphi 0, %s150
      %s167 = sphi 0, %s151
    $region4: #{tpu_custom_call.1} parent=1 // loop_header_branch
      %17 = sbr.rel (%p15) target = $region8
    $region5: #{tpu_custom_call.1} parent=1 // loop_body
      %s19 = ssub.s32 %s14, 1
      %s20 = ssub.s32 %s14, 2
      %s27 = sadd.s32 1, %s22
      %p28 = scmp.ge.s32.totalorder %s27, 1
      %s29 = scalar_select %p28, 0, %s27
      %s30 = sadd.s32 1, %s21
      %s31 = scalar_select %p28, %s30, %s21
      %p32 = scmp.ge.s32.totalorder %s31, 2
      %s33 = scalar_select %p32, 0, %s31
      %s34 = ssub.s32 %s21, %s33
      %s35 = ssub.s32 %s22, %s29
      %s36 = sor.u32 %s34, %s35
      %p37 = scmp.eq.s32.totalorder %s36, 0
      %s39 = sadd.s32 %s38, 1
      %s40 = scalar_select %p37, %s38, %s39
      %p43 = pneg %p37
      %p44 = scmp.eq.s32.totalorder %s14, 1
      %p45 = por %p43, %p44
      %p46 = scmp.ne.s32.totalorder %s38, %s41
      %p47 = scmp.eq.s32.totalorder %s14, 0
      %p48 = por %p46, %p47
      %p49 = scmp.ne.s32.totalorder %s38, %s41
      %p50 = scmp.eq.s32.totalorder %s19, 1
      %p51 = por %p49, %p50
      %p52 = scmp.ne.s32.totalorder %s41, %s42
      %p53 = scmp.eq.s32.totalorder %s19, 0
      %p54 = por %p52, %p53
      %p55 = scmp.ne.s32.totalorder %s41, %s42
      %p56 = scmp.eq.s32.totalorder %s20, 1
      %p57 = por %p55, %p56
      %p59 = scmp.ne.s32.totalorder %s42, %s58
      %p60 = scmp.eq.s32.totalorder %s20, 0
      %p61 = por %p59, %p60
      %s62 = sadd.s32 %s22, 1
      %s63 = smul.u32 %s62, 8
      %s64 = sadd.s32 %s29, 1
      %s65 = smul.u32 %s64, 8
      %s66 = ssub.s32 %s21, %s33
      %s67 = ssub.s32 %s63, %s65
      %s68 = sor.u32 %s66, %s67
      %p69 = scmp.eq.s32.totalorder %s68, 0
      %s71 = sadd.s32 %s70, 1
      %s72 = scalar_select %p69, %s70, %s71
      %p75 = pneg %p69
      %p76 = scmp.eq.s32.totalorder %s14, 1
      %p77 = por %p75, %p76
      %p78 = scmp.ne.s32.totalorder %s70, %s73
      %p79 = scmp.eq.s32.totalorder %s14, 0
      %p80 = por %p78, %p79
      %p81 = scmp.ne.s32.totalorder %s70, %s73
      %p82 = scmp.eq.s32.totalorder %s19, 1
      %p83 = por %p81, %p82
      %p84 = scmp.ne.s32.totalorder %s73, %s74
      %p85 = scmp.eq.s32.totalorder %s19, 0
      %p86 = por %p84, %p85
      %p87 = scmp.ne.s32.totalorder %s73, %s74
      %p88 = scmp.eq.s32.totalorder %s20, 1
      %p89 = por %p87, %p88
      %p91 = scmp.ne.s32.totalorder %s74, %s90
      %p92 = scmp.eq.s32.totalorder %s20, 0
      %p93 = por %p91, %p92
      %s95 = sadd.s32 %s94, 1
      %p98 = scmp.eq.s32.totalorder %s14, 1
      %p99 = scmp.ne.s32.totalorder %s94, %s96
      %p100 = scmp.eq.s32.totalorder %s14, 0
      %p101 = por %p99, %p100
      %p102 = scmp.ne.s32.totalorder %s94, %s96
      %p103 = scmp.eq.s32.totalorder %s19, 1
      %p104 = por %p102, %p103
      %p105 = scmp.ne.s32.totalorder %s96, %s97
      %p106 = scmp.eq.s32.totalorder %s19, 0
      %p107 = por %p105, %p106
      %p108 = scmp.ne.s32.totalorder %s96, %s97
      %p109 = scmp.eq.s32.totalorder %s20, 1
      %p110 = por %p108, %p109
      %p112 = scmp.ne.s32.totalorder %s97, %s111
      %p113 = scmp.eq.s32.totalorder %s20, 0
      %p114 = por %p112, %p113
      %s115 = sadd.s32 %s21, %s22
      %s116 = sadd.s32 %s33, %s29
      %s117 = ssub.s32 %s115, %s116
      %p118 = scmp.eq.s32.totalorder %s117, 0
      %s120 = sadd.s32 %s119, 1
      %s121 = scalar_select %p118, %s119, %s120
      %p124 = pneg %p118
      %p125 = scmp.eq.s32.totalorder %s14, 1
      %p126 = por %p124, %p125
      %p127 = scmp.ne.s32.totalorder %s119, %s122
      %p128 = scmp.eq.s32.totalorder %s14, 0
      %p129 = por %p127, %p128
      %p130 = scmp.ne.s32.totalorder %s119, %s122
      %p131 = scmp.eq.s32.totalorder %s19, 1
      %p132 = por %p130, %p131
      %p133 = scmp.ne.s32.totalorder %s122, %s123
      %p134 = scmp.eq.s32.totalorder %s19, 0
      %p135 = por %p133, %p134
      %p136 = scmp.ne.s32.totalorder %s122, %s123
      %p137 = scmp.eq.s32.totalorder %s20, 1
      %p138 = por %p136, %p137
      %p140 = scmp.ne.s32.totalorder %s123, %s139
      %p141 = scmp.eq.s32.totalorder %s20, 0
      %p142 = por %p140, %p141
      %s143 = sadd.s32 %s21, %s22
      %s144 = sadd.s32 %s33, %s29
      %s145 = ssub.s32 %s143, %s144
      %p146 = scmp.eq.s32.totalorder %s145, 0
      %s148 = sadd.s32 %s147, 1
      %s149 = scalar_select %p146, %s147, %s148
      %p152 = pneg %p146
      %p153 = scmp.eq.s32.totalorder %s14, 1
      %p154 = por %p152, %p153
      %p155 = scmp.ne.s32.totalorder %s147, %s150
      %p156 = scmp.eq.s32.totalorder %s14, 0
      %p157 = por %p155, %p156
      %p158 = scmp.ne.s32.totalorder %s147, %s150
      %p159 = scmp.eq.s32.totalorder %s19, 1
      %p160 = por %p158, %p159
      %p161 = scmp.ne.s32.totalorder %s150, %s151
      %p162 = scmp.eq.s32.totalorder %s19, 0
      %p163 = por %p161, %p162
      %p164 = scmp.ne.s32.totalorder %s150, %s151
      %p165 = scmp.eq.s32.totalorder %s20, 1
      %p166 = por %p164, %p165
      %p168 = scmp.ne.s32.totalorder %s151, %s167
      %p169 = scmp.eq.s32.totalorder %s20, 0
      %p170 = por %p168, %p169
      %p171 = scmp.le.s32.totalorder 1, %s14
      %p172 = scmp.lt.s32.totalorder %s14, 3
      %p173 = pnand %p171, %p172
      %p174 = pneg %p173
      // Predicated region
      $region9: #{tpu_custom_call.1} parent=5 // pred_check
        _
      $region10: #{tpu_custom_call.1} parent=5 // pred_check_branch
        %176 = sbr.rel (%p173) target = $region12
      $region11: #{tpu_custom_call.1} parent=5 // pred_region
        %s177 = ssub.s32 %s14, 1
        // Predicated region
        $region13: #{tpu_custom_call.1} parent=11 // pred_check
          %p178 = pneg %p107
        $region14: #{tpu_custom_call.1} parent=11 // pred_check_branch
          %180 = sbr.rel (%p178) target = $region16
        $region15: #{tpu_custom_call.1} parent=11 // pred_region
          _
        $region16: #{tpu_custom_call.1} parent=11 // pred_fallthru
          _
      $region12: #{tpu_custom_call.1} parent=5 // pred_fallthru
        _
      %p181 = scmp.lt.s32.totalorder %s14, 2
      // Predicated region
      $region17: #{tpu_custom_call.1} parent=5 // pred_check
        %p182 = pneg %p181
      $region18: #{tpu_custom_call.1} parent=5 // pred_check_branch
        %184 = sbr.rel (%p182) target = $region20
      $region19: #{tpu_custom_call.1} parent=5 // pred_region
        // Predicated region
        $region21: #{tpu_custom_call.1} parent=19 // pred_check
          %p185 = pneg %p48
        $region22: #{tpu_custom_call.1} parent=19 // pred_check_branch
          %187 = sbr.rel (%p185) target = $region24
        $region23: #{tpu_custom_call.1} parent=19 // pred_region
          %s188 = smul.u32 16, %s22
          %s189 = ssub.s32 18, %s188
          %p190 = scmp.lt.s32.totalorder %s189, 16
          %s191 = scalar_select %p190, %s189, 16
          %s192 = smul.u32 128, %s191
          %s193 = smul.u32 %s192, 3
          %p194 = scmp.lt.s32.totalorder %s21, 1
          %s195 = scalar_select %p194, %s21, 1
          %p196 = scmp.lt.s32.totalorder %s188, 17
          %s197 = scalar_select %p196, %s188, 17
          %s198 = smul.addr %s197, 3
          %s199 = smul.addr %s195, 54
          %s200 = sadd.s32 %s198, %s199
          %s201 = smul.addr %s200, 8
          %s202 = scalar_lea.vmem %s0, %s201
          %s203 = smul.u32 16, %s22
          %s204 = ssub.s32 18, %s203
          %p205 = scmp.lt.s32.totalorder %s204, 16
          %s206 = scalar_select %p205, %s204, 16
          %s207 = smul.u32 128, %s206
          %s208 = smul.u32 %s207, 3
        $region24: #{tpu_custom_call.1} parent=19 // pred_fallthru
          _
        // Predicated region
        $region25: #{tpu_custom_call.1} parent=19 // pred_check
          %p209 = pneg %p80
        $region26: #{tpu_custom_call.1} parent=19 // pred_check_branch
          %211 = sbr.rel (%p209) target = $region28
        $region27: #{tpu_custom_call.1} parent=19 // pred_region
          %s212 = sadd.s32 %s22, 1
          %s213 = smul.u32 %s212, 8
          %s214 = smul.u32 2, %s213
          %p215 = scmp.lt.s32.totalorder %s21, 1
          %s216 = scalar_select %p215, %s21, 1
          %p217 = scmp.lt.s32.totalorder %s214, 17
          %s218 = scalar_select %p217, %s214, 17
          %s219 = smul.addr %s218, 3
          %s220 = smul.addr %s216, 54
          %s221 = sadd.s32 %s219, %s220
          %s222 = smul.addr %s221, 8
          %s223 = scalar_lea.vmem %s1, %s222
          %s224 = sadd.s32 %s22, 1
          %s225 = smul.u32 %s224, 8
          %s226 = smul.u32 2, %s225
        $region28: #{tpu_custom_call.1} parent=19 // pred_fallthru
          _
      $region20: #{tpu_custom_call.1} parent=5 // pred_fallthru
        _
      %p227 = scmp.le.s32.totalorder 1, %s14
      %p228 = scmp.lt.s32.totalorder %s14, 3
      %p229 = pnand %p227, %p228
      %p230 = pneg %p229
      // Predicated region
      $region29: #{tpu_custom_call.1} parent=5 // pred_check
        _
      $region30: #{tpu_custom_call.1} parent=5 // pred_check_branch
        %232 = sbr.rel (%p229) target = $region32
      $region31: #{tpu_custom_call.1} parent=5 // pred_region
        %s233 = ssub.s32 %s14, 1
        %s234 = smul.u32 16, %s24
        %s235 = ssub.s32 18, %s234
        %p236 = scmp.lt.s32.totalorder %s235, 16
        %s237 = scalar_select %p236, %s235, 16
        %s238 = smul.u32 128, %s237
        %s239 = smul.u32 %s238, 3
        %p240 = scmp.lt.s32.totalorder %s23, 1
        %s241 = scalar_select %p240, %s23, 1
        %p242 = scmp.lt.s32.totalorder %s234, 17
        %s243 = scalar_select %p242, %s234, 17
        %s244 = smul.addr %s243, 3
        %s245 = smul.addr %s241, 54
        %s246 = sadd.s32 %s244, %s245
        %s247 = smul.addr %s246, 8
        %s248 = scalar_lea.vmem %s0, %s247
        %p249 = pneg %p54
        %p250 = pneg %p51
        %s251 = sadd.s32 %s24, 1
        %s252 = smul.u32 %s251, 8
        %s253 = smul.u32 2, %s252
        %p254 = scmp.lt.s32.totalorder %s23, 1
        %s255 = scalar_select %p254, %s23, 1
        %p256 = scmp.lt.s32.totalorder %s253, 17
        %s257 = scalar_select %p256, %s253, 17
        %s258 = smul.addr %s257, 3
        %s259 = smul.addr %s255, 54
        %s260 = sadd.s32 %s258, %s259
        %s261 = smul.addr %s260, 8
        %s262 = scalar_lea.vmem %s1, %s261
        %p263 = pneg %p86
        %p264 = pneg %p83
        %p265 = pneg %p107
        %p266 = pneg %p104
        %p267 = pneg %p135
        %p268 = pneg %p132
        %s269 = sadd.s32 %s23, %s24
        %s270 = smul.u32 32, %s269
        %p271 = scmp.lt.s32.totalorder %s270, 63
        %s272 = scalar_select %p271, %s270, 63
        %s273 = smul.addr %s272, 8
        %s274 = scalar_lea.vmem %s3, %s273
        %p275 = pneg %p163
        %p276 = pneg %p160
        %s277 = sand.u32 %s150, 1
        %s278 = scalar_lea.sflag [#allocation4], %s277
        %s279 = sand.u32 %s150, 1
        %s280 = smul.addr %s279, 8
        %s281 = scalar_lea.vmem [#allocation3], %s280
        %s282 = smul.u32 16, %s24
        %s283 = ssub.s32 18, %s282
        %p284 = scmp.lt.s32.totalorder %s283, 16
        %s285 = scalar_select %p284, %s283, 16
        %s286 = smul.u32 128, %s285
        %s287 = smul.u32 %s286, 3
        %p288 = scmp.lt.s32.totalorder %s23, 1
        %s289 = scalar_select %p288, %s23, 1
        %p290 = scmp.lt.s32.totalorder %s282, 17
        %s291 = scalar_select %p290, %s282, 17
        %s292 = smul.addr %s291, 3
        %s293 = smul.addr %s289, 54
        %s294 = sadd.s32 %s292, %s293
        %s295 = smul.addr %s294, 8
        %s296 = scalar_lea.vmem %s0, %s295
        %s297 = smul.u32 16, %s24
        %s298 = ssub.s32 18, %s297
        %p299 = scmp.lt.s32.totalorder %s298, 16
        %s300 = scalar_select %p299, %s298, 16
        %s301 = smul.u32 128, %s300
        %s302 = smul.u32 %s301, 3
        %s303 = sadd.s32 %s24, 1
        %s304 = smul.u32 %s303, 8
        %s305 = smul.u32 2, %s304
        %p306 = scmp.lt.s32.totalorder %s23, 1
        %s307 = scalar_select %p306, %s23, 1
        %p308 = scmp.lt.s32.totalorder %s305, 17
        %s309 = scalar_select %p308, %s305, 17
        %s310 = smul.addr %s309, 3
        %s311 = smul.addr %s307, 54
        %s312 = sadd.s32 %s310, %s311
        %s313 = smul.addr %s312, 8
        %s314 = scalar_lea.vmem %s1, %s313
        %s315 = sadd.s32 %s24, 1
        %s316 = smul.u32 %s315, 8
        %s317 = smul.u32 2, %s316
        %s318 = sadd.s32 %s23, %s24
        %s319 = smul.u32 32, %s318
        %p320 = scmp.lt.s32.totalorder %s319, 63
        %s321 = scalar_select %p320, %s319, 63
        %s322 = smul.addr %s321, 8
        %s323 = scalar_lea.vmem %s3, %s322
        %s324 = sadd.s32 %s23, %s24
        %s325 = smul.u32 32, %s324
        %s326 = sadd.s32 %s23, %s24
        %v327 = vld [vmem:[%s296] sm:$0xff]
        %v328 = vld [vmem:[%s296 + $0x8] sm:$0xff]
        %v329 = vld [vmem:[%s296 + $0x10] sm:$0x3]
        %v330 = vld [vmem:[%s296 + $0x18] sm:$0xff]
        %v331 = vld [vmem:[%s296 + $0x20] sm:$0xff]
        %v332 = vld [vmem:[%s296 + $0x28] sm:$0x3]
        %v333 = vld [vmem:[%s296 + $0x30] sm:$0xff]
        %v334 = vld [vmem:[%s296 + $0x38] sm:$0xff]
        %v335 = vld [vmem:[%s296 + $0x40] sm:$0x3]
        %v336 = vld [vmem:[%s296 + $0x48] sm:$0xff]
        %v337 = vld [vmem:[%s296 + $0x50] sm:$0xff]
        %v338 = vld [vmem:[%s296 + $0x58] sm:$0x3]
        %v339 = vld [vmem:[%s296 + $0x60] sm:$0xff]
        %v340 = vld [vmem:[%s296 + $0x68] sm:$0xff]
        %v341 = vld [vmem:[%s296 + $0x70] sm:$0x3]
        %v342 = vld [vmem:[%s296 + $0x78] sm:$0xff]
        %v343 = vld [vmem:[%s296 + $0x80] sm:$0xff]
        %v344 = vld [vmem:[%s296 + $0x88] sm:$0x3]
        %v345 = vld [vmem:[%s296 + $0x90] sm:$0xff]
        %v346 = vld [vmem:[%s296 + $0x98] sm:$0xff]
        %v347 = vld [vmem:[%s296 + $0xa0] sm:$0x3]
        %v348 = vld [vmem:[%s296 + $0xa8] sm:$0xff]
        %v349 = vld [vmem:[%s296 + $0xb0] sm:$0xff]
        %v350 = vld [vmem:[%s296 + $0xb8] sm:$0x3]
        %v351 = vld [vmem:[%s296 + $0xc0] sm:$0xff]
        %v352 = vld [vmem:[%s296 + $0xc8] sm:$0xff]
        %v353 = vld [vmem:[%s296 + $0xd0] sm:$0x3]
        %v354 = vld [vmem:[%s296 + $0xd8] sm:$0xff]
        %v355 = vld [vmem:[%s296 + $0xe0] sm:$0xff]
        %v356 = vld [vmem:[%s296 + $0xe8] sm:$0x3]
        %v357 = vld [vmem:[%s296 + $0xf0] sm:$0xff]
        %v358 = vld [vmem:[%s296 + $0xf8] sm:$0xff]
        %v359 = vld [vmem:[%s296 + $0x100] sm:$0x3]
        %v360 = vld [vmem:[%s296 + $0x108] sm:$0xff]
        %v361 = vld [vmem:[%s296 + $0x110] sm:$0xff]
        %v362 = vld [vmem:[%s296 + $0x118] sm:$0x3]
        %v363 = vld [vmem:[%s296 + $0x120] sm:$0xff]
        %v364 = vld [vmem:[%s296 + $0x128] sm:$0xff]
        %v365 = vld [vmem:[%s296 + $0x130] sm:$0x3]
        %v366 = vld [vmem:[%s296 + $0x138] sm:$0xff]
        %v367 = vld [vmem:[%s296 + $0x140] sm:$0xff]
        %v368 = vld [vmem:[%s296 + $0x148] sm:$0x3]
        %v369 = vld [vmem:[%s296 + $0x150] sm:$0xff]
        %v370 = vld [vmem:[%s296 + $0x158] sm:$0xff]
        %v371 = vld [vmem:[%s296 + $0x160] sm:$0x3]
        %v372 = vld [vmem:[%s296 + $0x168] sm:$0xff]
        %v373 = vld [vmem:[%s296 + $0x170] sm:$0xff]
        %v374 = vld [vmem:[%s296 + $0x178] sm:$0x3]
        %vm375 = vcmask 31744
        %376 = vst.msk [vmem:[#allocation2] sm:$0xff] %vm375, %v327
        %377 = vst.msk [vmem:[#allocation2 + $0x8] sm:$0xff] %vm375, %v328
        %vm378 = vcmask 25600
        %379 = vst.msk [vmem:[#allocation2 + $0x10] sm:$0x3] %vm378, %v329
        %380 = vst.msk [vmem:[#allocation2 + $0x18] sm:$0xff] %vm375, %v330
        %381 = vst.msk [vmem:[#allocation2 + $0x20] sm:$0xff] %vm375, %v331
        %382 = vst.msk [vmem:[#allocation2 + $0x28] sm:$0x3] %vm378, %v332
        %383 = vst.msk [vmem:[#allocation2 + $0x30] sm:$0xff] %vm375, %v333
        %384 = vst.msk [vmem:[#allocation2 + $0x38] sm:$0xff] %vm375, %v334
        %385 = vst.msk [vmem:[#allocation2 + $0x40] sm:$0x3] %vm378, %v335
        %386 = vst.msk [vmem:[#allocation2 + $0x48] sm:$0xff] %vm375, %v336
        %387 = vst.msk [vmem:[#allocation2 + $0x50] sm:$0xff] %vm375, %v337
        %388 = vst.msk [vmem:[#allocation2 + $0x58] sm:$0x3] %vm378, %v338
        %389 = vst.msk [vmem:[#allocation2 + $0x60] sm:$0xff] %vm375, %v339
        %390 = vst.msk [vmem:[#allocation2 + $0x68] sm:$0xff] %vm375, %v340
        %391 = vst.msk [vmem:[#allocation2 + $0x70] sm:$0x3] %vm378, %v341
        %392 = vst.msk [vmem:[#allocation2 + $0x78] sm:$0xff] %vm375, %v342
        %393 = vst.msk [vmem:[#allocation2 + $0x80] sm:$0xff] %vm375, %v343
        %394 = vst.msk [vmem:[#allocation2 + $0x88] sm:$0x3] %vm378, %v344
        %395 = vst.msk [vmem:[#allocation2 + $0x90] sm:$0xff] %vm375, %v345
        %396 = vst.msk [vmem:[#allocation2 + $0x98] sm:$0xff] %vm375, %v346
        %397 = vst.msk [vmem:[#allocation2 + $0xa0] sm:$0x3] %vm378, %v347
        %398 = vst.msk [vmem:[#allocation2 + $0xa8] sm:$0xff] %vm375, %v348
        %399 = vst.msk [vmem:[#allocation2 + $0xb0] sm:$0xff] %vm375, %v349
        %400 = vst.msk [vmem:[#allocation2 + $0xb8] sm:$0x3] %vm378, %v350
        %401 = vst.msk [vmem:[#allocation2 + $0xc0] sm:$0xff] %vm375, %v351
        %402 = vst.msk [vmem:[#allocation2 + $0xc8] sm:$0xff] %vm375, %v352
        %403 = vst.msk [vmem:[#allocation2 + $0xd0] sm:$0x3] %vm378, %v353
        %404 = vst.msk [vmem:[#allocation2 + $0xd8] sm:$0xff] %vm375, %v354
        %405 = vst.msk [vmem:[#allocation2 + $0xe0] sm:$0xff] %vm375, %v355
        %406 = vst.msk [vmem:[#allocation2 + $0xe8] sm:$0x3] %vm378, %v356
        %407 = vst.msk [vmem:[#allocation2 + $0xf0] sm:$0xff] %vm375, %v357
        %408 = vst.msk [vmem:[#allocation2 + $0xf8] sm:$0xff] %vm375, %v358
        %409 = vst.msk [vmem:[#allocation2 + $0x100] sm:$0x3] %vm378, %v359
        %410 = vst.msk [vmem:[#allocation2 + $0x108] sm:$0xff] %vm375, %v360
        %411 = vst.msk [vmem:[#allocation2 + $0x110] sm:$0xff] %vm375, %v361
        %412 = vst.msk [vmem:[#allocation2 + $0x118] sm:$0x3] %vm378, %v362
        %413 = vst.msk [vmem:[#allocation2 + $0x120] sm:$0xff] %vm375, %v363
        %414 = vst.msk [vmem:[#allocation2 + $0x128] sm:$0xff] %vm375, %v364
        %415 = vst.msk [vmem:[#allocation2 + $0x130] sm:$0x3] %vm378, %v365
        %416 = vst.msk [vmem:[#allocation2 + $0x138] sm:$0xff] %vm375, %v366
        %417 = vst.msk [vmem:[#allocation2 + $0x140] sm:$0xff] %vm375, %v367
        %418 = vst.msk [vmem:[#allocation2 + $0x148] sm:$0x3] %vm378, %v368
        %419 = vst.msk [vmem:[#allocation2 + $0x150] sm:$0xff] %vm375, %v369
        %420 = vst.msk [vmem:[#allocation2 + $0x158] sm:$0xff] %vm375, %v370
        %421 = vst.msk [vmem:[#allocation2 + $0x160] sm:$0x3] %vm378, %v371
        %422 = vst.msk [vmem:[#allocation2 + $0x168] sm:$0xff] %vm375, %v372
        %423 = vst.msk [vmem:[#allocation2 + $0x170] sm:$0xff] %vm375, %v373
        %424 = vst.msk [vmem:[#allocation2 + $0x178] sm:$0x3] %vm378, %v374
        %v425 = vld [vmem:[%s314] sm:$0xff]
        %v426 = vld [vmem:[%s314 + $0x8] sm:$0xff]
        %v427 = vld [vmem:[%s314 + $0x10] sm:$0x3]
        %v428 = vld [vmem:[%s314 + $0x18] sm:$0xff]
        %v429 = vld [vmem:[%s314 + $0x20] sm:$0xff]
        %v430 = vld [vmem:[%s314 + $0x28] sm:$0x3]
        %s431 = scalar_lea.vmem [#allocation2], 384
        %432 = vst.msk [vmem:[%s431] sm:$0xff] %vm375, %v425
        %433 = vst.msk [vmem:[%s431 + $0x8] sm:$0xff] %vm375, %v426
        %434 = vst.msk [vmem:[%s431 + $0x10] sm:$0x3] %vm378, %v427
        %435 = vst.msk [vmem:[%s431 + $0x18] sm:$0xff] %vm375, %v428
        %436 = vst.msk [vmem:[%s431 + $0x20] sm:$0xff] %vm375, %v429
        %437 = vst.msk [vmem:[%s431 + $0x28] sm:$0x3] %vm378, %v430
        %v438 = vld [vmem:[#allocation2] sm:$0xff]
        %v439 = vld [vmem:[#allocation2 + $0x8] sm:$0xff]
        %v440 = vld [vmem:[#allocation2 + $0x18] sm:$0xff]
        %v441 = vld [vmem:[#allocation2 + $0x20] sm:$0xff]
        %v442 = vld [vmem:[#allocation2 + $0x30] sm:$0xff]
        %v443 = vld [vmem:[#allocation2 + $0x38] sm:$0xff]
        %v444 = vld [vmem:[#allocation2 + $0x48] sm:$0xff]
        %v445 = vld [vmem:[#allocation2 + $0x50] sm:$0xff]
        %v446 = vld [vmem:[#allocation2 + $0x60] sm:$0xff]
        %v447 = vld [vmem:[#allocation2 + $0x68] sm:$0xff]
        %v448 = vld [vmem:[#allocation2 + $0x78] sm:$0xff]
        %v449 = vld [vmem:[#allocation2 + $0x80] sm:$0xff]
        %v450 = vld [vmem:[#allocation2 + $0x90] sm:$0xff]
        %v451 = vld [vmem:[#allocation2 + $0x98] sm:$0xff]
        %v452 = vld [vmem:[#allocation2 + $0xa8] sm:$0xff]
        %v453 = vld [vmem:[#allocation2 + $0xb0] sm:$0xff]
        %v454 = vld [vmem:[#allocation2 + $0xc0] sm:$0xff]
        %v455 = vld [vmem:[#allocation2 + $0xc8] sm:$0xff]
        %v456 = vld [vmem:[#allocation2 + $0xd8] sm:$0xff]
        %v457 = vld [vmem:[#allocation2 + $0xe0] sm:$0xff]
        %v458 = vld [vmem:[#allocation2 + $0xf0] sm:$0xff]
        %v459 = vld [vmem:[#allocation2 + $0xf8] sm:$0xff]
        %v460 = vld [vmem:[#allocation2 + $0x108] sm:$0xff]
        %v461 = vld [vmem:[#allocation2 + $0x110] sm:$0xff]
        %v462 = vld [vmem:[#allocation2 + $0x120] sm:$0xff]
        %v463 = vld [vmem:[#allocation2 + $0x128] sm:$0xff]
        %v464 = vld [vmem:[#allocation2 + $0x138] sm:$0xff]
        %v465 = vld [vmem:[#allocation2 + $0x140] sm:$0xff]
        %v466 = vld [vmem:[#allocation2 + $0x150] sm:$0xff]
        %v467 = vld [vmem:[#allocation2 + $0x158] sm:$0xff]
        %v468 = vld [vmem:[#allocation2 + $0x168] sm:$0xff]
        %v469 = vld [vmem:[#allocation2 + $0x170] sm:$0xff]
        %v470 = vld [vmem:[%s2] sm:$0xf]
        %v471 = vld [vmem:[#allocation2 + $0x1] sm:$0xff]
        %v472 = vld [vmem:[#allocation2 + $0x9] sm:$0xff]
        %v473 = vld [vmem:[#allocation2 + $0x19] sm:$0xff]
        %v474 = vld [vmem:[#allocation2 + $0x21] sm:$0xff]
        %v475 = vld [vmem:[#allocation2 + $0x31] sm:$0xff]
        %v476 = vld [vmem:[#allocation2 + $0x39] sm:$0xff]
        %v477 = vld [vmem:[#allocation2 + $0x49] sm:$0xff]
        %v478 = vld [vmem:[#allocation2 + $0x51] sm:$0xff]
        %v479 = vld [vmem:[#allocation2 + $0x61] sm:$0xff]
        %v480 = vld [vmem:[#allocation2 + $0x69] sm:$0xff]
        %v481 = vld [vmem:[#allocation2 + $0x79] sm:$0xff]
        %v482 = vld [vmem:[#allocation2 + $0x81] sm:$0xff]
        %v483 = vld [vmem:[#allocation2 + $0x91] sm:$0xff]
        %v484 = vld [vmem:[#allocation2 + $0x99] sm:$0xff]
        %v485 = vld [vmem:[#allocation2 + $0xa9] sm:$0xff]
        %v486 = vld [vmem:[#allocation2 + $0xb1] sm:$0xff]
        %v487 = vld [vmem:[#allocation2 + $0xc1] sm:$0xff]
        %v488 = vld [vmem:[#allocation2 + $0xc9] sm:$0xff]
        %v489 = vld [vmem:[#allocation2 + $0xd9] sm:$0xff]
        %v490 = vld [vmem:[#allocation2 + $0xe1] sm:$0xff]
        %v491 = vld [vmem:[#allocation2 + $0xf1] sm:$0xff]
        %v492 = vld [vmem:[#allocation2 + $0xf9] sm:$0xff]
        %v493 = vld [vmem:[#allocation2 + $0x109] sm:$0xff]
        %v494 = vld [vmem:[#allocation2 + $0x111] sm:$0xff]
        %v495 = vld [vmem:[#allocation2 + $0x121] sm:$0xff]
        %v496 = vld [vmem:[#allocation2 + $0x129] sm:$0xff]
        %v497 = vld [vmem:[#allocation2 + $0x139] sm:$0xff]
        %v498 = vld [vmem:[#allocation2 + $0x141] sm:$0xff]
        %v499 = vld [vmem:[#allocation2 + $0x151] sm:$0xff]
        %v500 = vld [vmem:[#allocation2 + $0x159] sm:$0xff]
        %v501 = vld [vmem:[#allocation2 + $0x169] sm:$0xff]
        %v502 = vld [vmem:[#allocation2 + $0x171] sm:$0xff]
        %s503 = scalar_lea.vmem %s2, 4
        %v504 = vld [vmem:[%s503] sm:$0xf]
        %v506 = vsel %vm375, %v471, 0
        %v509 = vsel %vm375, %v472, 0
        %v512 = vsel %vm375, %v473, 0
        %v515 = vsel %vm375, %v474, 0
        %v518 = vsel %vm375, %v475, 0
        %v521 = vsel %vm375, %v476, 0
        %v524 = vsel %vm375, %v477, 0
        %v527 = vsel %vm375, %v478, 0
        %v530 = vsel %vm375, %v479, 0
        %v533 = vsel %vm375, %v480, 0
        %v536 = vsel %vm375, %v481, 0
        %v539 = vsel %vm375, %v482, 0
        %v542 = vsel %vm375, %v483, 0
        %v545 = vsel %vm375, %v484, 0
        %v548 = vsel %vm375, %v485, 0
        %v551 = vsel %vm375, %v486, 0
        %v554 = vsel %vm375, %v487, 0
        %v557 = vsel %vm375, %v488, 0
        %v560 = vsel %vm375, %v489, 0
        %v563 = vsel %vm375, %v490, 0
        %v566 = vsel %vm375, %v491, 0
        %v569 = vsel %vm375, %v492, 0
        %v572 = vsel %vm375, %v493, 0
        %v575 = vsel %vm375, %v494, 0
        %v578 = vsel %vm375, %v495, 0
        %v581 = vsel %vm375, %v496, 0
        %v584 = vsel %vm375, %v497, 0
        %v587 = vsel %vm375, %v498, 0
        %v590 = vsel %vm375, %v499, 0
        %v593 = vsel %vm375, %v500, 0
        %v596 = vsel %vm375, %v501, 0
        %v599 = vsel %vm375, %v502, 0
        %vm601 = vcmask 1043456
        %v603 = vsel %vm601, %v504, 0
        %605 = vmatprep.subr.mxu0 0.0
        %606 = vmatpush1.msra.mxu0 0.0
        %607 = vmatprep.subr.mxu0 0.0
        %608 = vmatpush1.msra.mxu0 0.0
        %609 = vmatprep.subr.mxu0 0.0
        %610 = vmatpush1.msra.mxu0 0.0
        %611 = vmatprep.subr.mxu0 0.0
        %612 = vmatpush1.msra.mxu0 0.0
        %613 = vmatprep.subr.mxu0 0.0
        %614 = vmatpush1.msra.mxu0 0.0
        %615 = vmatprep.subr.mxu0 0.0
        %616 = vmatpush1.msra.mxu0 0.0
        %617 = vmatprep.subr.mxu0 0.0
        %618 = vmatpush1.msra.mxu0 0.0
        %619 = vmatprep.subr.mxu0 0.0
        %620 = vmatpush1.msra.mxu0 0.0
        %621 = vmatprep.subr.mxu0 0.0
        %622 = vmatpush1.msra.mxu0 0.0
        %623 = vmatprep.subr.mxu0 0.0
        %624 = vmatpush1.msra.mxu0 0.0
        %625 = vmatprep.subr.mxu0 0.0
        %626 = vmatpush1.msra.mxu0 0.0
        %627 = vmatprep.subr.mxu0 0.0
        %628 = vmatpush1.msra.mxu0 0.0
        %629 = vmatprep.subr.mxu0 0.0
        %630 = vmatpush1.msra.mxu0 0.0
        %631 = vmatprep.subr.mxu0 0.0
        %632 = vmatpush1.msra.mxu0 0.0
        %633 = vmatprep.subr.mxu0 0.0
        %634 = vmatpush1.msra.mxu0 0.0
        %635 = vmatprep.subr.mxu0 0.0
        %636 = vmatpush1.msra.mxu0 %v603
        %637 = vmatprep.subr.mxu0 0.0
        %638 = vmatpush2.msra.mxu0 0.0
        %639 = vmatprep.subr.mxu0 0.0
        %640 = vmatpush2.msra.mxu0 0.0
        %641 = vmatprep.subr.mxu0 0.0
        %642 = vmatpush2.msra.mxu0 0.0
        %643 = vmatprep.subr.mxu0 0.0
        %644 = vmatpush2.msra.mxu0 0.0
        %645 = vmatprep.subr.mxu0 0.0
        %646 = vmatpush2.msra.mxu0 0.0
        %647 = vmatprep.subr.mxu0 0.0
        %648 = vmatpush2.msra.mxu0 0.0
        %649 = vmatprep.subr.mxu0 0.0
        %650 = vmatpush2.msra.mxu0 0.0
        %651 = vmatprep.subr.mxu0 0.0
        %652 = vmatpush2.msra.mxu0 0.0
        %653 = vmatprep.subr.mxu0 0.0
        %654 = vmatpush2.msra.mxu0 0.0
        %655 = vmatprep.subr.mxu0 0.0
        %656 = vmatpush2.msra.mxu0 0.0
        %657 = vmatprep.subr.mxu0 0.0
        %658 = vmatpush2.msra.mxu0 0.0
        %659 = vmatprep.subr.mxu0 0.0
        %660 = vmatpush2.msra.mxu0 0.0
        %661 = vmatprep.subr.mxu0 0.0
        %662 = vmatpush2.msra.mxu0 0.0
        %663 = vmatprep.subr.mxu0 0.0
        %664 = vmatpush2.msra.mxu0 0.0
        %665 = vmatprep.subr.mxu0 0.0
        %666 = vmatpush2.msra.mxu0 0.0
        %667 = vmatprep.subr.mxu0 0.0
        %668 = vmatpush2.msra.mxu0 0.0
        %669 = vmatprep.mubr.f32.mxu0 0.0
        %670 = vmatmul.mubr.f32.gmra.mxu0 %v506
        %v671 = vpop.f32.mrf.mxu0
        %v672 = vadd.f32 0.0, %v671
        %v673 = vpop.f32.mrf.mxu0
        %674 = vmatprep.mubr.f32.mxu0 0.0
        %675 = vmatmul.mubr.f32.gmra.mxu0 %v509
        %v676 = vpop.f32.mrf.mxu0
        %v677 = vadd.f32 0.0, %v676
        %v678 = vpop.f32.mrf.mxu0
        %679 = vmatprep.mubr.f32.mxu0 0.0
        %680 = vmatmul.mubr.f32.gmra.mxu0 %v512
        %v681 = vpop.f32.mrf.mxu0
        %v682 = vadd.f32 0.0, %v681
        %v683 = vpop.f32.mrf.mxu0
        %684 = vmatprep.mubr.f32.mxu0 0.0
        %685 = vmatmul.mubr.f32.gmra.mxu0 %v515
        %v686 = vpop.f32.mrf.mxu0
        %v687 = vadd.f32 0.0, %v686
        %v688 = vpop.f32.mrf.mxu0
        %689 = vmatprep.mubr.f32.mxu0 0.0
        %690 = vmatmul.mubr.f32.gmra.mxu0 %v518
        %v691 = vpop.f32.mrf.mxu0
        %v692 = vadd.f32 0.0, %v691
        %v693 = vpop.f32.mrf.mxu0
        %694 = vmatprep.mubr.f32.mxu0 0.0
        %695 = vmatmul.mubr.f32.gmra.mxu0 %v521
        %v696 = vpop.f32.mrf.mxu0
        %v697 = vadd.f32 0.0, %v696
        %v698 = vpop.f32.mrf.mxu0
        %699 = vmatprep.mubr.f32.mxu0 0.0
        %700 = vmatmul.mubr.f32.gmra.mxu0 %v524
        %v701 = vpop.f32.mrf.mxu0
        %v702 = vadd.f32 0.0, %v701
        %v703 = vpop.f32.mrf.mxu0
        %704 = vmatprep.mubr.f32.mxu0 0.0
        %705 = vmatmul.mubr.f32.gmra.mxu0 %v527
        %v706 = vpop.f32.mrf.mxu0
        %v707 = vadd.f32 0.0, %v706
        %v708 = vpop.f32.mrf.mxu0
        %709 = vmatprep.mubr.f32.mxu0 0.0
        %710 = vmatmul.mubr.f32.gmra.mxu0 %v530
        %v711 = vpop.f32.mrf.mxu0
        %v712 = vadd.f32 0.0, %v711
        %v713 = vpop.f32.mrf.mxu0
        %714 = vmatprep.mubr.f32.mxu0 0.0
        %715 = vmatmul.mubr.f32.gmra.mxu0 %v533
        %v716 = vpop.f32.mrf.mxu0
        %v717 = vadd.f32 0.0, %v716
        %v718 = vpop.f32.mrf.mxu0
        %719 = vmatprep.mubr.f32.mxu0 0.0
        %720 = vmatmul.mubr.f32.gmra.mxu0 %v536
        %v721 = vpop.f32.mrf.mxu0
        %v722 = vadd.f32 0.0, %v721
        %v723 = vpop.f32.mrf.mxu0
        %724 = vmatprep.mubr.f32.mxu0 0.0
        %725 = vmatmul.mubr.f32.gmra.mxu0 %v539
        %v726 = vpop.f32.mrf.mxu0
        %v727 = vadd.f32 0.0, %v726
        %v728 = vpop.f32.mrf.mxu0
        %729 = vmatprep.mubr.f32.mxu0 0.0
        %730 = vmatmul.mubr.f32.gmra.mxu0 %v542
        %v731 = vpop.f32.mrf.mxu0
        %v732 = vadd.f32 0.0, %v731
        %v733 = vpop.f32.mrf.mxu0
        %734 = vmatprep.mubr.f32.mxu0 0.0
        %735 = vmatmul.mubr.f32.gmra.mxu0 %v545
        %v736 = vpop.f32.mrf.mxu0
        %v737 = vadd.f32 0.0, %v736
        %v738 = vpop.f32.mrf.mxu0
        %739 = vmatprep.mubr.f32.mxu0 0.0
        %740 = vmatmul.mubr.f32.gmra.mxu0 %v548
        %v741 = vpop.f32.mrf.mxu0
        %v742 = vadd.f32 0.0, %v741
        %v743 = vpop.f32.mrf.mxu0
        %744 = vmatprep.mubr.f32.mxu0 0.0
        %745 = vmatmul.mubr.f32.gmra.mxu0 %v551
        %v746 = vpop.f32.mrf.mxu0
        %v747 = vadd.f32 0.0, %v746
        %v748 = vpop.f32.mrf.mxu0
        %749 = vmatprep.mubr.f32.mxu0 0.0
        %750 = vmatmul.mubr.f32.gmra.mxu0 %v554
        %v751 = vpop.f32.mrf.mxu0
        %v752 = vadd.f32 0.0, %v751
        %v753 = vpop.f32.mrf.mxu0
        %754 = vmatprep.mubr.f32.mxu0 0.0
        %755 = vmatmul.mubr.f32.gmra.mxu0 %v557
        %v756 = vpop.f32.mrf.mxu0
        %v757 = vadd.f32 0.0, %v756
        %v758 = vpop.f32.mrf.mxu0
        %759 = vmatprep.mubr.f32.mxu0 0.0
        %760 = vmatmul.mubr.f32.gmra.mxu0 %v560
        %v761 = vpop.f32.mrf.mxu0
        %v762 = vadd.f32 0.0, %v761
        %v763 = vpop.f32.mrf.mxu0
        %764 = vmatprep.mubr.f32.mxu0 0.0
        %765 = vmatmul.mubr.f32.gmra.mxu0 %v563
        %v766 = vpop.f32.mrf.mxu0
        %v767 = vadd.f32 0.0, %v766
        %v768 = vpop.f32.mrf.mxu0
        %769 = vmatprep.mubr.f32.mxu0 0.0
        %770 = vmatmul.mubr.f32.gmra.mxu0 %v566
        %v771 = vpop.f32.mrf.mxu0
        %v772 = vadd.f32 0.0, %v771
        %v773 = vpop.f32.mrf.mxu0
        %774 = vmatprep.mubr.f32.mxu0 0.0
        %775 = vmatmul.mubr.f32.gmra.mxu0 %v569
        %v776 = vpop.f32.mrf.mxu0
        %v777 = vadd.f32 0.0, %v776
        %v778 = vpop.f32.mrf.mxu0
        %779 = vmatprep.mubr.f32.mxu0 0.0
        %780 = vmatmul.mubr.f32.gmra.mxu0 %v572
        %v781 = vpop.f32.mrf.mxu0
        %v782 = vadd.f32 0.0, %v781
        %v783 = vpop.f32.mrf.mxu0
        %784 = vmatprep.mubr.f32.mxu0 0.0
        %785 = vmatmul.mubr.f32.gmra.mxu0 %v575
        %v786 = vpop.f32.mrf.mxu0
        %v787 = vadd.f32 0.0, %v786
        %v788 = vpop.f32.mrf.mxu0
        %789 = vmatprep.mubr.f32.mxu0 0.0
        %790 = vmatmul.mubr.f32.gmra.mxu0 %v578
        %v791 = vpop.f32.mrf.mxu0
        %v792 = vadd.f32 0.0, %v791
        %v793 = vpop.f32.mrf.mxu0
        %794 = vmatprep.mubr.f32.mxu0 0.0
        %795 = vmatmul.mubr.f32.gmra.mxu0 %v581
        %v796 = vpop.f32.mrf.mxu0
        %v797 = vadd.f32 0.0, %v796
        %v798 = vpop.f32.mrf.mxu0
        %799 = vmatprep.mubr.f32.mxu0 0.0
        %800 = vmatmul.mubr.f32.gmra.mxu0 %v584
        %v801 = vpop.f32.mrf.mxu0
        %v802 = vadd.f32 0.0, %v801
        %v803 = vpop.f32.mrf.mxu0
        %804 = vmatprep.mubr.f32.mxu0 0.0
        %805 = vmatmul.mubr.f32.gmra.mxu0 %v587
        %v806 = vpop.f32.mrf.mxu0
        %v807 = vadd.f32 0.0, %v806
        %v808 = vpop.f32.mrf.mxu0
        %809 = vmatprep.mubr.f32.mxu0 0.0
        %810 = vmatmul.mubr.f32.gmra.mxu0 %v590
        %v811 = vpop.f32.mrf.mxu0
        %v812 = vadd.f32 0.0, %v811
        %v813 = vpop.f32.mrf.mxu0
        %814 = vmatprep.mubr.f32.mxu0 0.0
        %815 = vmatmul.mubr.f32.gmra.mxu0 %v593
        %v816 = vpop.f32.mrf.mxu0
        %v817 = vadd.f32 0.0, %v816
        %v818 = vpop.f32.mrf.mxu0
        %819 = vmatprep.mubr.f32.mxu0 0.0
        %820 = vmatmul.mubr.f32.gmra.mxu0 %v596
        %v821 = vpop.f32.mrf.mxu0
        %v822 = vadd.f32 0.0, %v821
        %v823 = vpop.f32.mrf.mxu0
        %824 = vmatprep.mubr.f32.mxu0 0.0
        %825 = vmatmul.mubr.f32.gmra.mxu0 %v599
        %v826 = vpop.f32.mrf.mxu0
        %v827 = vadd.f32 0.0, %v826
        %v828 = vpop.f32.mrf.mxu0
        %829 = vdwg.mxu0
        %v831 = vsel %vm375, %v438, 0
        %v834 = vsel %vm375, %v439, 0
        %v837 = vsel %vm375, %v440, 0
        %v840 = vsel %vm375, %v441, 0
        %v843 = vsel %vm375, %v442, 0
        %v846 = vsel %vm375, %v443, 0
        %v849 = vsel %vm375, %v444, 0
        %v852 = vsel %vm375, %v445, 0
        %v855 = vsel %vm375, %v446, 0
        %v858 = vsel %vm375, %v447, 0
        %v861 = vsel %vm375, %v448, 0
        %v864 = vsel %vm375, %v449, 0
        %v867 = vsel %vm375, %v450, 0
        %v870 = vsel %vm375, %v451, 0
        %v873 = vsel %vm375, %v452, 0
        %v876 = vsel %vm375, %v453, 0
        %v879 = vsel %vm375, %v454, 0
        %v882 = vsel %vm375, %v455, 0
        %v885 = vsel %vm375, %v456, 0
        %v888 = vsel %vm375, %v457, 0
        %v891 = vsel %vm375, %v458, 0
        %v894 = vsel %vm375, %v459, 0
        %v897 = vsel %vm375, %v460, 0
        %v900 = vsel %vm375, %v461, 0
        %v903 = vsel %vm375, %v462, 0
        %v906 = vsel %vm375, %v463, 0
        %v909 = vsel %vm375, %v464, 0
        %v912 = vsel %vm375, %v465, 0
        %v915 = vsel %vm375, %v466, 0
        %v918 = vsel %vm375, %v467, 0
        %v921 = vsel %vm375, %v468, 0
        %v924 = vsel %vm375, %v469, 0
        %v927 = vsel %vm601, %v470, 0
        %929 = vmatprep.subr.mxu0 0.0
        %930 = vmatpush1.msra.mxu0 0.0
        %931 = vmatprep.subr.mxu0 0.0
        %932 = vmatpush1.msra.mxu0 0.0
        %933 = vmatprep.subr.mxu0 0.0
        %934 = vmatpush1.msra.mxu0 0.0
        %935 = vmatprep.subr.mxu0 0.0
        %936 = vmatpush1.msra.mxu0 0.0
        %937 = vmatprep.subr.mxu0 0.0
        %938 = vmatpush1.msra.mxu0 0.0
        %939 = vmatprep.subr.mxu0 0.0
        %940 = vmatpush1.msra.mxu0 0.0
        %941 = vmatprep.subr.mxu0 0.0
        %942 = vmatpush1.msra.mxu0 0.0
        %943 = vmatprep.subr.mxu0 0.0
        %944 = vmatpush1.msra.mxu0 0.0
        %945 = vmatprep.subr.mxu0 0.0
        %946 = vmatpush1.msra.mxu0 0.0
        %947 = vmatprep.subr.mxu0 0.0
        %948 = vmatpush1.msra.mxu0 0.0
        %949 = vmatprep.subr.mxu0 0.0
        %950 = vmatpush1.msra.mxu0 0.0
        %951 = vmatprep.subr.mxu0 0.0
        %952 = vmatpush1.msra.mxu0 0.0
        %953 = vmatprep.subr.mxu0 0.0
        %954 = vmatpush1.msra.mxu0 0.0
        %955 = vmatprep.subr.mxu0 0.0
        %956 = vmatpush1.msra.mxu0 0.0
        %957 = vmatprep.subr.mxu0 0.0
        %958 = vmatpush1.msra.mxu0 0.0
        %959 = vmatprep.subr.mxu0 0.0
        %960 = vmatpush1.msra.mxu0 %v927
        %961 = vmatprep.subr.mxu0 0.0
        %962 = vmatpush2.msra.mxu0 0.0
        %963 = vmatprep.subr.mxu0 0.0
        %964 = vmatpush2.msra.mxu0 0.0
        %965 = vmatprep.subr.mxu0 0.0
        %966 = vmatpush2.msra.mxu0 0.0
        %967 = vmatprep.subr.mxu0 0.0
        %968 = vmatpush2.msra.mxu0 0.0
        %969 = vmatprep.subr.mxu0 0.0
        %970 = vmatpush2.msra.mxu0 0.0
        %971 = vmatprep.subr.mxu0 0.0
        %972 = vmatpush2.msra.mxu0 0.0
        %973 = vmatprep.subr.mxu0 0.0
        %974 = vmatpush2.msra.mxu0 0.0
        %975 = vmatprep.subr.mxu0 0.0
        %976 = vmatpush2.msra.mxu0 0.0
        %977 = vmatprep.subr.mxu0 0.0
        %978 = vmatpush2.msra.mxu0 0.0
        %979 = vmatprep.subr.mxu0 0.0
        %980 = vmatpush2.msra.mxu0 0.0
        %981 = vmatprep.subr.mxu0 0.0
        %982 = vmatpush2.msra.mxu0 0.0
        %983 = vmatprep.subr.mxu0 0.0
        %984 = vmatpush2.msra.mxu0 0.0
        %985 = vmatprep.subr.mxu0 0.0
        %986 = vmatpush2.msra.mxu0 0.0
        %987 = vmatprep.subr.mxu0 0.0
        %988 = vmatpush2.msra.mxu0 0.0
        %989 = vmatprep.subr.mxu0 0.0
        %990 = vmatpush2.msra.mxu0 0.0
        %991 = vmatprep.subr.mxu0 0.0
        %992 = vmatpush2.msra.mxu0 0.0
        %993 = vmatprep.mubr.f32.mxu0 0.0
        %994 = vmatmul.mubr.f32.gmra.mxu0 %v831
        %v995 = vpop.f32.mrf.mxu0
        %v996 = vadd.f32 %v672, %v995
        %v997 = vpop.f32.mrf.mxu0
        %998 = vmatprep.mubr.f32.mxu0 0.0
        %999 = vmatmul.mubr.f32.gmra.mxu0 %v834
        %v1000 = vpop.f32.mrf.mxu0
        %v1001 = vadd.f32 %v677, %v1000
        %v1002 = vpop.f32.mrf.mxu0
        %1003 = vmatprep.mubr.f32.mxu0 0.0
        %1004 = vmatmul.mubr.f32.gmra.mxu0 %v837
        %v1005 = vpop.f32.mrf.mxu0
        %v1006 = vadd.f32 %v682, %v1005
        %v1007 = vpop.f32.mrf.mxu0
        %1008 = vmatprep.mubr.f32.mxu0 0.0
        %1009 = vmatmul.mubr.f32.gmra.mxu0 %v840
        %v1010 = vpop.f32.mrf.mxu0
        %v1011 = vadd.f32 %v687, %v1010
        %v1012 = vpop.f32.mrf.mxu0
        %1013 = vmatprep.mubr.f32.mxu0 0.0
        %1014 = vmatmul.mubr.f32.gmra.mxu0 %v843
        %v1015 = vpop.f32.mrf.mxu0
        %v1016 = vadd.f32 %v692, %v1015
        %v1017 = vpop.f32.mrf.mxu0
        %1018 = vmatprep.mubr.f32.mxu0 0.0
        %1019 = vmatmul.mubr.f32.gmra.mxu0 %v846
        %v1020 = vpop.f32.mrf.mxu0
        %v1021 = vadd.f32 %v697, %v1020
        %v1022 = vpop.f32.mrf.mxu0
        %1023 = vmatprep.mubr.f32.mxu0 0.0
        %1024 = vmatmul.mubr.f32.gmra.mxu0 %v849
        %v1025 = vpop.f32.mrf.mxu0
        %v1026 = vadd.f32 %v702, %v1025
        %v1027 = vpop.f32.mrf.mxu0
        %1028 = vmatprep.mubr.f32.mxu0 0.0
        %1029 = vmatmul.mubr.f32.gmra.mxu0 %v852
        %v1030 = vpop.f32.mrf.mxu0
        %v1031 = vadd.f32 %v707, %v1030
        %v1032 = vpop.f32.mrf.mxu0
        %1033 = vmatprep.mubr.f32.mxu0 0.0
        %1034 = vmatmul.mubr.f32.gmra.mxu0 %v855
        %v1035 = vpop.f32.mrf.mxu0
        %v1036 = vadd.f32 %v712, %v1035
        %v1037 = vpop.f32.mrf.mxu0
        %1038 = vmatprep.mubr.f32.mxu0 0.0
        %1039 = vmatmul.mubr.f32.gmra.mxu0 %v858
        %v1040 = vpop.f32.mrf.mxu0
        %v1041 = vadd.f32 %v717, %v1040
        %v1042 = vpop.f32.mrf.mxu0
        %1043 = vmatprep.mubr.f32.mxu0 0.0
        %1044 = vmatmul.mubr.f32.gmra.mxu0 %v861
        %v1045 = vpop.f32.mrf.mxu0
        %v1046 = vadd.f32 %v722, %v1045
        %v1047 = vpop.f32.mrf.mxu0
        %1048 = vmatprep.mubr.f32.mxu0 0.0
        %1049 = vmatmul.mubr.f32.gmra.mxu0 %v864
        %v1050 = vpop.f32.mrf.mxu0
        %v1051 = vadd.f32 %v727, %v1050
        %v1052 = vpop.f32.mrf.mxu0
        %1053 = vmatprep.mubr.f32.mxu0 0.0
        %1054 = vmatmul.mubr.f32.gmra.mxu0 %v867
        %v1055 = vpop.f32.mrf.mxu0
        %v1056 = vadd.f32 %v732, %v1055
        %v1057 = vpop.f32.mrf.mxu0
        %1058 = vmatprep.mubr.f32.mxu0 0.0
        %1059 = vmatmul.mubr.f32.gmra.mxu0 %v870
        %v1060 = vpop.f32.mrf.mxu0
        %v1061 = vadd.f32 %v737, %v1060
        %v1062 = vpop.f32.mrf.mxu0
        %1063 = vmatprep.mubr.f32.mxu0 0.0
        %1064 = vmatmul.mubr.f32.gmra.mxu0 %v873
        %v1065 = vpop.f32.mrf.mxu0
        %v1066 = vadd.f32 %v742, %v1065
        %v1067 = vpop.f32.mrf.mxu0
        %1068 = vmatprep.mubr.f32.mxu0 0.0
        %1069 = vmatmul.mubr.f32.gmra.mxu0 %v876
        %v1070 = vpop.f32.mrf.mxu0
        %v1071 = vadd.f32 %v747, %v1070
        %v1072 = vpop.f32.mrf.mxu0
        %1073 = vmatprep.mubr.f32.mxu0 0.0
        %1074 = vmatmul.mubr.f32.gmra.mxu0 %v879
        %v1075 = vpop.f32.mrf.mxu0
        %v1076 = vadd.f32 %v752, %v1075
        %v1077 = vpop.f32.mrf.mxu0
        %1078 = vmatprep.mubr.f32.mxu0 0.0
        %1079 = vmatmul.mubr.f32.gmra.mxu0 %v882
        %v1080 = vpop.f32.mrf.mxu0
        %v1081 = vadd.f32 %v757, %v1080
        %v1082 = vpop.f32.mrf.mxu0
        %1083 = vmatprep.mubr.f32.mxu0 0.0
        %1084 = vmatmul.mubr.f32.gmra.mxu0 %v885
        %v1085 = vpop.f32.mrf.mxu0
        %v1086 = vadd.f32 %v762, %v1085
        %v1087 = vpop.f32.mrf.mxu0
        %1088 = vmatprep.mubr.f32.mxu0 0.0
        %1089 = vmatmul.mubr.f32.gmra.mxu0 %v888
        %v1090 = vpop.f32.mrf.mxu0
        %v1091 = vadd.f32 %v767, %v1090
        %v1092 = vpop.f32.mrf.mxu0
        %1093 = vmatprep.mubr.f32.mxu0 0.0
        %1094 = vmatmul.mubr.f32.gmra.mxu0 %v891
        %v1095 = vpop.f32.mrf.mxu0
        %v1096 = vadd.f32 %v772, %v1095
        %v1097 = vpop.f32.mrf.mxu0
        %1098 = vmatprep.mubr.f32.mxu0 0.0
        %1099 = vmatmul.mubr.f32.gmra.mxu0 %v894
        %v1100 = vpop.f32.mrf.mxu0
        %v1101 = vadd.f32 %v777, %v1100
        %v1102 = vpop.f32.mrf.mxu0
        %1103 = vmatprep.mubr.f32.mxu0 0.0
        %1104 = vmatmul.mubr.f32.gmra.mxu0 %v897
        %v1105 = vpop.f32.mrf.mxu0
        %v1106 = vadd.f32 %v782, %v1105
        %v1107 = vpop.f32.mrf.mxu0
        %1108 = vmatprep.mubr.f32.mxu0 0.0
        %1109 = vmatmul.mubr.f32.gmra.mxu0 %v900
        %v1110 = vpop.f32.mrf.mxu0
        %v1111 = vadd.f32 %v787, %v1110
        %v1112 = vpop.f32.mrf.mxu0
        %1113 = vmatprep.mubr.f32.mxu0 0.0
        %1114 = vmatmul.mubr.f32.gmra.mxu0 %v903
        %v1115 = vpop.f32.mrf.mxu0
        %v1116 = vadd.f32 %v792, %v1115
        %v1117 = vpop.f32.mrf.mxu0
        %1118 = vmatprep.mubr.f32.mxu0 0.0
        %1119 = vmatmul.mubr.f32.gmra.mxu0 %v906
        %v1120 = vpop.f32.mrf.mxu0
        %v1121 = vadd.f32 %v797, %v1120
        %v1122 = vpop.f32.mrf.mxu0
        %1123 = vmatprep.mubr.f32.mxu0 0.0
        %1124 = vmatmul.mubr.f32.gmra.mxu0 %v909
        %v1125 = vpop.f32.mrf.mxu0
        %v1126 = vadd.f32 %v802, %v1125
        %v1127 = vpop.f32.mrf.mxu0
        %1128 = vmatprep.mubr.f32.mxu0 0.0
        %1129 = vmatmul.mubr.f32.gmra.mxu0 %v912
        %v1130 = vpop.f32.mrf.mxu0
        %v1131 = vadd.f32 %v807, %v1130
        %v1132 = vpop.f32.mrf.mxu0
        %1133 = vmatprep.mubr.f32.mxu0 0.0
        %1134 = vmatmul.mubr.f32.gmra.mxu0 %v915
        %v1135 = vpop.f32.mrf.mxu0
        %v1136 = vadd.f32 %v812, %v1135
        %v1137 = vpop.f32.mrf.mxu0
        %1138 = vmatprep.mubr.f32.mxu0 0.0
        %1139 = vmatmul.mubr.f32.gmra.mxu0 %v918
        %v1140 = vpop.f32.mrf.mxu0
        %v1141 = vadd.f32 %v817, %v1140
        %v1142 = vpop.f32.mrf.mxu0
        %1143 = vmatprep.mubr.f32.mxu0 0.0
        %1144 = vmatmul.mubr.f32.gmra.mxu0 %v921
        %v1145 = vpop.f32.mrf.mxu0
        %v1146 = vadd.f32 %v822, %v1145
        %v1147 = vpop.f32.mrf.mxu0
        %1148 = vmatprep.mubr.f32.mxu0 0.0
        %1149 = vmatmul.mubr.f32.gmra.mxu0 %v924
        %v1150 = vpop.f32.mrf.mxu0
        %v1151 = vadd.f32 %v827, %v1150
        %v1152 = vpop.f32.mrf.mxu0
        %1153 = vdwg.mxu0
        %v1154 = vld [vmem:[#allocation2 + $0x2] sm:$0xff]
        %v1155 = vld [vmem:[#allocation2 + $0xa] sm:$0xff]
        %v1156 = vld [vmem:[#allocation2 + $0x1a] sm:$0xff]
        %v1157 = vld [vmem:[#allocation2 + $0x22] sm:$0xff]
        %v1158 = vld [vmem:[#allocation2 + $0x32] sm:$0xff]
        %v1159 = vld [vmem:[#allocation2 + $0x3a] sm:$0xff]
        %v1160 = vld [vmem:[#allocation2 + $0x4a] sm:$0xff]
        %v1161 = vld [vmem:[#allocation2 + $0x52] sm:$0xff]
        %v1162 = vld [vmem:[#allocation2 + $0x62] sm:$0xff]
        %v1163 = vld [vmem:[#allocation2 + $0x6a] sm:$0xff]
        %v1164 = vld [vmem:[#allocation2 + $0x7a] sm:$0xff]
        %v1165 = vld [vmem:[#allocation2 + $0x82] sm:$0xff]
        %v1166 = vld [vmem:[#allocation2 + $0x92] sm:$0xff]
        %v1167 = vld [vmem:[#allocation2 + $0x9a] sm:$0xff]
        %v1168 = vld [vmem:[#allocation2 + $0xaa] sm:$0xff]
        %v1169 = vld [vmem:[#allocation2 + $0xb2] sm:$0xff]
        %v1170 = vld [vmem:[#allocation2 + $0xc2] sm:$0xff]
        %v1171 = vld [vmem:[#allocation2 + $0xca] sm:$0xff]
        %v1172 = vld [vmem:[#allocation2 + $0xda] sm:$0xff]
        %v1173 = vld [vmem:[#allocation2 + $0xe2] sm:$0xff]
        %v1174 = vld [vmem:[#allocation2 + $0xf2] sm:$0xff]
        %v1175 = vld [vmem:[#allocation2 + $0xfa] sm:$0xff]
        %v1176 = vld [vmem:[#allocation2 + $0x10a] sm:$0xff]
        %v1177 = vld [vmem:[#allocation2 + $0x112] sm:$0xff]
        %v1178 = vld [vmem:[#allocation2 + $0x122] sm:$0xff]
        %v1179 = vld [vmem:[#allocation2 + $0x12a] sm:$0xff]
        %v1180 = vld [vmem:[#allocation2 + $0x13a] sm:$0xff]
        %v1181 = vld [vmem:[#allocation2 + $0x142] sm:$0xff]
        %v1182 = vld [vmem:[#allocation2 + $0x152] sm:$0xff]
        %v1183 = vld [vmem:[#allocation2 + $0x15a] sm:$0xff]
        %v1184 = vld [vmem:[#allocation2 + $0x16a] sm:$0xff]
        %v1185 = vld [vmem:[#allocation2 + $0x172] sm:$0xff]
        %s1186 = scalar_lea.vmem %s2, 8
        %v1187 = vld [vmem:[%s1186] sm:$0xf]
        %v1189 = vsel %vm375, %v1154, 0
        %v1192 = vsel %vm375, %v1155, 0
        %v1195 = vsel %vm375, %v1156, 0
        %v1198 = vsel %vm375, %v1157, 0
        %v1201 = vsel %vm375, %v1158, 0
        %v1204 = vsel %vm375, %v1159, 0
        %v1207 = vsel %vm375, %v1160, 0
        %v1210 = vsel %vm375, %v1161, 0
        %v1213 = vsel %vm375, %v1162, 0
        %v1216 = vsel %vm375, %v1163, 0
        %v1219 = vsel %vm375, %v1164, 0
        %v1222 = vsel %vm375, %v1165, 0
        %v1225 = vsel %vm375, %v1166, 0
        %v1228 = vsel %vm375, %v1167, 0
        %v1231 = vsel %vm375, %v1168, 0
        %v1234 = vsel %vm375, %v1169, 0
        %v1237 = vsel %vm375, %v1170, 0
        %v1240 = vsel %vm375, %v1171, 0
        %v1243 = vsel %vm375, %v1172, 0
        %v1246 = vsel %vm375, %v1173, 0
        %v1249 = vsel %vm375, %v1174, 0
        %v1252 = vsel %vm375, %v1175, 0
        %v1255 = vsel %vm375, %v1176, 0
        %v1258 = vsel %vm375, %v1177, 0
        %v1261 = vsel %vm375, %v1178, 0
        %v1264 = vsel %vm375, %v1179, 0
        %v1267 = vsel %vm375, %v1180, 0
        %v1270 = vsel %vm375, %v1181, 0
        %v1273 = vsel %vm375, %v1182, 0
        %v1276 = vsel %vm375, %v1183, 0
        %v1279 = vsel %vm375, %v1184, 0
        %v1282 = vsel %vm375, %v1185, 0
        %v1285 = vsel %vm601, %v1187, 0
        %1287 = vmatprep.subr.mxu0 0.0
        %1288 = vmatpush1.msra.mxu0 0.0
        %1289 = vmatprep.subr.mxu0 0.0
        %1290 = vmatpush1.msra.mxu0 0.0
        %1291 = vmatprep.subr.mxu0 0.0
        %1292 = vmatpush1.msra.mxu0 0.0
        %1293 = vmatprep.subr.mxu0 0.0
        %1294 = vmatpush1.msra.mxu0 0.0
        %1295 = vmatprep.subr.mxu0 0.0
        %1296 = vmatpush1.msra.mxu0 0.0
        %1297 = vmatprep.subr.mxu0 0.0
        %1298 = vmatpush1.msra.mxu0 0.0
        %1299 = vmatprep.subr.mxu0 0.0
        %1300 = vmatpush1.msra.mxu0 0.0
        %1301 = vmatprep.subr.mxu0 0.0
        %1302 = vmatpush1.msra.mxu0 0.0
        %1303 = vmatprep.subr.mxu0 0.0
        %1304 = vmatpush1.msra.mxu0 0.0
        %1305 = vmatprep.subr.mxu0 0.0
        %1306 = vmatpush1.msra.mxu0 0.0
        %1307 = vmatprep.subr.mxu0 0.0
        %1308 = vmatpush1.msra.mxu0 0.0
        %1309 = vmatprep.subr.mxu0 0.0
        %1310 = vmatpush1.msra.mxu0 0.0
        %1311 = vmatprep.subr.mxu0 0.0
        %1312 = vmatpush1.msra.mxu0 0.0
        %1313 = vmatprep.subr.mxu0 0.0
        %1314 = vmatpush1.msra.mxu0 0.0
        %1315 = vmatprep.subr.mxu0 0.0
        %1316 = vmatpush1.msra.mxu0 0.0
        %1317 = vmatprep.subr.mxu0 0.0
        %1318 = vmatpush1.msra.mxu0 %v1285
        %1319 = vmatprep.subr.mxu0 0.0
        %1320 = vmatpush2.msra.mxu0 0.0
        %1321 = vmatprep.subr.mxu0 0.0
        %1322 = vmatpush2.msra.mxu0 0.0
        %1323 = vmatprep.subr.mxu0 0.0
        %1324 = vmatpush2.msra.mxu0 0.0
        %1325 = vmatprep.subr.mxu0 0.0
        %1326 = vmatpush2.msra.mxu0 0.0
        %1327 = vmatprep.subr.mxu0 0.0
        %1328 = vmatpush2.msra.mxu0 0.0
        %1329 = vmatprep.subr.mxu0 0.0
        %1330 = vmatpush2.msra.mxu0 0.0
        %1331 = vmatprep.subr.mxu0 0.0
        %1332 = vmatpush2.msra.mxu0 0.0
        %1333 = vmatprep.subr.mxu0 0.0
        %1334 = vmatpush2.msra.mxu0 0.0
        %1335 = vmatprep.subr.mxu0 0.0
        %1336 = vmatpush2.msra.mxu0 0.0
        %1337 = vmatprep.subr.mxu0 0.0
        %1338 = vmatpush2.msra.mxu0 0.0
        %1339 = vmatprep.subr.mxu0 0.0
        %1340 = vmatpush2.msra.mxu0 0.0
        %1341 = vmatprep.subr.mxu0 0.0
        %1342 = vmatpush2.msra.mxu0 0.0
        %1343 = vmatprep.subr.mxu0 0.0
        %1344 = vmatpush2.msra.mxu0 0.0
        %1345 = vmatprep.subr.mxu0 0.0
        %1346 = vmatpush2.msra.mxu0 0.0
        %1347 = vmatprep.subr.mxu0 0.0
        %1348 = vmatpush2.msra.mxu0 0.0
        %1349 = vmatprep.subr.mxu0 0.0
        %1350 = vmatpush2.msra.mxu0 0.0
        %1351 = vmatprep.mubr.f32.mxu0 0.0
        %1352 = vmatmul.mubr.f32.gmra.mxu0 %v1189
        %v1353 = vpop.f32.mrf.mxu0
        %v1354 = vadd.f32 0.0, %v1353
        %v1355 = vpop.f32.mrf.mxu0
        %1356 = vmatprep.mubr.f32.mxu0 0.0
        %1357 = vmatmul.mubr.f32.gmra.mxu0 %v1192
        %v1358 = vpop.f32.mrf.mxu0
        %v1359 = vadd.f32 0.0, %v1358
        %v1360 = vpop.f32.mrf.mxu0
        %1361 = vmatprep.mubr.f32.mxu0 0.0
        %1362 = vmatmul.mubr.f32.gmra.mxu0 %v1195
        %v1363 = vpop.f32.mrf.mxu0
        %v1364 = vadd.f32 0.0, %v1363
        %v1365 = vpop.f32.mrf.mxu0
        %1366 = vmatprep.mubr.f32.mxu0 0.0
        %1367 = vmatmul.mubr.f32.gmra.mxu0 %v1198
        %v1368 = vpop.f32.mrf.mxu0
        %v1369 = vadd.f32 0.0, %v1368
        %v1370 = vpop.f32.mrf.mxu0
        %1371 = vmatprep.mubr.f32.mxu0 0.0
        %1372 = vmatmul.mubr.f32.gmra.mxu0 %v1201
        %v1373 = vpop.f32.mrf.mxu0
        %v1374 = vadd.f32 0.0, %v1373
        %v1375 = vpop.f32.mrf.mxu0
        %1376 = vmatprep.mubr.f32.mxu0 0.0
        %1377 = vmatmul.mubr.f32.gmra.mxu0 %v1204
        %v1378 = vpop.f32.mrf.mxu0
        %v1379 = vadd.f32 0.0, %v1378
        %v1380 = vpop.f32.mrf.mxu0
        %1381 = vmatprep.mubr.f32.mxu0 0.0
        %1382 = vmatmul.mubr.f32.gmra.mxu0 %v1207
        %v1383 = vpop.f32.mrf.mxu0
        %v1384 = vadd.f32 0.0, %v1383
        %v1385 = vpop.f32.mrf.mxu0
        %1386 = vmatprep.mubr.f32.mxu0 0.0
        %1387 = vmatmul.mubr.f32.gmra.mxu0 %v1210
        %v1388 = vpop.f32.mrf.mxu0
        %v1389 = vadd.f32 0.0, %v1388
        %v1390 = vpop.f32.mrf.mxu0
        %1391 = vmatprep.mubr.f32.mxu0 0.0
        %1392 = vmatmul.mubr.f32.gmra.mxu0 %v1213
        %v1393 = vpop.f32.mrf.mxu0
        %v1394 = vadd.f32 0.0, %v1393
        %v1395 = vpop.f32.mrf.mxu0
        %1396 = vmatprep.mubr.f32.mxu0 0.0
        %1397 = vmatmul.mubr.f32.gmra.mxu0 %v1216
        %v1398 = vpop.f32.mrf.mxu0
        %v1399 = vadd.f32 0.0, %v1398
        %v1400 = vpop.f32.mrf.mxu0
        %1401 = vmatprep.mubr.f32.mxu0 0.0
        %1402 = vmatmul.mubr.f32.gmra.mxu0 %v1219
        %v1403 = vpop.f32.mrf.mxu0
        %v1404 = vadd.f32 0.0, %v1403
        %v1405 = vpop.f32.mrf.mxu0
        %1406 = vmatprep.mubr.f32.mxu0 0.0
        %1407 = vmatmul.mubr.f32.gmra.mxu0 %v1222
        %v1408 = vpop.f32.mrf.mxu0
        %v1409 = vadd.f32 0.0, %v1408
        %v1410 = vpop.f32.mrf.mxu0
        %1411 = vmatprep.mubr.f32.mxu0 0.0
        %1412 = vmatmul.mubr.f32.gmra.mxu0 %v1225
        %v1413 = vpop.f32.mrf.mxu0
        %v1414 = vadd.f32 0.0, %v1413
        %v1415 = vpop.f32.mrf.mxu0
        %1416 = vmatprep.mubr.f32.mxu0 0.0
        %1417 = vmatmul.mubr.f32.gmra.mxu0 %v1228
        %v1418 = vpop.f32.mrf.mxu0
        %v1419 = vadd.f32 0.0, %v1418
        %v1420 = vpop.f32.mrf.mxu0
        %1421 = vmatprep.mubr.f32.mxu0 0.0
        %1422 = vmatmul.mubr.f32.gmra.mxu0 %v1231
        %v1423 = vpop.f32.mrf.mxu0
        %v1424 = vadd.f32 0.0, %v1423
        %v1425 = vpop.f32.mrf.mxu0
        %1426 = vmatprep.mubr.f32.mxu0 0.0
        %1427 = vmatmul.mubr.f32.gmra.mxu0 %v1234
        %v1428 = vpop.f32.mrf.mxu0
        %v1429 = vadd.f32 0.0, %v1428
        %v1430 = vpop.f32.mrf.mxu0
        %1431 = vmatprep.mubr.f32.mxu0 0.0
        %1432 = vmatmul.mubr.f32.gmra.mxu0 %v1237
        %v1433 = vpop.f32.mrf.mxu0
        %v1434 = vadd.f32 0.0, %v1433
        %v1435 = vpop.f32.mrf.mxu0
        %1436 = vmatprep.mubr.f32.mxu0 0.0
        %1437 = vmatmul.mubr.f32.gmra.mxu0 %v1240
        %v1438 = vpop.f32.mrf.mxu0
        %v1439 = vadd.f32 0.0, %v1438
        %v1440 = vpop.f32.mrf.mxu0
        %1441 = vmatprep.mubr.f32.mxu0 0.0
        %1442 = vmatmul.mubr.f32.gmra.mxu0 %v1243
        %v1443 = vpop.f32.mrf.mxu0
        %v1444 = vadd.f32 0.0, %v1443
        %v1445 = vpop.f32.mrf.mxu0
        %1446 = vmatprep.mubr.f32.mxu0 0.0
        %1447 = vmatmul.mubr.f32.gmra.mxu0 %v1246
        %v1448 = vpop.f32.mrf.mxu0
        %v1449 = vadd.f32 0.0, %v1448
        %v1450 = vpop.f32.mrf.mxu0
        %1451 = vmatprep.mubr.f32.mxu0 0.0
        %1452 = vmatmul.mubr.f32.gmra.mxu0 %v1249
        %v1453 = vpop.f32.mrf.mxu0
        %v1454 = vadd.f32 0.0, %v1453
        %v1455 = vpop.f32.mrf.mxu0
        %1456 = vmatprep.mubr.f32.mxu0 0.0
        %1457 = vmatmul.mubr.f32.gmra.mxu0 %v1252
        %v1458 = vpop.f32.mrf.mxu0
        %v1459 = vadd.f32 0.0, %v1458
        %v1460 = vpop.f32.mrf.mxu0
        %1461 = vmatprep.mubr.f32.mxu0 0.0
        %1462 = vmatmul.mubr.f32.gmra.mxu0 %v1255
        %v1463 = vpop.f32.mrf.mxu0
        %v1464 = vadd.f32 0.0, %v1463
        %v1465 = vpop.f32.mrf.mxu0
        %1466 = vmatprep.mubr.f32.mxu0 0.0
        %1467 = vmatmul.mubr.f32.gmra.mxu0 %v1258
        %v1468 = vpop.f32.mrf.mxu0
        %v1469 = vadd.f32 0.0, %v1468
        %v1470 = vpop.f32.mrf.mxu0
        %1471 = vmatprep.mubr.f32.mxu0 0.0
        %1472 = vmatmul.mubr.f32.gmra.mxu0 %v1261
        %v1473 = vpop.f32.mrf.mxu0
        %v1474 = vadd.f32 0.0, %v1473
        %v1475 = vpop.f32.mrf.mxu0
        %1476 = vmatprep.mubr.f32.mxu0 0.0
        %1477 = vmatmul.mubr.f32.gmra.mxu0 %v1264
        %v1478 = vpop.f32.mrf.mxu0
        %v1479 = vadd.f32 0.0, %v1478
        %v1480 = vpop.f32.mrf.mxu0
        %1481 = vmatprep.mubr.f32.mxu0 0.0
        %1482 = vmatmul.mubr.f32.gmra.mxu0 %v1267
        %v1483 = vpop.f32.mrf.mxu0
        %v1484 = vadd.f32 0.0, %v1483
        %v1485 = vpop.f32.mrf.mxu0
        %1486 = vmatprep.mubr.f32.mxu0 0.0
        %1487 = vmatmul.mubr.f32.gmra.mxu0 %v1270
        %v1488 = vpop.f32.mrf.mxu0
        %v1489 = vadd.f32 0.0, %v1488
        %v1490 = vpop.f32.mrf.mxu0
        %1491 = vmatprep.mubr.f32.mxu0 0.0
        %1492 = vmatmul.mubr.f32.gmra.mxu0 %v1273
        %v1493 = vpop.f32.mrf.mxu0
        %v1494 = vadd.f32 0.0, %v1493
        %v1495 = vpop.f32.mrf.mxu0
        %1496 = vmatprep.mubr.f32.mxu0 0.0
        %1497 = vmatmul.mubr.f32.gmra.mxu0 %v1276
        %v1498 = vpop.f32.mrf.mxu0
        %v1499 = vadd.f32 0.0, %v1498
        %v1500 = vpop.f32.mrf.mxu0
        %1501 = vmatprep.mubr.f32.mxu0 0.0
        %1502 = vmatmul.mubr.f32.gmra.mxu0 %v1279
        %v1503 = vpop.f32.mrf.mxu0
        %v1504 = vadd.f32 0.0, %v1503
        %v1505 = vpop.f32.mrf.mxu0
        %1506 = vmatprep.mubr.f32.mxu0 0.0
        %1507 = vmatmul.mubr.f32.gmra.mxu0 %v1282
        %v1508 = vpop.f32.mrf.mxu0
        %v1509 = vadd.f32 0.0, %v1508
        %v1510 = vpop.f32.mrf.mxu0
        %1511 = vdwg.mxu0
        %v1512 = vadd.f32 %v996, %v1354
        %v1513 = vadd.f32 %v1001, %v1359
        %v1514 = vadd.f32 %v1006, %v1364
        %v1515 = vadd.f32 %v1011, %v1369
        %v1516 = vadd.f32 %v1016, %v1374
        %v1517 = vadd.f32 %v1021, %v1379
        %v1518 = vadd.f32 %v1026, %v1384
        %v1519 = vadd.f32 %v1031, %v1389
        %v1520 = vadd.f32 %v1036, %v1394
        %v1521 = vadd.f32 %v1041, %v1399
        %v1522 = vadd.f32 %v1046, %v1404
        %v1523 = vadd.f32 %v1051, %v1409
        %v1524 = vadd.f32 %v1056, %v1414
        %v1525 = vadd.f32 %v1061, %v1419
        %v1526 = vadd.f32 %v1066, %v1424
        %v1527 = vadd.f32 %v1071, %v1429
        %v1528 = vadd.f32 %v1076, %v1434
        %v1529 = vadd.f32 %v1081, %v1439
        %v1530 = vadd.f32 %v1086, %v1444
        %v1531 = vadd.f32 %v1091, %v1449
        %v1532 = vadd.f32 %v1096, %v1454
        %v1533 = vadd.f32 %v1101, %v1459
        %v1534 = vadd.f32 %v1106, %v1464
        %v1535 = vadd.f32 %v1111, %v1469
        %v1536 = vadd.f32 %v1116, %v1474
        %v1537 = vadd.f32 %v1121, %v1479
        %v1538 = vadd.f32 %v1126, %v1484
        %v1539 = vadd.f32 %v1131, %v1489
        %v1540 = vadd.f32 %v1136, %v1494
        %v1541 = vadd.f32 %v1141, %v1499
        %v1542 = vadd.f32 %v1146, %v1504
        %v1543 = vadd.f32 %v1151, %v1509
        %s1544 = scalar_lea.vmem [#allocation2], 24
        %v1545 = vld [vmem:[%s1544] sm:$0xff]
        %v1546 = vld [vmem:[%s1544 + $0x8] sm:$0xff]
        %v1547 = vld [vmem:[%s1544 + $0x18] sm:$0xff]
        %v1548 = vld [vmem:[%s1544 + $0x20] sm:$0xff]
        %v1549 = vld [vmem:[%s1544 + $0x30] sm:$0xff]
        %v1550 = vld [vmem:[%s1544 + $0x38] sm:$0xff]
        %v1551 = vld [vmem:[%s1544 + $0x48] sm:$0xff]
        %v1552 = vld [vmem:[%s1544 + $0x50] sm:$0xff]
        %v1553 = vld [vmem:[%s1544 + $0x60] sm:$0xff]
        %v1554 = vld [vmem:[%s1544 + $0x68] sm:$0xff]
        %v1555 = vld [vmem:[%s1544 + $0x78] sm:$0xff]
        %v1556 = vld [vmem:[%s1544 + $0x80] sm:$0xff]
        %v1557 = vld [vmem:[%s1544 + $0x90] sm:$0xff]
        %v1558 = vld [vmem:[%s1544 + $0x98] sm:$0xff]
        %v1559 = vld [vmem:[%s1544 + $0xa8] sm:$0xff]
        %v1560 = vld [vmem:[%s1544 + $0xb0] sm:$0xff]
        %v1561 = vld [vmem:[%s1544 + $0xc0] sm:$0xff]
        %v1562 = vld [vmem:[%s1544 + $0xc8] sm:$0xff]
        %v1563 = vld [vmem:[%s1544 + $0xd8] sm:$0xff]
        %v1564 = vld [vmem:[%s1544 + $0xe0] sm:$0xff]
        %v1565 = vld [vmem:[%s1544 + $0xf0] sm:$0xff]
        %v1566 = vld [vmem:[%s1544 + $0xf8] sm:$0xff]
        %v1567 = vld [vmem:[%s1544 + $0x108] sm:$0xff]
        %v1568 = vld [vmem:[%s1544 + $0x110] sm:$0xff]
        %v1569 = vld [vmem:[%s1544 + $0x120] sm:$0xff]
        %v1570 = vld [vmem:[%s1544 + $0x128] sm:$0xff]
        %v1571 = vld [vmem:[%s1544 + $0x138] sm:$0xff]
        %v1572 = vld [vmem:[%s1544 + $0x140] sm:$0xff]
        %v1573 = vld [vmem:[%s1544 + $0x150] sm:$0xff]
        %v1574 = vld [vmem:[%s1544 + $0x158] sm:$0xff]
        %v1575 = vld [vmem:[%s1544 + $0x168] sm:$0xff]
        %v1576 = vld [vmem:[%s1544 + $0x170] sm:$0xff]
        %s1577 = scalar_lea.vmem %s2, 12
        %v1578 = vld [vmem:[%s1577] sm:$0xf]
        %v1580 = vsel %vm375, %v1545, 0
        %v1583 = vsel %vm375, %v1546, 0
        %v1586 = vsel %vm375, %v1547, 0
        %v1589 = vsel %vm375, %v1548, 0
        %v1592 = vsel %vm375, %v1549, 0
        %v1595 = vsel %vm375, %v1550, 0
        %v1598 = vsel %vm375, %v1551, 0
        %v1601 = vsel %vm375, %v1552, 0
        %v1604 = vsel %vm375, %v1553, 0
        %v1607 = vsel %vm375, %v1554, 0
        %v1610 = vsel %vm375, %v1555, 0
        %v1613 = vsel %vm375, %v1556, 0
        %v1616 = vsel %vm375, %v1557, 0
        %v1619 = vsel %vm375, %v1558, 0
        %v1622 = vsel %vm375, %v1559, 0
        %v1625 = vsel %vm375, %v1560, 0
        %v1628 = vsel %vm375, %v1561, 0
        %v1631 = vsel %vm375, %v1562, 0
        %v1634 = vsel %vm375, %v1563, 0
        %v1637 = vsel %vm375, %v1564, 0
        %v1640 = vsel %vm375, %v1565, 0
        %v1643 = vsel %vm375, %v1566, 0
        %v1646 = vsel %vm375, %v1567, 0
        %v1649 = vsel %vm375, %v1568, 0
        %v1652 = vsel %vm375, %v1569, 0
        %v1655 = vsel %vm375, %v1570, 0
        %v1658 = vsel %vm375, %v1571, 0
        %v1661 = vsel %vm375, %v1572, 0
        %v1664 = vsel %vm375, %v1573, 0
        %v1667 = vsel %vm375, %v1574, 0
        %v1670 = vsel %vm375, %v1575, 0
        %v1673 = vsel %vm375, %v1576, 0
        %v1676 = vsel %vm601, %v1578, 0
        %1678 = vmatprep.subr.mxu0 0.0
        %1679 = vmatpush1.msra.mxu0 0.0
        %1680 = vmatprep.subr.mxu0 0.0
        %1681 = vmatpush1.msra.mxu0 0.0
        %1682 = vmatprep.subr.mxu0 0.0
        %1683 = vmatpush1.msra.mxu0 0.0
        %1684 = vmatprep.subr.mxu0 0.0
        %1685 = vmatpush1.msra.mxu0 0.0
        %1686 = vmatprep.subr.mxu0 0.0
        %1687 = vmatpush1.msra.mxu0 0.0
        %1688 = vmatprep.subr.mxu0 0.0
        %1689 = vmatpush1.msra.mxu0 0.0
        %1690 = vmatprep.subr.mxu0 0.0
        %1691 = vmatpush1.msra.mxu0 0.0
        %1692 = vmatprep.subr.mxu0 0.0
        %1693 = vmatpush1.msra.mxu0 0.0
        %1694 = vmatprep.subr.mxu0 0.0
        %1695 = vmatpush1.msra.mxu0 0.0
        %1696 = vmatprep.subr.mxu0 0.0
        %1697 = vmatpush1.msra.mxu0 0.0
        %1698 = vmatprep.subr.mxu0 0.0
        %1699 = vmatpush1.msra.mxu0 0.0
        %1700 = vmatprep.subr.mxu0 0.0
        %1701 = vmatpush1.msra.mxu0 0.0
        %1702 = vmatprep.subr.mxu0 0.0
        %1703 = vmatpush1.msra.mxu0 0.0
        %1704 = vmatprep.subr.mxu0 0.0
        %1705 = vmatpush1.msra.mxu0 0.0
        %1706 = vmatprep.subr.mxu0 0.0
        %1707 = vmatpush1.msra.mxu0 0.0
        %1708 = vmatprep.subr.mxu0 0.0
        %1709 = vmatpush1.msra.mxu0 %v1676
        %1710 = vmatprep.subr.mxu0 0.0
        %1711 = vmatpush2.msra.mxu0 0.0
        %1712 = vmatprep.subr.mxu0 0.0
        %1713 = vmatpush2.msra.mxu0 0.0
        %1714 = vmatprep.subr.mxu0 0.0
        %1715 = vmatpush2.msra.mxu0 0.0
        %1716 = vmatprep.subr.mxu0 0.0
        %1717 = vmatpush2.msra.mxu0 0.0
        %1718 = vmatprep.subr.mxu0 0.0
        %1719 = vmatpush2.msra.mxu0 0.0
        %1720 = vmatprep.subr.mxu0 0.0
        %1721 = vmatpush2.msra.mxu0 0.0
        %1722 = vmatprep.subr.mxu0 0.0
        %1723 = vmatpush2.msra.mxu0 0.0
        %1724 = vmatprep.subr.mxu0 0.0
        %1725 = vmatpush2.msra.mxu0 0.0
        %1726 = vmatprep.subr.mxu0 0.0
        %1727 = vmatpush2.msra.mxu0 0.0
        %1728 = vmatprep.subr.mxu0 0.0
        %1729 = vmatpush2.msra.mxu0 0.0
        %1730 = vmatprep.subr.mxu0 0.0
        %1731 = vmatpush2.msra.mxu0 0.0
        %1732 = vmatprep.subr.mxu0 0.0
        %1733 = vmatpush2.msra.mxu0 0.0
        %1734 = vmatprep.subr.mxu0 0.0
        %1735 = vmatpush2.msra.mxu0 0.0
        %1736 = vmatprep.subr.mxu0 0.0
        %1737 = vmatpush2.msra.mxu0 0.0
        %1738 = vmatprep.subr.mxu0 0.0
        %1739 = vmatpush2.msra.mxu0 0.0
        %1740 = vmatprep.subr.mxu0 0.0
        %1741 = vmatpush2.msra.mxu0 0.0
        %1742 = vmatprep.mubr.f32.mxu0 0.0
        %1743 = vmatmul.mubr.f32.gmra.mxu0 %v1580
        %v1744 = vpop.f32.mrf.mxu0
        %v1745 = vadd.f32 0.0, %v1744
        %v1746 = vpop.f32.mrf.mxu0
        %1747 = vmatprep.mubr.f32.mxu0 0.0
        %1748 = vmatmul.mubr.f32.gmra.mxu0 %v1583
        %v1749 = vpop.f32.mrf.mxu0
        %v1750 = vadd.f32 0.0, %v1749
        %v1751 = vpop.f32.mrf.mxu0
        %1752 = vmatprep.mubr.f32.mxu0 0.0
        %1753 = vmatmul.mubr.f32.gmra.mxu0 %v1586
        %v1754 = vpop.f32.mrf.mxu0
        %v1755 = vadd.f32 0.0, %v1754
        %v1756 = vpop.f32.mrf.mxu0
        %1757 = vmatprep.mubr.f32.mxu0 0.0
        %1758 = vmatmul.mubr.f32.gmra.mxu0 %v1589
        %v1759 = vpop.f32.mrf.mxu0
        %v1760 = vadd.f32 0.0, %v1759
        %v1761 = vpop.f32.mrf.mxu0
        %1762 = vmatprep.mubr.f32.mxu0 0.0
        %1763 = vmatmul.mubr.f32.gmra.mxu0 %v1592
        %v1764 = vpop.f32.mrf.mxu0
        %v1765 = vadd.f32 0.0, %v1764
        %v1766 = vpop.f32.mrf.mxu0
        %1767 = vmatprep.mubr.f32.mxu0 0.0
        %1768 = vmatmul.mubr.f32.gmra.mxu0 %v1595
        %v1769 = vpop.f32.mrf.mxu0
        %v1770 = vadd.f32 0.0, %v1769
        %v1771 = vpop.f32.mrf.mxu0
        %1772 = vmatprep.mubr.f32.mxu0 0.0
        %1773 = vmatmul.mubr.f32.gmra.mxu0 %v1598
        %v1774 = vpop.f32.mrf.mxu0
        %v1775 = vadd.f32 0.0, %v1774
        %v1776 = vpop.f32.mrf.mxu0
        %1777 = vmatprep.mubr.f32.mxu0 0.0
        %1778 = vmatmul.mubr.f32.gmra.mxu0 %v1601
        %v1779 = vpop.f32.mrf.mxu0
        %v1780 = vadd.f32 0.0, %v1779
        %v1781 = vpop.f32.mrf.mxu0
        %1782 = vmatprep.mubr.f32.mxu0 0.0
        %1783 = vmatmul.mubr.f32.gmra.mxu0 %v1604
        %v1784 = vpop.f32.mrf.mxu0
        %v1785 = vadd.f32 0.0, %v1784
        %v1786 = vpop.f32.mrf.mxu0
        %1787 = vmatprep.mubr.f32.mxu0 0.0
        %1788 = vmatmul.mubr.f32.gmra.mxu0 %v1607
        %v1789 = vpop.f32.mrf.mxu0
        %v1790 = vadd.f32 0.0, %v1789
        %v1791 = vpop.f32.mrf.mxu0
        %1792 = vmatprep.mubr.f32.mxu0 0.0
        %1793 = vmatmul.mubr.f32.gmra.mxu0 %v1610
        %v1794 = vpop.f32.mrf.mxu0
        %v1795 = vadd.f32 0.0, %v1794
        %v1796 = vpop.f32.mrf.mxu0
        %1797 = vmatprep.mubr.f32.mxu0 0.0
        %1798 = vmatmul.mubr.f32.gmra.mxu0 %v1613
        %v1799 = vpop.f32.mrf.mxu0
        %v1800 = vadd.f32 0.0, %v1799
        %v1801 = vpop.f32.mrf.mxu0
        %1802 = vmatprep.mubr.f32.mxu0 0.0
        %1803 = vmatmul.mubr.f32.gmra.mxu0 %v1616
        %v1804 = vpop.f32.mrf.mxu0
        %v1805 = vadd.f32 0.0, %v1804
        %v1806 = vpop.f32.mrf.mxu0
        %1807 = vmatprep.mubr.f32.mxu0 0.0
        %1808 = vmatmul.mubr.f32.gmra.mxu0 %v1619
        %v1809 = vpop.f32.mrf.mxu0
        %v1810 = vadd.f32 0.0, %v1809
        %v1811 = vpop.f32.mrf.mxu0
        %1812 = vmatprep.mubr.f32.mxu0 0.0
        %1813 = vmatmul.mubr.f32.gmra.mxu0 %v1622
        %v1814 = vpop.f32.mrf.mxu0
        %v1815 = vadd.f32 0.0, %v1814
        %v1816 = vpop.f32.mrf.mxu0
        %1817 = vmatprep.mubr.f32.mxu0 0.0
        %1818 = vmatmul.mubr.f32.gmra.mxu0 %v1625
        %v1819 = vpop.f32.mrf.mxu0
        %v1820 = vadd.f32 0.0, %v1819
        %v1821 = vpop.f32.mrf.mxu0
        %1822 = vmatprep.mubr.f32.mxu0 0.0
        %1823 = vmatmul.mubr.f32.gmra.mxu0 %v1628
        %v1824 = vpop.f32.mrf.mxu0
        %v1825 = vadd.f32 0.0, %v1824
        %v1826 = vpop.f32.mrf.mxu0
        %1827 = vmatprep.mubr.f32.mxu0 0.0
        %1828 = vmatmul.mubr.f32.gmra.mxu0 %v1631
        %v1829 = vpop.f32.mrf.mxu0
        %v1830 = vadd.f32 0.0, %v1829
        %v1831 = vpop.f32.mrf.mxu0
        %1832 = vmatprep.mubr.f32.mxu0 0.0
        %1833 = vmatmul.mubr.f32.gmra.mxu0 %v1634
        %v1834 = vpop.f32.mrf.mxu0
        %v1835 = vadd.f32 0.0, %v1834
        %v1836 = vpop.f32.mrf.mxu0
        %1837 = vmatprep.mubr.f32.mxu0 0.0
        %1838 = vmatmul.mubr.f32.gmra.mxu0 %v1637
        %v1839 = vpop.f32.mrf.mxu0
        %v1840 = vadd.f32 0.0, %v1839
        %v1841 = vpop.f32.mrf.mxu0
        %1842 = vmatprep.mubr.f32.mxu0 0.0
        %1843 = vmatmul.mubr.f32.gmra.mxu0 %v1640
        %v1844 = vpop.f32.mrf.mxu0
        %v1845 = vadd.f32 0.0, %v1844
        %v1846 = vpop.f32.mrf.mxu0
        %1847 = vmatprep.mubr.f32.mxu0 0.0
        %1848 = vmatmul.mubr.f32.gmra.mxu0 %v1643
        %v1849 = vpop.f32.mrf.mxu0
        %v1850 = vadd.f32 0.0, %v1849
        %v1851 = vpop.f32.mrf.mxu0
        %1852 = vmatprep.mubr.f32.mxu0 0.0
        %1853 = vmatmul.mubr.f32.gmra.mxu0 %v1646
        %v1854 = vpop.f32.mrf.mxu0
        %v1855 = vadd.f32 0.0, %v1854
        %v1856 = vpop.f32.mrf.mxu0
        %1857 = vmatprep.mubr.f32.mxu0 0.0
        %1858 = vmatmul.mubr.f32.gmra.mxu0 %v1649
        %v1859 = vpop.f32.mrf.mxu0
        %v1860 = vadd.f32 0.0, %v1859
        %v1861 = vpop.f32.mrf.mxu0
        %1862 = vmatprep.mubr.f32.mxu0 0.0
        %1863 = vmatmul.mubr.f32.gmra.mxu0 %v1652
        %v1864 = vpop.f32.mrf.mxu0
        %v1865 = vadd.f32 0.0, %v1864
        %v1866 = vpop.f32.mrf.mxu0
        %1867 = vmatprep.mubr.f32.mxu0 0.0
        %1868 = vmatmul.mubr.f32.gmra.mxu0 %v1655
        %v1869 = vpop.f32.mrf.mxu0
        %v1870 = vadd.f32 0.0, %v1869
        %v1871 = vpop.f32.mrf.mxu0
        %1872 = vmatprep.mubr.f32.mxu0 0.0
        %1873 = vmatmul.mubr.f32.gmra.mxu0 %v1658
        %v1874 = vpop.f32.mrf.mxu0
        %v1875 = vadd.f32 0.0, %v1874
        %v1876 = vpop.f32.mrf.mxu0
        %1877 = vmatprep.mubr.f32.mxu0 0.0
        %1878 = vmatmul.mubr.f32.gmra.mxu0 %v1661
        %v1879 = vpop.f32.mrf.mxu0
        %v1880 = vadd.f32 0.0, %v1879
        %v1881 = vpop.f32.mrf.mxu0
        %1882 = vmatprep.mubr.f32.mxu0 0.0
        %1883 = vmatmul.mubr.f32.gmra.mxu0 %v1664
        %v1884 = vpop.f32.mrf.mxu0
        %v1885 = vadd.f32 0.0, %v1884
        %v1886 = vpop.f32.mrf.mxu0
        %1887 = vmatprep.mubr.f32.mxu0 0.0
        %1888 = vmatmul.mubr.f32.gmra.mxu0 %v1667
        %v1889 = vpop.f32.mrf.mxu0
        %v1890 = vadd.f32 0.0, %v1889
        %v1891 = vpop.f32.mrf.mxu0
        %1892 = vmatprep.mubr.f32.mxu0 0.0
        %1893 = vmatmul.mubr.f32.gmra.mxu0 %v1670
        %v1894 = vpop.f32.mrf.mxu0
        %v1895 = vadd.f32 0.0, %v1894
        %v1896 = vpop.f32.mrf.mxu0
        %1897 = vmatprep.mubr.f32.mxu0 0.0
        %1898 = vmatmul.mubr.f32.gmra.mxu0 %v1673
        %v1899 = vpop.f32.mrf.mxu0
        %v1900 = vadd.f32 0.0, %v1899
        %v1901 = vpop.f32.mrf.mxu0
        %1902 = vdwg.mxu0
        %v1903 = vadd.f32 %v1512, %v1745
        %v1904 = vadd.f32 %v1513, %v1750
        %v1905 = vadd.f32 %v1514, %v1755
        %v1906 = vadd.f32 %v1515, %v1760
        %v1907 = vadd.f32 %v1516, %v1765
        %v1908 = vadd.f32 %v1517, %v1770
        %v1909 = vadd.f32 %v1518, %v1775
        %v1910 = vadd.f32 %v1519, %v1780
        %v1911 = vadd.f32 %v1520, %v1785
        %v1912 = vadd.f32 %v1521, %v1790
        %v1913 = vadd.f32 %v1522, %v1795
        %v1914 = vadd.f32 %v1523, %v1800
        %v1915 = vadd.f32 %v1524, %v1805
        %v1916 = vadd.f32 %v1525, %v1810
        %v1917 = vadd.f32 %v1526, %v1815
        %v1918 = vadd.f32 %v1527, %v1820
        %v1919 = vadd.f32 %v1528, %v1825
        %v1920 = vadd.f32 %v1529, %v1830
        %v1921 = vadd.f32 %v1530, %v1835
        %v1922 = vadd.f32 %v1531, %v1840
        %v1923 = vadd.f32 %v1532, %v1845
        %v1924 = vadd.f32 %v1533, %v1850
        %v1925 = vadd.f32 %v1534, %v1855
        %v1926 = vadd.f32 %v1535, %v1860
        %v1927 = vadd.f32 %v1536, %v1865
        %v1928 = vadd.f32 %v1537, %v1870
        %v1929 = vadd.f32 %v1538, %v1875
        %v1930 = vadd.f32 %v1539, %v1880
        %v1931 = vadd.f32 %v1540, %v1885
        %v1932 = vadd.f32 %v1541, %v1890
        %v1933 = vadd.f32 %v1542, %v1895
        %v1934 = vadd.f32 %v1543, %v1900
        %v1935 = vld [vmem:[%s1544 + $0x1] sm:$0xff]
        %v1936 = vld [vmem:[%s1544 + $0x9] sm:$0xff]
        %v1937 = vld [vmem:[%s1544 + $0x19] sm:$0xff]
        %v1938 = vld [vmem:[%s1544 + $0x21] sm:$0xff]
        %v1939 = vld [vmem:[%s1544 + $0x31] sm:$0xff]
        %v1940 = vld [vmem:[%s1544 + $0x39] sm:$0xff]
        %v1941 = vld [vmem:[%s1544 + $0x49] sm:$0xff]
        %v1942 = vld [vmem:[%s1544 + $0x51] sm:$0xff]
        %v1943 = vld [vmem:[%s1544 + $0x61] sm:$0xff]
        %v1944 = vld [vmem:[%s1544 + $0x69] sm:$0xff]
        %v1945 = vld [vmem:[%s1544 + $0x79] sm:$0xff]
        %v1946 = vld [vmem:[%s1544 + $0x81] sm:$0xff]
        %v1947 = vld [vmem:[%s1544 + $0x91] sm:$0xff]
        %v1948 = vld [vmem:[%s1544 + $0x99] sm:$0xff]
        %v1949 = vld [vmem:[%s1544 + $0xa9] sm:$0xff]
        %v1950 = vld [vmem:[%s1544 + $0xb1] sm:$0xff]
        %v1951 = vld [vmem:[%s1544 + $0xc1] sm:$0xff]
        %v1952 = vld [vmem:[%s1544 + $0xc9] sm:$0xff]
        %v1953 = vld [vmem:[%s1544 + $0xd9] sm:$0xff]
        %v1954 = vld [vmem:[%s1544 + $0xe1] sm:$0xff]
        %v1955 = vld [vmem:[%s1544 + $0xf1] sm:$0xff]
        %v1956 = vld [vmem:[%s1544 + $0xf9] sm:$0xff]
        %v1957 = vld [vmem:[%s1544 + $0x109] sm:$0xff]
        %v1958 = vld [vmem:[%s1544 + $0x111] sm:$0xff]
        %v1959 = vld [vmem:[%s1544 + $0x121] sm:$0xff]
        %v1960 = vld [vmem:[%s1544 + $0x129] sm:$0xff]
        %v1961 = vld [vmem:[%s1544 + $0x139] sm:$0xff]
        %v1962 = vld [vmem:[%s1544 + $0x141] sm:$0xff]
        %v1963 = vld [vmem:[%s1544 + $0x151] sm:$0xff]
        %v1964 = vld [vmem:[%s1544 + $0x159] sm:$0xff]
        %v1965 = vld [vmem:[%s1544 + $0x169] sm:$0xff]
        %v1966 = vld [vmem:[%s1544 + $0x171] sm:$0xff]
        %s1967 = scalar_lea.vmem %s2, 16
        %v1968 = vld [vmem:[%s1967] sm:$0xf]
        %v1970 = vsel %vm375, %v1935, 0
        %v1973 = vsel %vm375, %v1936, 0
        %v1976 = vsel %vm375, %v1937, 0
        %v1979 = vsel %vm375, %v1938, 0
        %v1982 = vsel %vm375, %v1939, 0
        %v1985 = vsel %vm375, %v1940, 0
        %v1988 = vsel %vm375, %v1941, 0
        %v1991 = vsel %vm375, %v1942, 0
        %v1994 = vsel %vm375, %v1943, 0
        %v1997 = vsel %vm375, %v1944, 0
        %v2000 = vsel %vm375, %v1945, 0
        %v2003 = vsel %vm375, %v1946, 0
        %v2006 = vsel %vm375, %v1947, 0
        %v2009 = vsel %vm375, %v1948, 0
        %v2012 = vsel %vm375, %v1949, 0
        %v2015 = vsel %vm375, %v1950, 0
        %v2018 = vsel %vm375, %v1951, 0
        %v2021 = vsel %vm375, %v1952, 0
        %v2024 = vsel %vm375, %v1953, 0
        %v2027 = vsel %vm375, %v1954, 0
        %v2030 = vsel %vm375, %v1955, 0
        %v2033 = vsel %vm375, %v1956, 0
        %v2036 = vsel %vm375, %v1957, 0
        %v2039 = vsel %vm375, %v1958, 0
        %v2042 = vsel %vm375, %v1959, 0
        %v2045 = vsel %vm375, %v1960, 0
        %v2048 = vsel %vm375, %v1961, 0
        %v2051 = vsel %vm375, %v1962, 0
        %v2054 = vsel %vm375, %v1963, 0
        %v2057 = vsel %vm375, %v1964, 0
        %v2060 = vsel %vm375, %v1965, 0
        %v2063 = vsel %vm375, %v1966, 0
        %v2066 = vsel %vm601, %v1968, 0
        %2068 = vmatprep.subr.mxu0 0.0
        %2069 = vmatpush1.msra.mxu0 0.0
        %2070 = vmatprep.subr.mxu0 0.0
        %2071 = vmatpush1.msra.mxu0 0.0
        %2072 = vmatprep.subr.mxu0 0.0
        %2073 = vmatpush1.msra.mxu0 0.0
        %2074 = vmatprep.subr.mxu0 0.0
        %2075 = vmatpush1.msra.mxu0 0.0
        %2076 = vmatprep.subr.mxu0 0.0
        %2077 = vmatpush1.msra.mxu0 0.0
        %2078 = vmatprep.subr.mxu0 0.0
        %2079 = vmatpush1.msra.mxu0 0.0
        %2080 = vmatprep.subr.mxu0 0.0
        %2081 = vmatpush1.msra.mxu0 0.0
        %2082 = vmatprep.subr.mxu0 0.0
        %2083 = vmatpush1.msra.mxu0 0.0
        %2084 = vmatprep.subr.mxu0 0.0
        %2085 = vmatpush1.msra.mxu0 0.0
        %2086 = vmatprep.subr.mxu0 0.0
        %2087 = vmatpush1.msra.mxu0 0.0
        %2088 = vmatprep.subr.mxu0 0.0
        %2089 = vmatpush1.msra.mxu0 0.0
        %2090 = vmatprep.subr.mxu0 0.0
        %2091 = vmatpush1.msra.mxu0 0.0
        %2092 = vmatprep.subr.mxu0 0.0
        %2093 = vmatpush1.msra.mxu0 0.0
        %2094 = vmatprep.subr.mxu0 0.0
        %2095 = vmatpush1.msra.mxu0 0.0
        %2096 = vmatprep.subr.mxu0 0.0
        %2097 = vmatpush1.msra.mxu0 0.0
        %2098 = vmatprep.subr.mxu0 0.0
        %2099 = vmatpush1.msra.mxu0 %v2066
        %2100 = vmatprep.subr.mxu0 0.0
        %2101 = vmatpush2.msra.mxu0 0.0
        %2102 = vmatprep.subr.mxu0 0.0
        %2103 = vmatpush2.msra.mxu0 0.0
        %2104 = vmatprep.subr.mxu0 0.0
        %2105 = vmatpush2.msra.mxu0 0.0
        %2106 = vmatprep.subr.mxu0 0.0
        %2107 = vmatpush2.msra.mxu0 0.0
        %2108 = vmatprep.subr.mxu0 0.0
        %2109 = vmatpush2.msra.mxu0 0.0
        %2110 = vmatprep.subr.mxu0 0.0
        %2111 = vmatpush2.msra.mxu0 0.0
        %2112 = vmatprep.subr.mxu0 0.0
        %2113 = vmatpush2.msra.mxu0 0.0
        %2114 = vmatprep.subr.mxu0 0.0
        %2115 = vmatpush2.msra.mxu0 0.0
        %2116 = vmatprep.subr.mxu0 0.0
        %2117 = vmatpush2.msra.mxu0 0.0
        %2118 = vmatprep.subr.mxu0 0.0
        %2119 = vmatpush2.msra.mxu0 0.0
        %2120 = vmatprep.subr.mxu0 0.0
        %2121 = vmatpush2.msra.mxu0 0.0
        %2122 = vmatprep.subr.mxu0 0.0
        %2123 = vmatpush2.msra.mxu0 0.0
        %2124 = vmatprep.subr.mxu0 0.0
        %2125 = vmatpush2.msra.mxu0 0.0
        %2126 = vmatprep.subr.mxu0 0.0
        %2127 = vmatpush2.msra.mxu0 0.0
        %2128 = vmatprep.subr.mxu0 0.0
        %2129 = vmatpush2.msra.mxu0 0.0
        %2130 = vmatprep.subr.mxu0 0.0
        %2131 = vmatpush2.msra.mxu0 0.0
        %2132 = vmatprep.mubr.f32.mxu0 0.0
        %2133 = vmatmul.mubr.f32.gmra.mxu0 %v1970
        %v2134 = vpop.f32.mrf.mxu0
        %v2135 = vadd.f32 0.0, %v2134
        %v2136 = vpop.f32.mrf.mxu0
        %2137 = vmatprep.mubr.f32.mxu0 0.0
        %2138 = vmatmul.mubr.f32.gmra.mxu0 %v1973
        %v2139 = vpop.f32.mrf.mxu0
        %v2140 = vadd.f32 0.0, %v2139
        %v2141 = vpop.f32.mrf.mxu0
        %2142 = vmatprep.mubr.f32.mxu0 0.0
        %2143 = vmatmul.mubr.f32.gmra.mxu0 %v1976
        %v2144 = vpop.f32.mrf.mxu0
        %v2145 = vadd.f32 0.0, %v2144
        %v2146 = vpop.f32.mrf.mxu0
        %2147 = vmatprep.mubr.f32.mxu0 0.0
        %2148 = vmatmul.mubr.f32.gmra.mxu0 %v1979
        %v2149 = vpop.f32.mrf.mxu0
        %v2150 = vadd.f32 0.0, %v2149
        %v2151 = vpop.f32.mrf.mxu0
        %2152 = vmatprep.mubr.f32.mxu0 0.0
        %2153 = vmatmul.mubr.f32.gmra.mxu0 %v1982
        %v2154 = vpop.f32.mrf.mxu0
        %v2155 = vadd.f32 0.0, %v2154
        %v2156 = vpop.f32.mrf.mxu0
        %2157 = vmatprep.mubr.f32.mxu0 0.0
        %2158 = vmatmul.mubr.f32.gmra.mxu0 %v1985
        %v2159 = vpop.f32.mrf.mxu0
        %v2160 = vadd.f32 0.0, %v2159
        %v2161 = vpop.f32.mrf.mxu0
        %2162 = vmatprep.mubr.f32.mxu0 0.0
        %2163 = vmatmul.mubr.f32.gmra.mxu0 %v1988
        %v2164 = vpop.f32.mrf.mxu0
        %v2165 = vadd.f32 0.0, %v2164
        %v2166 = vpop.f32.mrf.mxu0
        %2167 = vmatprep.mubr.f32.mxu0 0.0
        %2168 = vmatmul.mubr.f32.gmra.mxu0 %v1991
        %v2169 = vpop.f32.mrf.mxu0
        %v2170 = vadd.f32 0.0, %v2169
        %v2171 = vpop.f32.mrf.mxu0
        %2172 = vmatprep.mubr.f32.mxu0 0.0
        %2173 = vmatmul.mubr.f32.gmra.mxu0 %v1994
        %v2174 = vpop.f32.mrf.mxu0
        %v2175 = vadd.f32 0.0, %v2174
        %v2176 = vpop.f32.mrf.mxu0
        %2177 = vmatprep.mubr.f32.mxu0 0.0
        %2178 = vmatmul.mubr.f32.gmra.mxu0 %v1997
        %v2179 = vpop.f32.mrf.mxu0
        %v2180 = vadd.f32 0.0, %v2179
        %v2181 = vpop.f32.mrf.mxu0
        %2182 = vmatprep.mubr.f32.mxu0 0.0
        %2183 = vmatmul.mubr.f32.gmra.mxu0 %v2000
        %v2184 = vpop.f32.mrf.mxu0
        %v2185 = vadd.f32 0.0, %v2184
        %v2186 = vpop.f32.mrf.mxu0
        %2187 = vmatprep.mubr.f32.mxu0 0.0
        %2188 = vmatmul.mubr.f32.gmra.mxu0 %v2003
        %v2189 = vpop.f32.mrf.mxu0
        %v2190 = vadd.f32 0.0, %v2189
        %v2191 = vpop.f32.mrf.mxu0
        %2192 = vmatprep.mubr.f32.mxu0 0.0
        %2193 = vmatmul.mubr.f32.gmra.mxu0 %v2006
        %v2194 = vpop.f32.mrf.mxu0
        %v2195 = vadd.f32 0.0, %v2194
        %v2196 = vpop.f32.mrf.mxu0
        %2197 = vmatprep.mubr.f32.mxu0 0.0
        %2198 = vmatmul.mubr.f32.gmra.mxu0 %v2009
        %v2199 = vpop.f32.mrf.mxu0
        %v2200 = vadd.f32 0.0, %v2199
        %v2201 = vpop.f32.mrf.mxu0
        %2202 = vmatprep.mubr.f32.mxu0 0.0
        %2203 = vmatmul.mubr.f32.gmra.mxu0 %v2012
        %v2204 = vpop.f32.mrf.mxu0
        %v2205 = vadd.f32 0.0, %v2204
        %v2206 = vpop.f32.mrf.mxu0
        %2207 = vmatprep.mubr.f32.mxu0 0.0
        %2208 = vmatmul.mubr.f32.gmra.mxu0 %v2015
        %v2209 = vpop.f32.mrf.mxu0
        %v2210 = vadd.f32 0.0, %v2209
        %v2211 = vpop.f32.mrf.mxu0
        %2212 = vmatprep.mubr.f32.mxu0 0.0
        %2213 = vmatmul.mubr.f32.gmra.mxu0 %v2018
        %v2214 = vpop.f32.mrf.mxu0
        %v2215 = vadd.f32 0.0, %v2214
        %v2216 = vpop.f32.mrf.mxu0
        %2217 = vmatprep.mubr.f32.mxu0 0.0
        %2218 = vmatmul.mubr.f32.gmra.mxu0 %v2021
        %v2219 = vpop.f32.mrf.mxu0
        %v2220 = vadd.f32 0.0, %v2219
        %v2221 = vpop.f32.mrf.mxu0
        %2222 = vmatprep.mubr.f32.mxu0 0.0
        %2223 = vmatmul.mubr.f32.gmra.mxu0 %v2024
        %v2224 = vpop.f32.mrf.mxu0
        %v2225 = vadd.f32 0.0, %v2224
        %v2226 = vpop.f32.mrf.mxu0
        %2227 = vmatprep.mubr.f32.mxu0 0.0
        %2228 = vmatmul.mubr.f32.gmra.mxu0 %v2027
        %v2229 = vpop.f32.mrf.mxu0
        %v2230 = vadd.f32 0.0, %v2229
        %v2231 = vpop.f32.mrf.mxu0
        %2232 = vmatprep.mubr.f32.mxu0 0.0
        %2233 = vmatmul.mubr.f32.gmra.mxu0 %v2030
        %v2234 = vpop.f32.mrf.mxu0
        %v2235 = vadd.f32 0.0, %v2234
        %v2236 = vpop.f32.mrf.mxu0
        %2237 = vmatprep.mubr.f32.mxu0 0.0
        %2238 = vmatmul.mubr.f32.gmra.mxu0 %v2033
        %v2239 = vpop.f32.mrf.mxu0
        %v2240 = vadd.f32 0.0, %v2239
        %v2241 = vpop.f32.mrf.mxu0
        %2242 = vmatprep.mubr.f32.mxu0 0.0
        %2243 = vmatmul.mubr.f32.gmra.mxu0 %v2036
        %v2244 = vpop.f32.mrf.mxu0
        %v2245 = vadd.f32 0.0, %v2244
        %v2246 = vpop.f32.mrf.mxu0
        %2247 = vmatprep.mubr.f32.mxu0 0.0
        %2248 = vmatmul.mubr.f32.gmra.mxu0 %v2039
        %v2249 = vpop.f32.mrf.mxu0
        %v2250 = vadd.f32 0.0, %v2249
        %v2251 = vpop.f32.mrf.mxu0
        %2252 = vmatprep.mubr.f32.mxu0 0.0
        %2253 = vmatmul.mubr.f32.gmra.mxu0 %v2042
        %v2254 = vpop.f32.mrf.mxu0
        %v2255 = vadd.f32 0.0, %v2254
        %v2256 = vpop.f32.mrf.mxu0
        %2257 = vmatprep.mubr.f32.mxu0 0.0
        %2258 = vmatmul.mubr.f32.gmra.mxu0 %v2045
        %v2259 = vpop.f32.mrf.mxu0
        %v2260 = vadd.f32 0.0, %v2259
        %v2261 = vpop.f32.mrf.mxu0
        %2262 = vmatprep.mubr.f32.mxu0 0.0
        %2263 = vmatmul.mubr.f32.gmra.mxu0 %v2048
        %v2264 = vpop.f32.mrf.mxu0
        %v2265 = vadd.f32 0.0, %v2264
        %v2266 = vpop.f32.mrf.mxu0
        %2267 = vmatprep.mubr.f32.mxu0 0.0
        %2268 = vmatmul.mubr.f32.gmra.mxu0 %v2051
        %v2269 = vpop.f32.mrf.mxu0
        %v2270 = vadd.f32 0.0, %v2269
        %v2271 = vpop.f32.mrf.mxu0
        %2272 = vmatprep.mubr.f32.mxu0 0.0
        %2273 = vmatmul.mubr.f32.gmra.mxu0 %v2054
        %v2274 = vpop.f32.mrf.mxu0
        %v2275 = vadd.f32 0.0, %v2274
        %v2276 = vpop.f32.mrf.mxu0
        %2277 = vmatprep.mubr.f32.mxu0 0.0
        %2278 = vmatmul.mubr.f32.gmra.mxu0 %v2057
        %v2279 = vpop.f32.mrf.mxu0
        %v2280 = vadd.f32 0.0, %v2279
        %v2281 = vpop.f32.mrf.mxu0
        %2282 = vmatprep.mubr.f32.mxu0 0.0
        %2283 = vmatmul.mubr.f32.gmra.mxu0 %v2060
        %v2284 = vpop.f32.mrf.mxu0
        %v2285 = vadd.f32 0.0, %v2284
        %v2286 = vpop.f32.mrf.mxu0
        %2287 = vmatprep.mubr.f32.mxu0 0.0
        %2288 = vmatmul.mubr.f32.gmra.mxu0 %v2063
        %v2289 = vpop.f32.mrf.mxu0
        %v2290 = vadd.f32 0.0, %v2289
        %v2291 = vpop.f32.mrf.mxu0
        %2292 = vdwg.mxu0
        %v2293 = vadd.f32 %v1903, %v2135
        %v2294 = vadd.f32 %v1904, %v2140
        %v2295 = vadd.f32 %v1905, %v2145
        %v2296 = vadd.f32 %v1906, %v2150
        %v2297 = vadd.f32 %v1907, %v2155
        %v2298 = vadd.f32 %v1908, %v2160
        %v2299 = vadd.f32 %v1909, %v2165
        %v2300 = vadd.f32 %v1910, %v2170
        %v2301 = vadd.f32 %v1911, %v2175
        %v2302 = vadd.f32 %v1912, %v2180
        %v2303 = vadd.f32 %v1913, %v2185
        %v2304 = vadd.f32 %v1914, %v2190
        %v2305 = vadd.f32 %v1915, %v2195
        %v2306 = vadd.f32 %v1916, %v2200
        %v2307 = vadd.f32 %v1917, %v2205
        %v2308 = vadd.f32 %v1918, %v2210
        %v2309 = vadd.f32 %v1919, %v2215
        %v2310 = vadd.f32 %v1920, %v2220
        %v2311 = vadd.f32 %v1921, %v2225
        %v2312 = vadd.f32 %v1922, %v2230
        %v2313 = vadd.f32 %v1923, %v2235
        %v2314 = vadd.f32 %v1924, %v2240
        %v2315 = vadd.f32 %v1925, %v2245
        %v2316 = vadd.f32 %v1926, %v2250
        %v2317 = vadd.f32 %v1927, %v2255
        %v2318 = vadd.f32 %v1928, %v2260
        %v2319 = vadd.f32 %v1929, %v2265
        %v2320 = vadd.f32 %v1930, %v2270
        %v2321 = vadd.f32 %v1931, %v2275
        %v2322 = vadd.f32 %v1932, %v2280
        %v2323 = vadd.f32 %v1933, %v2285
        %v2324 = vadd.f32 %v1934, %v2290
        %v2325 = vld [vmem:[%s1544 + $0x2] sm:$0xff]
        %v2326 = vld [vmem:[%s1544 + $0xa] sm:$0xff]
        %v2327 = vld [vmem:[%s1544 + $0x1a] sm:$0xff]
        %v2328 = vld [vmem:[%s1544 + $0x22] sm:$0xff]
        %v2329 = vld [vmem:[%s1544 + $0x32] sm:$0xff]
        %v2330 = vld [vmem:[%s1544 + $0x3a] sm:$0xff]
        %v2331 = vld [vmem:[%s1544 + $0x4a] sm:$0xff]
        %v2332 = vld [vmem:[%s1544 + $0x52] sm:$0xff]
        %v2333 = vld [vmem:[%s1544 + $0x62] sm:$0xff]
        %v2334 = vld [vmem:[%s1544 + $0x6a] sm:$0xff]
        %v2335 = vld [vmem:[%s1544 + $0x7a] sm:$0xff]
        %v2336 = vld [vmem:[%s1544 + $0x82] sm:$0xff]
        %v2337 = vld [vmem:[%s1544 + $0x92] sm:$0xff]
        %v2338 = vld [vmem:[%s1544 + $0x9a] sm:$0xff]
        %v2339 = vld [vmem:[%s1544 + $0xaa] sm:$0xff]
        %v2340 = vld [vmem:[%s1544 + $0xb2] sm:$0xff]
        %v2341 = vld [vmem:[%s1544 + $0xc2] sm:$0xff]
        %v2342 = vld [vmem:[%s1544 + $0xca] sm:$0xff]
        %v2343 = vld [vmem:[%s1544 + $0xda] sm:$0xff]
        %v2344 = vld [vmem:[%s1544 + $0xe2] sm:$0xff]
        %v2345 = vld [vmem:[%s1544 + $0xf2] sm:$0xff]
        %v2346 = vld [vmem:[%s1544 + $0xfa] sm:$0xff]
        %v2347 = vld [vmem:[%s1544 + $0x10a] sm:$0xff]
        %v2348 = vld [vmem:[%s1544 + $0x112] sm:$0xff]
        %v2349 = vld [vmem:[%s1544 + $0x122] sm:$0xff]
        %v2350 = vld [vmem:[%s1544 + $0x12a] sm:$0xff]
        %v2351 = vld [vmem:[%s1544 + $0x13a] sm:$0xff]
        %v2352 = vld [vmem:[%s1544 + $0x142] sm:$0xff]
        %v2353 = vld [vmem:[%s1544 + $0x152] sm:$0xff]
        %v2354 = vld [vmem:[%s1544 + $0x15a] sm:$0xff]
        %v2355 = vld [vmem:[%s1544 + $0x16a] sm:$0xff]
        %v2356 = vld [vmem:[%s1544 + $0x172] sm:$0xff]
        %s2357 = scalar_lea.vmem %s2, 20
        %v2358 = vld [vmem:[%s2357] sm:$0xf]
        %v2360 = vsel %vm375, %v2325, 0
        %v2363 = vsel %vm375, %v2326, 0
        %v2366 = vsel %vm375, %v2327, 0
        %v2369 = vsel %vm375, %v2328, 0
        %v2372 = vsel %vm375, %v2329, 0
        %v2375 = vsel %vm375, %v2330, 0
        %v2378 = vsel %vm375, %v2331, 0
        %v2381 = vsel %vm375, %v2332, 0
        %v2384 = vsel %vm375, %v2333, 0
        %v2387 = vsel %vm375, %v2334, 0
        %v2390 = vsel %vm375, %v2335, 0
        %v2393 = vsel %vm375, %v2336, 0
        %v2396 = vsel %vm375, %v2337, 0
        %v2399 = vsel %vm375, %v2338, 0
        %v2402 = vsel %vm375, %v2339, 0
        %v2405 = vsel %vm375, %v2340, 0
        %v2408 = vsel %vm375, %v2341, 0
        %v2411 = vsel %vm375, %v2342, 0
        %v2414 = vsel %vm375, %v2343, 0
        %v2417 = vsel %vm375, %v2344, 0
        %v2420 = vsel %vm375, %v2345, 0
        %v2423 = vsel %vm375, %v2346, 0
        %v2426 = vsel %vm375, %v2347, 0
        %v2429 = vsel %vm375, %v2348, 0
        %v2432 = vsel %vm375, %v2349, 0
        %v2435 = vsel %vm375, %v2350, 0
        %v2438 = vsel %vm375, %v2351, 0
        %v2441 = vsel %vm375, %v2352, 0
        %v2444 = vsel %vm375, %v2353, 0
        %v2447 = vsel %vm375, %v2354, 0
        %v2450 = vsel %vm375, %v2355, 0
        %v2453 = vsel %vm375, %v2356, 0
        %v2456 = vsel %vm601, %v2358, 0
        %2458 = vmatprep.subr.mxu0 0.0
        %2459 = vmatpush1.msra.mxu0 0.0
        %2460 = vmatprep.subr.mxu0 0.0
        %2461 = vmatpush1.msra.mxu0 0.0
        %2462 = vmatprep.subr.mxu0 0.0
        %2463 = vmatpush1.msra.mxu0 0.0
        %2464 = vmatprep.subr.mxu0 0.0
        %2465 = vmatpush1.msra.mxu0 0.0
        %2466 = vmatprep.subr.mxu0 0.0
        %2467 = vmatpush1.msra.mxu0 0.0
        %2468 = vmatprep.subr.mxu0 0.0
        %2469 = vmatpush1.msra.mxu0 0.0
        %2470 = vmatprep.subr.mxu0 0.0
        %2471 = vmatpush1.msra.mxu0 0.0
        %2472 = vmatprep.subr.mxu0 0.0
        %2473 = vmatpush1.msra.mxu0 0.0
        %2474 = vmatprep.subr.mxu0 0.0
        %2475 = vmatpush1.msra.mxu0 0.0
        %2476 = vmatprep.subr.mxu0 0.0
        %2477 = vmatpush1.msra.mxu0 0.0
        %2478 = vmatprep.subr.mxu0 0.0
        %2479 = vmatpush1.msra.mxu0 0.0
        %2480 = vmatprep.subr.mxu0 0.0
        %2481 = vmatpush1.msra.mxu0 0.0
        %2482 = vmatprep.subr.mxu0 0.0
        %2483 = vmatpush1.msra.mxu0 0.0
        %2484 = vmatprep.subr.mxu0 0.0
        %2485 = vmatpush1.msra.mxu0 0.0
        %2486 = vmatprep.subr.mxu0 0.0
        %2487 = vmatpush1.msra.mxu0 0.0
        %2488 = vmatprep.subr.mxu0 0.0
        %2489 = vmatpush1.msra.mxu0 %v2456
        %2490 = vmatprep.subr.mxu0 0.0
        %2491 = vmatpush2.msra.mxu0 0.0
        %2492 = vmatprep.subr.mxu0 0.0
        %2493 = vmatpush2.msra.mxu0 0.0
        %2494 = vmatprep.subr.mxu0 0.0
        %2495 = vmatpush2.msra.mxu0 0.0
        %2496 = vmatprep.subr.mxu0 0.0
        %2497 = vmatpush2.msra.mxu0 0.0
        %2498 = vmatprep.subr.mxu0 0.0
        %2499 = vmatpush2.msra.mxu0 0.0
        %2500 = vmatprep.subr.mxu0 0.0
        %2501 = vmatpush2.msra.mxu0 0.0
        %2502 = vmatprep.subr.mxu0 0.0
        %2503 = vmatpush2.msra.mxu0 0.0
        %2504 = vmatprep.subr.mxu0 0.0
        %2505 = vmatpush2.msra.mxu0 0.0
        %2506 = vmatprep.subr.mxu0 0.0
        %2507 = vmatpush2.msra.mxu0 0.0
        %2508 = vmatprep.subr.mxu0 0.0
        %2509 = vmatpush2.msra.mxu0 0.0
        %2510 = vmatprep.subr.mxu0 0.0
        %2511 = vmatpush2.msra.mxu0 0.0
        %2512 = vmatprep.subr.mxu0 0.0
        %2513 = vmatpush2.msra.mxu0 0.0
        %2514 = vmatprep.subr.mxu0 0.0
        %2515 = vmatpush2.msra.mxu0 0.0
        %2516 = vmatprep.subr.mxu0 0.0
        %2517 = vmatpush2.msra.mxu0 0.0
        %2518 = vmatprep.subr.mxu0 0.0
        %2519 = vmatpush2.msra.mxu0 0.0
        %2520 = vmatprep.subr.mxu0 0.0
        %2521 = vmatpush2.msra.mxu0 0.0
        %2522 = vmatprep.mubr.f32.mxu0 0.0
        %2523 = vmatmul.mubr.f32.gmra.mxu0 %v2360
        %v2524 = vpop.f32.mrf.mxu0
        %v2525 = vadd.f32 0.0, %v2524
        %v2526 = vpop.f32.mrf.mxu0
        %2527 = vmatprep.mubr.f32.mxu0 0.0
        %2528 = vmatmul.mubr.f32.gmra.mxu0 %v2363
        %v2529 = vpop.f32.mrf.mxu0
        %v2530 = vadd.f32 0.0, %v2529
        %v2531 = vpop.f32.mrf.mxu0
        %2532 = vmatprep.mubr.f32.mxu0 0.0
        %2533 = vmatmul.mubr.f32.gmra.mxu0 %v2366
        %v2534 = vpop.f32.mrf.mxu0
        %v2535 = vadd.f32 0.0, %v2534
        %v2536 = vpop.f32.mrf.mxu0
        %2537 = vmatprep.mubr.f32.mxu0 0.0
        %2538 = vmatmul.mubr.f32.gmra.mxu0 %v2369
        %v2539 = vpop.f32.mrf.mxu0
        %v2540 = vadd.f32 0.0, %v2539
        %v2541 = vpop.f32.mrf.mxu0
        %2542 = vmatprep.mubr.f32.mxu0 0.0
        %2543 = vmatmul.mubr.f32.gmra.mxu0 %v2372
        %v2544 = vpop.f32.mrf.mxu0
        %v2545 = vadd.f32 0.0, %v2544
        %v2546 = vpop.f32.mrf.mxu0
        %2547 = vmatprep.mubr.f32.mxu0 0.0
        %2548 = vmatmul.mubr.f32.gmra.mxu0 %v2375
        %v2549 = vpop.f32.mrf.mxu0
        %v2550 = vadd.f32 0.0, %v2549
        %v2551 = vpop.f32.mrf.mxu0
        %2552 = vmatprep.mubr.f32.mxu0 0.0
        %2553 = vmatmul.mubr.f32.gmra.mxu0 %v2378
        %v2554 = vpop.f32.mrf.mxu0
        %v2555 = vadd.f32 0.0, %v2554
        %v2556 = vpop.f32.mrf.mxu0
        %2557 = vmatprep.mubr.f32.mxu0 0.0
        %2558 = vmatmul.mubr.f32.gmra.mxu0 %v2381
        %v2559 = vpop.f32.mrf.mxu0
        %v2560 = vadd.f32 0.0, %v2559
        %v2561 = vpop.f32.mrf.mxu0
        %2562 = vmatprep.mubr.f32.mxu0 0.0
        %2563 = vmatmul.mubr.f32.gmra.mxu0 %v2384
        %v2564 = vpop.f32.mrf.mxu0
        %v2565 = vadd.f32 0.0, %v2564
        %v2566 = vpop.f32.mrf.mxu0
        %2567 = vmatprep.mubr.f32.mxu0 0.0
        %2568 = vmatmul.mubr.f32.gmra.mxu0 %v2387
        %v2569 = vpop.f32.mrf.mxu0
        %v2570 = vadd.f32 0.0, %v2569
        %v2571 = vpop.f32.mrf.mxu0
        %2572 = vmatprep.mubr.f32.mxu0 0.0
        %2573 = vmatmul.mubr.f32.gmra.mxu0 %v2390
        %v2574 = vpop.f32.mrf.mxu0
        %v2575 = vadd.f32 0.0, %v2574
        %v2576 = vpop.f32.mrf.mxu0
        %2577 = vmatprep.mubr.f32.mxu0 0.0
        %2578 = vmatmul.mubr.f32.gmra.mxu0 %v2393
        %v2579 = vpop.f32.mrf.mxu0
        %v2580 = vadd.f32 0.0, %v2579
        %v2581 = vpop.f32.mrf.mxu0
        %2582 = vmatprep.mubr.f32.mxu0 0.0
        %2583 = vmatmul.mubr.f32.gmra.mxu0 %v2396
        %v2584 = vpop.f32.mrf.mxu0
        %v2585 = vadd.f32 0.0, %v2584
        %v2586 = vpop.f32.mrf.mxu0
        %2587 = vmatprep.mubr.f32.mxu0 0.0
        %2588 = vmatmul.mubr.f32.gmra.mxu0 %v2399
        %v2589 = vpop.f32.mrf.mxu0
        %v2590 = vadd.f32 0.0, %v2589
        %v2591 = vpop.f32.mrf.mxu0
        %2592 = vmatprep.mubr.f32.mxu0 0.0
        %2593 = vmatmul.mubr.f32.gmra.mxu0 %v2402
        %v2594 = vpop.f32.mrf.mxu0
        %v2595 = vadd.f32 0.0, %v2594
        %v2596 = vpop.f32.mrf.mxu0
        %2597 = vmatprep.mubr.f32.mxu0 0.0
        %2598 = vmatmul.mubr.f32.gmra.mxu0 %v2405
        %v2599 = vpop.f32.mrf.mxu0
        %v2600 = vadd.f32 0.0, %v2599
        %v2601 = vpop.f32.mrf.mxu0
        %2602 = vmatprep.mubr.f32.mxu0 0.0
        %2603 = vmatmul.mubr.f32.gmra.mxu0 %v2408
        %v2604 = vpop.f32.mrf.mxu0
        %v2605 = vadd.f32 0.0, %v2604
        %v2606 = vpop.f32.mrf.mxu0
        %2607 = vmatprep.mubr.f32.mxu0 0.0
        %2608 = vmatmul.mubr.f32.gmra.mxu0 %v2411
        %v2609 = vpop.f32.mrf.mxu0
        %v2610 = vadd.f32 0.0, %v2609
        %v2611 = vpop.f32.mrf.mxu0
        %2612 = vmatprep.mubr.f32.mxu0 0.0
        %2613 = vmatmul.mubr.f32.gmra.mxu0 %v2414
        %v2614 = vpop.f32.mrf.mxu0
        %v2615 = vadd.f32 0.0, %v2614
        %v2616 = vpop.f32.mrf.mxu0
        %2617 = vmatprep.mubr.f32.mxu0 0.0
        %2618 = vmatmul.mubr.f32.gmra.mxu0 %v2417
        %v2619 = vpop.f32.mrf.mxu0
        %v2620 = vadd.f32 0.0, %v2619
        %v2621 = vpop.f32.mrf.mxu0
        %2622 = vmatprep.mubr.f32.mxu0 0.0
        %2623 = vmatmul.mubr.f32.gmra.mxu0 %v2420
        %v2624 = vpop.f32.mrf.mxu0
        %v2625 = vadd.f32 0.0, %v2624
        %v2626 = vpop.f32.mrf.mxu0
        %2627 = vmatprep.mubr.f32.mxu0 0.0
        %2628 = vmatmul.mubr.f32.gmra.mxu0 %v2423
        %v2629 = vpop.f32.mrf.mxu0
        %v2630 = vadd.f32 0.0, %v2629
        %v2631 = vpop.f32.mrf.mxu0
        %2632 = vmatprep.mubr.f32.mxu0 0.0
        %2633 = vmatmul.mubr.f32.gmra.mxu0 %v2426
        %v2634 = vpop.f32.mrf.mxu0
        %v2635 = vadd.f32 0.0, %v2634
        %v2636 = vpop.f32.mrf.mxu0
        %2637 = vmatprep.mubr.f32.mxu0 0.0
        %2638 = vmatmul.mubr.f32.gmra.mxu0 %v2429
        %v2639 = vpop.f32.mrf.mxu0
        %v2640 = vadd.f32 0.0, %v2639
        %v2641 = vpop.f32.mrf.mxu0
        %2642 = vmatprep.mubr.f32.mxu0 0.0
        %2643 = vmatmul.mubr.f32.gmra.mxu0 %v2432
        %v2644 = vpop.f32.mrf.mxu0
        %v2645 = vadd.f32 0.0, %v2644
        %v2646 = vpop.f32.mrf.mxu0
        %2647 = vmatprep.mubr.f32.mxu0 0.0
        %2648 = vmatmul.mubr.f32.gmra.mxu0 %v2435
        %v2649 = vpop.f32.mrf.mxu0
        %v2650 = vadd.f32 0.0, %v2649
        %v2651 = vpop.f32.mrf.mxu0
        %2652 = vmatprep.mubr.f32.mxu0 0.0
        %2653 = vmatmul.mubr.f32.gmra.mxu0 %v2438
        %v2654 = vpop.f32.mrf.mxu0
        %v2655 = vadd.f32 0.0, %v2654
        %v2656 = vpop.f32.mrf.mxu0
        %2657 = vmatprep.mubr.f32.mxu0 0.0
        %2658 = vmatmul.mubr.f32.gmra.mxu0 %v2441
        %v2659 = vpop.f32.mrf.mxu0
        %v2660 = vadd.f32 0.0, %v2659
        %v2661 = vpop.f32.mrf.mxu0
        %2662 = vmatprep.mubr.f32.mxu0 0.0
        %2663 = vmatmul.mubr.f32.gmra.mxu0 %v2444
        %v2664 = vpop.f32.mrf.mxu0
        %v2665 = vadd.f32 0.0, %v2664
        %v2666 = vpop.f32.mrf.mxu0
        %2667 = vmatprep.mubr.f32.mxu0 0.0
        %2668 = vmatmul.mubr.f32.gmra.mxu0 %v2447
        %v2669 = vpop.f32.mrf.mxu0
        %v2670 = vadd.f32 0.0, %v2669
        %v2671 = vpop.f32.mrf.mxu0
        %2672 = vmatprep.mubr.f32.mxu0 0.0
        %2673 = vmatmul.mubr.f32.gmra.mxu0 %v2450
        %v2674 = vpop.f32.mrf.mxu0
        %v2675 = vadd.f32 0.0, %v2674
        %v2676 = vpop.f32.mrf.mxu0
        %2677 = vmatprep.mubr.f32.mxu0 0.0
        %2678 = vmatmul.mubr.f32.gmra.mxu0 %v2453
        %v2679 = vpop.f32.mrf.mxu0
        %v2680 = vadd.f32 0.0, %v2679
        %v2681 = vpop.f32.mrf.mxu0
        %2682 = vdwg.mxu0
        %v2683 = vadd.f32 %v2293, %v2525
        %v2684 = vadd.f32 %v2294, %v2530
        %v2685 = vadd.f32 %v2295, %v2535
        %v2686 = vadd.f32 %v2296, %v2540
        %v2687 = vadd.f32 %v2297, %v2545
        %v2688 = vadd.f32 %v2298, %v2550
        %v2689 = vadd.f32 %v2299, %v2555
        %v2690 = vadd.f32 %v2300, %v2560
        %v2691 = vadd.f32 %v2301, %v2565
        %v2692 = vadd.f32 %v2302, %v2570
        %v2693 = vadd.f32 %v2303, %v2575
        %v2694 = vadd.f32 %v2304, %v2580
        %v2695 = vadd.f32 %v2305, %v2585
        %v2696 = vadd.f32 %v2306, %v2590
        %v2697 = vadd.f32 %v2307, %v2595
        %v2698 = vadd.f32 %v2308, %v2600
        %v2699 = vadd.f32 %v2309, %v2605
        %v2700 = vadd.f32 %v2310, %v2610
        %v2701 = vadd.f32 %v2311, %v2615
        %v2702 = vadd.f32 %v2312, %v2620
        %v2703 = vadd.f32 %v2313, %v2625
        %v2704 = vadd.f32 %v2314, %v2630
        %v2705 = vadd.f32 %v2315, %v2635
        %v2706 = vadd.f32 %v2316, %v2640
        %v2707 = vadd.f32 %v2317, %v2645
        %v2708 = vadd.f32 %v2318, %v2650
        %v2709 = vadd.f32 %v2319, %v2655
        %v2710 = vadd.f32 %v2320, %v2660
        %v2711 = vadd.f32 %v2321, %v2665
        %v2712 = vadd.f32 %v2322, %v2670
        %v2713 = vadd.f32 %v2323, %v2675
        %v2714 = vadd.f32 %v2324, %v2680
        %s2715 = scalar_lea.vmem [#allocation2], 48
        %v2716 = vld [vmem:[%s2715] sm:$0xff]
        %v2717 = vld [vmem:[%s2715 + $0x8] sm:$0xff]
        %v2718 = vld [vmem:[%s2715 + $0x18] sm:$0xff]
        %v2719 = vld [vmem:[%s2715 + $0x20] sm:$0xff]
        %v2720 = vld [vmem:[%s2715 + $0x30] sm:$0xff]
        %v2721 = vld [vmem:[%s2715 + $0x38] sm:$0xff]
        %v2722 = vld [vmem:[%s2715 + $0x48] sm:$0xff]
        %v2723 = vld [vmem:[%s2715 + $0x50] sm:$0xff]
        %v2724 = vld [vmem:[%s2715 + $0x60] sm:$0xff]
        %v2725 = vld [vmem:[%s2715 + $0x68] sm:$0xff]
        %v2726 = vld [vmem:[%s2715 + $0x78] sm:$0xff]
        %v2727 = vld [vmem:[%s2715 + $0x80] sm:$0xff]
        %v2728 = vld [vmem:[%s2715 + $0x90] sm:$0xff]
        %v2729 = vld [vmem:[%s2715 + $0x98] sm:$0xff]
        %v2730 = vld [vmem:[%s2715 + $0xa8] sm:$0xff]
        %v2731 = vld [vmem:[%s2715 + $0xb0] sm:$0xff]
        %v2732 = vld [vmem:[%s2715 + $0xc0] sm:$0xff]
        %v2733 = vld [vmem:[%s2715 + $0xc8] sm:$0xff]
        %v2734 = vld [vmem:[%s2715 + $0xd8] sm:$0xff]
        %v2735 = vld [vmem:[%s2715 + $0xe0] sm:$0xff]
        %v2736 = vld [vmem:[%s2715 + $0xf0] sm:$0xff]
        %v2737 = vld [vmem:[%s2715 + $0xf8] sm:$0xff]
        %v2738 = vld [vmem:[%s2715 + $0x108] sm:$0xff]
        %v2739 = vld [vmem:[%s2715 + $0x110] sm:$0xff]
        %v2740 = vld [vmem:[%s2715 + $0x120] sm:$0xff]
        %v2741 = vld [vmem:[%s2715 + $0x128] sm:$0xff]
        %v2742 = vld [vmem:[%s2715 + $0x138] sm:$0xff]
        %v2743 = vld [vmem:[%s2715 + $0x140] sm:$0xff]
        %v2744 = vld [vmem:[%s2715 + $0x150] sm:$0xff]
        %v2745 = vld [vmem:[%s2715 + $0x158] sm:$0xff]
        %v2746 = vld [vmem:[%s2715 + $0x168] sm:$0xff]
        %v2747 = vld [vmem:[%s2715 + $0x170] sm:$0xff]
        %s2748 = scalar_lea.vmem %s2, 24
        %v2749 = vld [vmem:[%s2748] sm:$0xf]
        %v2751 = vsel %vm375, %v2716, 0
        %v2754 = vsel %vm375, %v2717, 0
        %v2757 = vsel %vm375, %v2718, 0
        %v2760 = vsel %vm375, %v2719, 0
        %v2763 = vsel %vm375, %v2720, 0
        %v2766 = vsel %vm375, %v2721, 0
        %v2769 = vsel %vm375, %v2722, 0
        %v2772 = vsel %vm375, %v2723, 0
        %v2775 = vsel %vm375, %v2724, 0
        %v2778 = vsel %vm375, %v2725, 0
        %v2781 = vsel %vm375, %v2726, 0
        %v2784 = vsel %vm375, %v2727, 0
        %v2787 = vsel %vm375, %v2728, 0
        %v2790 = vsel %vm375, %v2729, 0
        %v2793 = vsel %vm375, %v2730, 0
        %v2796 = vsel %vm375, %v2731, 0
        %v2799 = vsel %vm375, %v2732, 0
        %v2802 = vsel %vm375, %v2733, 0
        %v2805 = vsel %vm375, %v2734, 0
        %v2808 = vsel %vm375, %v2735, 0
        %v2811 = vsel %vm375, %v2736, 0
        %v2814 = vsel %vm375, %v2737, 0
        %v2817 = vsel %vm375, %v2738, 0
        %v2820 = vsel %vm375, %v2739, 0
        %v2823 = vsel %vm375, %v2740, 0
        %v2826 = vsel %vm375, %v2741, 0
        %v2829 = vsel %vm375, %v2742, 0
        %v2832 = vsel %vm375, %v2743, 0
        %v2835 = vsel %vm375, %v2744, 0
        %v2838 = vsel %vm375, %v2745, 0
        %v2841 = vsel %vm375, %v2746, 0
        %v2844 = vsel %vm375, %v2747, 0
        %v2847 = vsel %vm601, %v2749, 0
        %2849 = vmatprep.subr.mxu0 0.0
        %2850 = vmatpush1.msra.mxu0 0.0
        %2851 = vmatprep.subr.mxu0 0.0
        %2852 = vmatpush1.msra.mxu0 0.0
        %2853 = vmatprep.subr.mxu0 0.0
        %2854 = vmatpush1.msra.mxu0 0.0
        %2855 = vmatprep.subr.mxu0 0.0
        %2856 = vmatpush1.msra.mxu0 0.0
        %2857 = vmatprep.subr.mxu0 0.0
        %2858 = vmatpush1.msra.mxu0 0.0
        %2859 = vmatprep.subr.mxu0 0.0
        %2860 = vmatpush1.msra.mxu0 0.0
        %2861 = vmatprep.subr.mxu0 0.0
        %2862 = vmatpush1.msra.mxu0 0.0
        %2863 = vmatprep.subr.mxu0 0.0
        %2864 = vmatpush1.msra.mxu0 0.0
        %2865 = vmatprep.subr.mxu0 0.0
        %2866 = vmatpush1.msra.mxu0 0.0
        %2867 = vmatprep.subr.mxu0 0.0
        %2868 = vmatpush1.msra.mxu0 0.0
        %2869 = vmatprep.subr.mxu0 0.0
        %2870 = vmatpush1.msra.mxu0 0.0
        %2871 = vmatprep.subr.mxu0 0.0
        %2872 = vmatpush1.msra.mxu0 0.0
        %2873 = vmatprep.subr.mxu0 0.0
        %2874 = vmatpush1.msra.mxu0 0.0
        %2875 = vmatprep.subr.mxu0 0.0
        %2876 = vmatpush1.msra.mxu0 0.0
        %2877 = vmatprep.subr.mxu0 0.0
        %2878 = vmatpush1.msra.mxu0 0.0
        %2879 = vmatprep.subr.mxu0 0.0
        %2880 = vmatpush1.msra.mxu0 %v2847
        %2881 = vmatprep.subr.mxu0 0.0
        %2882 = vmatpush2.msra.mxu0 0.0
        %2883 = vmatprep.subr.mxu0 0.0
        %2884 = vmatpush2.msra.mxu0 0.0
        %2885 = vmatprep.subr.mxu0 0.0
        %2886 = vmatpush2.msra.mxu0 0.0
        %2887 = vmatprep.subr.mxu0 0.0
        %2888 = vmatpush2.msra.mxu0 0.0
        %2889 = vmatprep.subr.mxu0 0.0
        %2890 = vmatpush2.msra.mxu0 0.0
        %2891 = vmatprep.subr.mxu0 0.0
        %2892 = vmatpush2.msra.mxu0 0.0
        %2893 = vmatprep.subr.mxu0 0.0
        %2894 = vmatpush2.msra.mxu0 0.0
        %2895 = vmatprep.subr.mxu0 0.0
        %2896 = vmatpush2.msra.mxu0 0.0
        %2897 = vmatprep.subr.mxu0 0.0
        %2898 = vmatpush2.msra.mxu0 0.0
        %2899 = vmatprep.subr.mxu0 0.0
        %2900 = vmatpush2.msra.mxu0 0.0
        %2901 = vmatprep.subr.mxu0 0.0
        %2902 = vmatpush2.msra.mxu0 0.0
        %2903 = vmatprep.subr.mxu0 0.0
        %2904 = vmatpush2.msra.mxu0 0.0
        %2905 = vmatprep.subr.mxu0 0.0
        %2906 = vmatpush2.msra.mxu0 0.0
        %2907 = vmatprep.subr.mxu0 0.0
        %2908 = vmatpush2.msra.mxu0 0.0
        %2909 = vmatprep.subr.mxu0 0.0
        %2910 = vmatpush2.msra.mxu0 0.0
        %2911 = vmatprep.subr.mxu0 0.0
        %2912 = vmatpush2.msra.mxu0 0.0
        %2913 = vmatprep.mubr.f32.mxu0 0.0
        %2914 = vmatmul.mubr.f32.gmra.mxu0 %v2751
        %v2915 = vpop.f32.mrf.mxu0
        %v2916 = vadd.f32 0.0, %v2915
        %v2917 = vpop.f32.mrf.mxu0
        %2918 = vmatprep.mubr.f32.mxu0 0.0
        %2919 = vmatmul.mubr.f32.gmra.mxu0 %v2754
        %v2920 = vpop.f32.mrf.mxu0
        %v2921 = vadd.f32 0.0, %v2920
        %v2922 = vpop.f32.mrf.mxu0
        %2923 = vmatprep.mubr.f32.mxu0 0.0
        %2924 = vmatmul.mubr.f32.gmra.mxu0 %v2757
        %v2925 = vpop.f32.mrf.mxu0
        %v2926 = vadd.f32 0.0, %v2925
        %v2927 = vpop.f32.mrf.mxu0
        %2928 = vmatprep.mubr.f32.mxu0 0.0
        %2929 = vmatmul.mubr.f32.gmra.mxu0 %v2760
        %v2930 = vpop.f32.mrf.mxu0
        %v2931 = vadd.f32 0.0, %v2930
        %v2932 = vpop.f32.mrf.mxu0
        %2933 = vmatprep.mubr.f32.mxu0 0.0
        %2934 = vmatmul.mubr.f32.gmra.mxu0 %v2763
        %v2935 = vpop.f32.mrf.mxu0
        %v2936 = vadd.f32 0.0, %v2935
        %v2937 = vpop.f32.mrf.mxu0
        %2938 = vmatprep.mubr.f32.mxu0 0.0
        %2939 = vmatmul.mubr.f32.gmra.mxu0 %v2766
        %v2940 = vpop.f32.mrf.mxu0
        %v2941 = vadd.f32 0.0, %v2940
        %v2942 = vpop.f32.mrf.mxu0
        %2943 = vmatprep.mubr.f32.mxu0 0.0
        %2944 = vmatmul.mubr.f32.gmra.mxu0 %v2769
        %v2945 = vpop.f32.mrf.mxu0
        %v2946 = vadd.f32 0.0, %v2945
        %v2947 = vpop.f32.mrf.mxu0
        %2948 = vmatprep.mubr.f32.mxu0 0.0
        %2949 = vmatmul.mubr.f32.gmra.mxu0 %v2772
        %v2950 = vpop.f32.mrf.mxu0
        %v2951 = vadd.f32 0.0, %v2950
        %v2952 = vpop.f32.mrf.mxu0
        %2953 = vmatprep.mubr.f32.mxu0 0.0
        %2954 = vmatmul.mubr.f32.gmra.mxu0 %v2775
        %v2955 = vpop.f32.mrf.mxu0
        %v2956 = vadd.f32 0.0, %v2955
        %v2957 = vpop.f32.mrf.mxu0
        %2958 = vmatprep.mubr.f32.mxu0 0.0
        %2959 = vmatmul.mubr.f32.gmra.mxu0 %v2778
        %v2960 = vpop.f32.mrf.mxu0
        %v2961 = vadd.f32 0.0, %v2960
        %v2962 = vpop.f32.mrf.mxu0
        %2963 = vmatprep.mubr.f32.mxu0 0.0
        %2964 = vmatmul.mubr.f32.gmra.mxu0 %v2781
        %v2965 = vpop.f32.mrf.mxu0
        %v2966 = vadd.f32 0.0, %v2965
        %v2967 = vpop.f32.mrf.mxu0
        %2968 = vmatprep.mubr.f32.mxu0 0.0
        %2969 = vmatmul.mubr.f32.gmra.mxu0 %v2784
        %v2970 = vpop.f32.mrf.mxu0
        %v2971 = vadd.f32 0.0, %v2970
        %v2972 = vpop.f32.mrf.mxu0
        %2973 = vmatprep.mubr.f32.mxu0 0.0
        %2974 = vmatmul.mubr.f32.gmra.mxu0 %v2787
        %v2975 = vpop.f32.mrf.mxu0
        %v2976 = vadd.f32 0.0, %v2975
        %v2977 = vpop.f32.mrf.mxu0
        %2978 = vmatprep.mubr.f32.mxu0 0.0
        %2979 = vmatmul.mubr.f32.gmra.mxu0 %v2790
        %v2980 = vpop.f32.mrf.mxu0
        %v2981 = vadd.f32 0.0, %v2980
        %v2982 = vpop.f32.mrf.mxu0
        %2983 = vmatprep.mubr.f32.mxu0 0.0
        %2984 = vmatmul.mubr.f32.gmra.mxu0 %v2793
        %v2985 = vpop.f32.mrf.mxu0
        %v2986 = vadd.f32 0.0, %v2985
        %v2987 = vpop.f32.mrf.mxu0
        %2988 = vmatprep.mubr.f32.mxu0 0.0
        %2989 = vmatmul.mubr.f32.gmra.mxu0 %v2796
        %v2990 = vpop.f32.mrf.mxu0
        %v2991 = vadd.f32 0.0, %v2990
        %v2992 = vpop.f32.mrf.mxu0
        %2993 = vmatprep.mubr.f32.mxu0 0.0
        %2994 = vmatmul.mubr.f32.gmra.mxu0 %v2799
        %v2995 = vpop.f32.mrf.mxu0
        %v2996 = vadd.f32 0.0, %v2995
        %v2997 = vpop.f32.mrf.mxu0
        %2998 = vmatprep.mubr.f32.mxu0 0.0
        %2999 = vmatmul.mubr.f32.gmra.mxu0 %v2802
        %v3000 = vpop.f32.mrf.mxu0
        %v3001 = vadd.f32 0.0, %v3000
        %v3002 = vpop.f32.mrf.mxu0
        %3003 = vmatprep.mubr.f32.mxu0 0.0
        %3004 = vmatmul.mubr.f32.gmra.mxu0 %v2805
        %v3005 = vpop.f32.mrf.mxu0
        %v3006 = vadd.f32 0.0, %v3005
        %v3007 = vpop.f32.mrf.mxu0
        %3008 = vmatprep.mubr.f32.mxu0 0.0
        %3009 = vmatmul.mubr.f32.gmra.mxu0 %v2808
        %v3010 = vpop.f32.mrf.mxu0
        %v3011 = vadd.f32 0.0, %v3010
        %v3012 = vpop.f32.mrf.mxu0
        %3013 = vmatprep.mubr.f32.mxu0 0.0
        %3014 = vmatmul.mubr.f32.gmra.mxu0 %v2811
        %v3015 = vpop.f32.mrf.mxu0
        %v3016 = vadd.f32 0.0, %v3015
        %v3017 = vpop.f32.mrf.mxu0
        %3018 = vmatprep.mubr.f32.mxu0 0.0
        %3019 = vmatmul.mubr.f32.gmra.mxu0 %v2814
        %v3020 = vpop.f32.mrf.mxu0
        %v3021 = vadd.f32 0.0, %v3020
        %v3022 = vpop.f32.mrf.mxu0
        %3023 = vmatprep.mubr.f32.mxu0 0.0
        %3024 = vmatmul.mubr.f32.gmra.mxu0 %v2817
        %v3025 = vpop.f32.mrf.mxu0
        %v3026 = vadd.f32 0.0, %v3025
        %v3027 = vpop.f32.mrf.mxu0
        %3028 = vmatprep.mubr.f32.mxu0 0.0
        %3029 = vmatmul.mubr.f32.gmra.mxu0 %v2820
        %v3030 = vpop.f32.mrf.mxu0
        %v3031 = vadd.f32 0.0, %v3030
        %v3032 = vpop.f32.mrf.mxu0
        %3033 = vmatprep.mubr.f32.mxu0 0.0
        %3034 = vmatmul.mubr.f32.gmra.mxu0 %v2823
        %v3035 = vpop.f32.mrf.mxu0
        %v3036 = vadd.f32 0.0, %v3035
        %v3037 = vpop.f32.mrf.mxu0
        %3038 = vmatprep.mubr.f32.mxu0 0.0
        %3039 = vmatmul.mubr.f32.gmra.mxu0 %v2826
        %v3040 = vpop.f32.mrf.mxu0
        %v3041 = vadd.f32 0.0, %v3040
        %v3042 = vpop.f32.mrf.mxu0
        %3043 = vmatprep.mubr.f32.mxu0 0.0
        %3044 = vmatmul.mubr.f32.gmra.mxu0 %v2829
        %v3045 = vpop.f32.mrf.mxu0
        %v3046 = vadd.f32 0.0, %v3045
        %v3047 = vpop.f32.mrf.mxu0
        %3048 = vmatprep.mubr.f32.mxu0 0.0
        %3049 = vmatmul.mubr.f32.gmra.mxu0 %v2832
        %v3050 = vpop.f32.mrf.mxu0
        %v3051 = vadd.f32 0.0, %v3050
        %v3052 = vpop.f32.mrf.mxu0
        %3053 = vmatprep.mubr.f32.mxu0 0.0
        %3054 = vmatmul.mubr.f32.gmra.mxu0 %v2835
        %v3055 = vpop.f32.mrf.mxu0
        %v3056 = vadd.f32 0.0, %v3055
        %v3057 = vpop.f32.mrf.mxu0
        %3058 = vmatprep.mubr.f32.mxu0 0.0
        %3059 = vmatmul.mubr.f32.gmra.mxu0 %v2838
        %v3060 = vpop.f32.mrf.mxu0
        %v3061 = vadd.f32 0.0, %v3060
        %v3062 = vpop.f32.mrf.mxu0
        %3063 = vmatprep.mubr.f32.mxu0 0.0
        %3064 = vmatmul.mubr.f32.gmra.mxu0 %v2841
        %v3065 = vpop.f32.mrf.mxu0
        %v3066 = vadd.f32 0.0, %v3065
        %v3067 = vpop.f32.mrf.mxu0
        %3068 = vmatprep.mubr.f32.mxu0 0.0
        %3069 = vmatmul.mubr.f32.gmra.mxu0 %v2844
        %v3070 = vpop.f32.mrf.mxu0
        %v3071 = vadd.f32 0.0, %v3070
        %v3072 = vpop.f32.mrf.mxu0
        %3073 = vdwg.mxu0
        %v3074 = vadd.f32 %v2683, %v2916
        %v3075 = vadd.f32 %v2684, %v2921
        %v3076 = vadd.f32 %v2685, %v2926
        %v3077 = vadd.f32 %v2686, %v2931
        %v3078 = vadd.f32 %v2687, %v2936
        %v3079 = vadd.f32 %v2688, %v2941
        %v3080 = vadd.f32 %v2689, %v2946
        %v3081 = vadd.f32 %v2690, %v2951
        %v3082 = vadd.f32 %v2691, %v2956
        %v3083 = vadd.f32 %v2692, %v2961
        %v3084 = vadd.f32 %v2693, %v2966
        %v3085 = vadd.f32 %v2694, %v2971
        %v3086 = vadd.f32 %v2695, %v2976
        %v3087 = vadd.f32 %v2696, %v2981
        %v3088 = vadd.f32 %v2697, %v2986
        %v3089 = vadd.f32 %v2698, %v2991
        %v3090 = vadd.f32 %v2699, %v2996
        %v3091 = vadd.f32 %v2700, %v3001
        %v3092 = vadd.f32 %v2701, %v3006
        %v3093 = vadd.f32 %v2702, %v3011
        %v3094 = vadd.f32 %v2703, %v3016
        %v3095 = vadd.f32 %v2704, %v3021
        %v3096 = vadd.f32 %v2705, %v3026
        %v3097 = vadd.f32 %v2706, %v3031
        %v3098 = vadd.f32 %v2707, %v3036
        %v3099 = vadd.f32 %v2708, %v3041
        %v3100 = vadd.f32 %v2709, %v3046
        %v3101 = vadd.f32 %v2710, %v3051
        %v3102 = vadd.f32 %v2711, %v3056
        %v3103 = vadd.f32 %v2712, %v3061
        %v3104 = vadd.f32 %v2713, %v3066
        %v3105 = vadd.f32 %v2714, %v3071
        %v3106 = vld [vmem:[%s2715 + $0x1] sm:$0xff]
        %v3107 = vld [vmem:[%s2715 + $0x9] sm:$0xff]
        %v3108 = vld [vmem:[%s2715 + $0x19] sm:$0xff]
        %v3109 = vld [vmem:[%s2715 + $0x21] sm:$0xff]
        %v3110 = vld [vmem:[%s2715 + $0x31] sm:$0xff]
        %v3111 = vld [vmem:[%s2715 + $0x39] sm:$0xff]
        %v3112 = vld [vmem:[%s2715 + $0x49] sm:$0xff]
        %v3113 = vld [vmem:[%s2715 + $0x51] sm:$0xff]
        %v3114 = vld [vmem:[%s2715 + $0x61] sm:$0xff]
        %v3115 = vld [vmem:[%s2715 + $0x69] sm:$0xff]
        %v3116 = vld [vmem:[%s2715 + $0x79] sm:$0xff]
        %v3117 = vld [vmem:[%s2715 + $0x81] sm:$0xff]
        %v3118 = vld [vmem:[%s2715 + $0x91] sm:$0xff]
        %v3119 = vld [vmem:[%s2715 + $0x99] sm:$0xff]
        %v3120 = vld [vmem:[%s2715 + $0xa9] sm:$0xff]
        %v3121 = vld [vmem:[%s2715 + $0xb1] sm:$0xff]
        %v3122 = vld [vmem:[%s2715 + $0xc1] sm:$0xff]
        %v3123 = vld [vmem:[%s2715 + $0xc9] sm:$0xff]
        %v3124 = vld [vmem:[%s2715 + $0xd9] sm:$0xff]
        %v3125 = vld [vmem:[%s2715 + $0xe1] sm:$0xff]
        %v3126 = vld [vmem:[%s2715 + $0xf1] sm:$0xff]
        %v3127 = vld [vmem:[%s2715 + $0xf9] sm:$0xff]
        %v3128 = vld [vmem:[%s2715 + $0x109] sm:$0xff]
        %v3129 = vld [vmem:[%s2715 + $0x111] sm:$0xff]
        %v3130 = vld [vmem:[%s2715 + $0x121] sm:$0xff]
        %v3131 = vld [vmem:[%s2715 + $0x129] sm:$0xff]
        %v3132 = vld [vmem:[%s2715 + $0x139] sm:$0xff]
        %v3133 = vld [vmem:[%s2715 + $0x141] sm:$0xff]
        %v3134 = vld [vmem:[%s2715 + $0x151] sm:$0xff]
        %v3135 = vld [vmem:[%s2715 + $0x159] sm:$0xff]
        %v3136 = vld [vmem:[%s2715 + $0x169] sm:$0xff]
        %v3137 = vld [vmem:[%s2715 + $0x171] sm:$0xff]
        %s3138 = scalar_lea.vmem %s2, 28
        %v3139 = vld [vmem:[%s3138] sm:$0xf]
        %v3141 = vsel %vm375, %v3106, 0
        %v3144 = vsel %vm375, %v3107, 0
        %v3147 = vsel %vm375, %v3108, 0
        %v3150 = vsel %vm375, %v3109, 0
        %v3153 = vsel %vm375, %v3110, 0
        %v3156 = vsel %vm375, %v3111, 0
        %v3159 = vsel %vm375, %v3112, 0
        %v3162 = vsel %vm375, %v3113, 0
        %v3165 = vsel %vm375, %v3114, 0
        %v3168 = vsel %vm375, %v3115, 0
        %v3171 = vsel %vm375, %v3116, 0
        %v3174 = vsel %vm375, %v3117, 0
        %v3177 = vsel %vm375, %v3118, 0
        %v3180 = vsel %vm375, %v3119, 0
        %v3183 = vsel %vm375, %v3120, 0
        %v3186 = vsel %vm375, %v3121, 0
        %v3189 = vsel %vm375, %v3122, 0
        %v3192 = vsel %vm375, %v3123, 0
        %v3195 = vsel %vm375, %v3124, 0
        %v3198 = vsel %vm375, %v3125, 0
        %v3201 = vsel %vm375, %v3126, 0
        %v3204 = vsel %vm375, %v3127, 0
        %v3207 = vsel %vm375, %v3128, 0
        %v3210 = vsel %vm375, %v3129, 0
        %v3213 = vsel %vm375, %v3130, 0
        %v3216 = vsel %vm375, %v3131, 0
        %v3219 = vsel %vm375, %v3132, 0
        %v3222 = vsel %vm375, %v3133, 0
        %v3225 = vsel %vm375, %v3134, 0
        %v3228 = vsel %vm375, %v3135, 0
        %v3231 = vsel %vm375, %v3136, 0
        %v3234 = vsel %vm375, %v3137, 0
        %v3237 = vsel %vm601, %v3139, 0
        %3239 = vmatprep.subr.mxu0 0.0
        %3240 = vmatpush1.msra.mxu0 0.0
        %3241 = vmatprep.subr.mxu0 0.0
        %3242 = vmatpush1.msra.mxu0 0.0
        %3243 = vmatprep.subr.mxu0 0.0
        %3244 = vmatpush1.msra.mxu0 0.0
        %3245 = vmatprep.subr.mxu0 0.0
        %3246 = vmatpush1.msra.mxu0 0.0
        %3247 = vmatprep.subr.mxu0 0.0
        %3248 = vmatpush1.msra.mxu0 0.0
        %3249 = vmatprep.subr.mxu0 0.0
        %3250 = vmatpush1.msra.mxu0 0.0
        %3251 = vmatprep.subr.mxu0 0.0
        %3252 = vmatpush1.msra.mxu0 0.0
        %3253 = vmatprep.subr.mxu0 0.0
        %3254 = vmatpush1.msra.mxu0 0.0
        %3255 = vmatprep.subr.mxu0 0.0
        %3256 = vmatpush1.msra.mxu0 0.0
        %3257 = vmatprep.subr.mxu0 0.0
        %3258 = vmatpush1.msra.mxu0 0.0
        %3259 = vmatprep.subr.mxu0 0.0
        %3260 = vmatpush1.msra.mxu0 0.0
        %3261 = vmatprep.subr.mxu0 0.0
        %3262 = vmatpush1.msra.mxu0 0.0
        %3263 = vmatprep.subr.mxu0 0.0
        %3264 = vmatpush1.msra.mxu0 0.0
        %3265 = vmatprep.subr.mxu0 0.0
        %3266 = vmatpush1.msra.mxu0 0.0
        %3267 = vmatprep.subr.mxu0 0.0
        %3268 = vmatpush1.msra.mxu0 0.0
        %3269 = vmatprep.subr.mxu0 0.0
        %3270 = vmatpush1.msra.mxu0 %v3237
        %3271 = vmatprep.subr.mxu0 0.0
        %3272 = vmatpush2.msra.mxu0 0.0
        %3273 = vmatprep.subr.mxu0 0.0
        %3274 = vmatpush2.msra.mxu0 0.0
        %3275 = vmatprep.subr.mxu0 0.0
        %3276 = vmatpush2.msra.mxu0 0.0
        %3277 = vmatprep.subr.mxu0 0.0
        %3278 = vmatpush2.msra.mxu0 0.0
        %3279 = vmatprep.subr.mxu0 0.0
        %3280 = vmatpush2.msra.mxu0 0.0
        %3281 = vmatprep.subr.mxu0 0.0
        %3282 = vmatpush2.msra.mxu0 0.0
        %3283 = vmatprep.subr.mxu0 0.0
        %3284 = vmatpush2.msra.mxu0 0.0
        %3285 = vmatprep.subr.mxu0 0.0
        %3286 = vmatpush2.msra.mxu0 0.0
        %3287 = vmatprep.subr.mxu0 0.0
        %3288 = vmatpush2.msra.mxu0 0.0
        %3289 = vmatprep.subr.mxu0 0.0
        %3290 = vmatpush2.msra.mxu0 0.0
        %3291 = vmatprep.subr.mxu0 0.0
        %3292 = vmatpush2.msra.mxu0 0.0
        %3293 = vmatprep.subr.mxu0 0.0
        %3294 = vmatpush2.msra.mxu0 0.0
        %3295 = vmatprep.subr.mxu0 0.0
        %3296 = vmatpush2.msra.mxu0 0.0
        %3297 = vmatprep.subr.mxu0 0.0
        %3298 = vmatpush2.msra.mxu0 0.0
        %3299 = vmatprep.subr.mxu0 0.0
        %3300 = vmatpush2.msra.mxu0 0.0
        %3301 = vmatprep.subr.mxu0 0.0
        %3302 = vmatpush2.msra.mxu0 0.0
        %3303 = vmatprep.mubr.f32.mxu0 0.0
        %3304 = vmatmul.mubr.f32.gmra.mxu0 %v3141
        %v3305 = vpop.f32.mrf.mxu0
        %v3306 = vadd.f32 0.0, %v3305
        %v3307 = vpop.f32.mrf.mxu0
        %3308 = vmatprep.mubr.f32.mxu0 0.0
        %3309 = vmatmul.mubr.f32.gmra.mxu0 %v3144
        %v3310 = vpop.f32.mrf.mxu0
        %v3311 = vadd.f32 0.0, %v3310
        %v3312 = vpop.f32.mrf.mxu0
        %3313 = vmatprep.mubr.f32.mxu0 0.0
        %3314 = vmatmul.mubr.f32.gmra.mxu0 %v3147
        %v3315 = vpop.f32.mrf.mxu0
        %v3316 = vadd.f32 0.0, %v3315
        %v3317 = vpop.f32.mrf.mxu0
        %3318 = vmatprep.mubr.f32.mxu0 0.0
        %3319 = vmatmul.mubr.f32.gmra.mxu0 %v3150
        %v3320 = vpop.f32.mrf.mxu0
        %v3321 = vadd.f32 0.0, %v3320
        %v3322 = vpop.f32.mrf.mxu0
        %3323 = vmatprep.mubr.f32.mxu0 0.0
        %3324 = vmatmul.mubr.f32.gmra.mxu0 %v3153
        %v3325 = vpop.f32.mrf.mxu0
        %v3326 = vadd.f32 0.0, %v3325
        %v3327 = vpop.f32.mrf.mxu0
        %3328 = vmatprep.mubr.f32.mxu0 0.0
        %3329 = vmatmul.mubr.f32.gmra.mxu0 %v3156
        %v3330 = vpop.f32.mrf.mxu0
        %v3331 = vadd.f32 0.0, %v3330
        %v3332 = vpop.f32.mrf.mxu0
        %3333 = vmatprep.mubr.f32.mxu0 0.0
        %3334 = vmatmul.mubr.f32.gmra.mxu0 %v3159
        %v3335 = vpop.f32.mrf.mxu0
        %v3336 = vadd.f32 0.0, %v3335
        %v3337 = vpop.f32.mrf.mxu0
        %3338 = vmatprep.mubr.f32.mxu0 0.0
        %3339 = vmatmul.mubr.f32.gmra.mxu0 %v3162
        %v3340 = vpop.f32.mrf.mxu0
        %v3341 = vadd.f32 0.0, %v3340
        %v3342 = vpop.f32.mrf.mxu0
        %3343 = vmatprep.mubr.f32.mxu0 0.0
        %3344 = vmatmul.mubr.f32.gmra.mxu0 %v3165
        %v3345 = vpop.f32.mrf.mxu0
        %v3346 = vadd.f32 0.0, %v3345
        %v3347 = vpop.f32.mrf.mxu0
        %3348 = vmatprep.mubr.f32.mxu0 0.0
        %3349 = vmatmul.mubr.f32.gmra.mxu0 %v3168
        %v3350 = vpop.f32.mrf.mxu0
        %v3351 = vadd.f32 0.0, %v3350
        %v3352 = vpop.f32.mrf.mxu0
        %3353 = vmatprep.mubr.f32.mxu0 0.0
        %3354 = vmatmul.mubr.f32.gmra.mxu0 %v3171
        %v3355 = vpop.f32.mrf.mxu0
        %v3356 = vadd.f32 0.0, %v3355
        %v3357 = vpop.f32.mrf.mxu0
        %3358 = vmatprep.mubr.f32.mxu0 0.0
        %3359 = vmatmul.mubr.f32.gmra.mxu0 %v3174
        %v3360 = vpop.f32.mrf.mxu0
        %v3361 = vadd.f32 0.0, %v3360
        %v3362 = vpop.f32.mrf.mxu0
        %3363 = vmatprep.mubr.f32.mxu0 0.0
        %3364 = vmatmul.mubr.f32.gmra.mxu0 %v3177
        %v3365 = vpop.f32.mrf.mxu0
        %v3366 = vadd.f32 0.0, %v3365
        %v3367 = vpop.f32.mrf.mxu0
        %3368 = vmatprep.mubr.f32.mxu0 0.0
        %3369 = vmatmul.mubr.f32.gmra.mxu0 %v3180
        %v3370 = vpop.f32.mrf.mxu0
        %v3371 = vadd.f32 0.0, %v3370
        %v3372 = vpop.f32.mrf.mxu0
        %3373 = vmatprep.mubr.f32.mxu0 0.0
        %3374 = vmatmul.mubr.f32.gmra.mxu0 %v3183
        %v3375 = vpop.f32.mrf.mxu0
        %v3376 = vadd.f32 0.0, %v3375
        %v3377 = vpop.f32.mrf.mxu0
        %3378 = vmatprep.mubr.f32.mxu0 0.0
        %3379 = vmatmul.mubr.f32.gmra.mxu0 %v3186
        %v3380 = vpop.f32.mrf.mxu0
        %v3381 = vadd.f32 0.0, %v3380
        %v3382 = vpop.f32.mrf.mxu0
        %3383 = vmatprep.mubr.f32.mxu0 0.0
        %3384 = vmatmul.mubr.f32.gmra.mxu0 %v3189
        %v3385 = vpop.f32.mrf.mxu0
        %v3386 = vadd.f32 0.0, %v3385
        %v3387 = vpop.f32.mrf.mxu0
        %3388 = vmatprep.mubr.f32.mxu0 0.0
        %3389 = vmatmul.mubr.f32.gmra.mxu0 %v3192
        %v3390 = vpop.f32.mrf.mxu0
        %v3391 = vadd.f32 0.0, %v3390
        %v3392 = vpop.f32.mrf.mxu0
        %3393 = vmatprep.mubr.f32.mxu0 0.0
        %3394 = vmatmul.mubr.f32.gmra.mxu0 %v3195
        %v3395 = vpop.f32.mrf.mxu0
        %v3396 = vadd.f32 0.0, %v3395
        %v3397 = vpop.f32.mrf.mxu0
        %3398 = vmatprep.mubr.f32.mxu0 0.0
        %3399 = vmatmul.mubr.f32.gmra.mxu0 %v3198
        %v3400 = vpop.f32.mrf.mxu0
        %v3401 = vadd.f32 0.0, %v3400
        %v3402 = vpop.f32.mrf.mxu0
        %3403 = vmatprep.mubr.f32.mxu0 0.0
        %3404 = vmatmul.mubr.f32.gmra.mxu0 %v3201
        %v3405 = vpop.f32.mrf.mxu0
        %v3406 = vadd.f32 0.0, %v3405
        %v3407 = vpop.f32.mrf.mxu0
        %3408 = vmatprep.mubr.f32.mxu0 0.0
        %3409 = vmatmul.mubr.f32.gmra.mxu0 %v3204
        %v3410 = vpop.f32.mrf.mxu0
        %v3411 = vadd.f32 0.0, %v3410
        %v3412 = vpop.f32.mrf.mxu0
        %3413 = vmatprep.mubr.f32.mxu0 0.0
        %3414 = vmatmul.mubr.f32.gmra.mxu0 %v3207
        %v3415 = vpop.f32.mrf.mxu0
        %v3416 = vadd.f32 0.0, %v3415
        %v3417 = vpop.f32.mrf.mxu0
        %3418 = vmatprep.mubr.f32.mxu0 0.0
        %3419 = vmatmul.mubr.f32.gmra.mxu0 %v3210
        %v3420 = vpop.f32.mrf.mxu0
        %v3421 = vadd.f32 0.0, %v3420
        %v3422 = vpop.f32.mrf.mxu0
        %3423 = vmatprep.mubr.f32.mxu0 0.0
        %3424 = vmatmul.mubr.f32.gmra.mxu0 %v3213
        %v3425 = vpop.f32.mrf.mxu0
        %v3426 = vadd.f32 0.0, %v3425
        %v3427 = vpop.f32.mrf.mxu0
        %3428 = vmatprep.mubr.f32.mxu0 0.0
        %3429 = vmatmul.mubr.f32.gmra.mxu0 %v3216
        %v3430 = vpop.f32.mrf.mxu0
        %v3431 = vadd.f32 0.0, %v3430
        %v3432 = vpop.f32.mrf.mxu0
        %3433 = vmatprep.mubr.f32.mxu0 0.0
        %3434 = vmatmul.mubr.f32.gmra.mxu0 %v3219
        %v3435 = vpop.f32.mrf.mxu0
        %v3436 = vadd.f32 0.0, %v3435
        %v3437 = vpop.f32.mrf.mxu0
        %3438 = vmatprep.mubr.f32.mxu0 0.0
        %3439 = vmatmul.mubr.f32.gmra.mxu0 %v3222
        %v3440 = vpop.f32.mrf.mxu0
        %v3441 = vadd.f32 0.0, %v3440
        %v3442 = vpop.f32.mrf.mxu0
        %3443 = vmatprep.mubr.f32.mxu0 0.0
        %3444 = vmatmul.mubr.f32.gmra.mxu0 %v3225
        %v3445 = vpop.f32.mrf.mxu0
        %v3446 = vadd.f32 0.0, %v3445
        %v3447 = vpop.f32.mrf.mxu0
        %3448 = vmatprep.mubr.f32.mxu0 0.0
        %3449 = vmatmul.mubr.f32.gmra.mxu0 %v3228
        %v3450 = vpop.f32.mrf.mxu0
        %v3451 = vadd.f32 0.0, %v3450
        %v3452 = vpop.f32.mrf.mxu0
        %3453 = vmatprep.mubr.f32.mxu0 0.0
        %3454 = vmatmul.mubr.f32.gmra.mxu0 %v3231
        %v3455 = vpop.f32.mrf.mxu0
        %v3456 = vadd.f32 0.0, %v3455
        %v3457 = vpop.f32.mrf.mxu0
        %3458 = vmatprep.mubr.f32.mxu0 0.0
        %3459 = vmatmul.mubr.f32.gmra.mxu0 %v3234
        %v3460 = vpop.f32.mrf.mxu0
        %v3461 = vadd.f32 0.0, %v3460
        %v3462 = vpop.f32.mrf.mxu0
        %3463 = vdwg.mxu0
        %v3464 = vadd.f32 %v3074, %v3306
        %v3465 = vadd.f32 %v3075, %v3311
        %v3466 = vadd.f32 %v3076, %v3316
        %v3467 = vadd.f32 %v3077, %v3321
        %v3468 = vadd.f32 %v3078, %v3326
        %v3469 = vadd.f32 %v3079, %v3331
        %v3470 = vadd.f32 %v3080, %v3336
        %v3471 = vadd.f32 %v3081, %v3341
        %v3472 = vadd.f32 %v3082, %v3346
        %v3473 = vadd.f32 %v3083, %v3351
        %v3474 = vadd.f32 %v3084, %v3356
        %v3475 = vadd.f32 %v3085, %v3361
        %v3476 = vadd.f32 %v3086, %v3366
        %v3477 = vadd.f32 %v3087, %v3371
        %v3478 = vadd.f32 %v3088, %v3376
        %v3479 = vadd.f32 %v3089, %v3381
        %v3480 = vadd.f32 %v3090, %v3386
        %v3481 = vadd.f32 %v3091, %v3391
        %v3482 = vadd.f32 %v3092, %v3396
        %v3483 = vadd.f32 %v3093, %v3401
        %v3484 = vadd.f32 %v3094, %v3406
        %v3485 = vadd.f32 %v3095, %v3411
        %v3486 = vadd.f32 %v3096, %v3416
        %v3487 = vadd.f32 %v3097, %v3421
        %v3488 = vadd.f32 %v3098, %v3426
        %v3489 = vadd.f32 %v3099, %v3431
        %v3490 = vadd.f32 %v3100, %v3436
        %v3491 = vadd.f32 %v3101, %v3441
        %v3492 = vadd.f32 %v3102, %v3446
        %v3493 = vadd.f32 %v3103, %v3451
        %v3494 = vadd.f32 %v3104, %v3456
        %v3495 = vadd.f32 %v3105, %v3461
        %v3496 = vld [vmem:[%s2715 + $0x2] sm:$0xff]
        %v3497 = vld [vmem:[%s2715 + $0xa] sm:$0xff]
        %v3498 = vld [vmem:[%s2715 + $0x1a] sm:$0xff]
        %v3499 = vld [vmem:[%s2715 + $0x22] sm:$0xff]
        %v3500 = vld [vmem:[%s2715 + $0x32] sm:$0xff]
        %v3501 = vld [vmem:[%s2715 + $0x3a] sm:$0xff]
        %v3502 = vld [vmem:[%s2715 + $0x4a] sm:$0xff]
        %v3503 = vld [vmem:[%s2715 + $0x52] sm:$0xff]
        %v3504 = vld [vmem:[%s2715 + $0x62] sm:$0xff]
        %v3505 = vld [vmem:[%s2715 + $0x6a] sm:$0xff]
        %v3506 = vld [vmem:[%s2715 + $0x7a] sm:$0xff]
        %v3507 = vld [vmem:[%s2715 + $0x82] sm:$0xff]
        %v3508 = vld [vmem:[%s2715 + $0x92] sm:$0xff]
        %v3509 = vld [vmem:[%s2715 + $0x9a] sm:$0xff]
        %v3510 = vld [vmem:[%s2715 + $0xaa] sm:$0xff]
        %v3511 = vld [vmem:[%s2715 + $0xb2] sm:$0xff]
        %v3512 = vld [vmem:[%s2715 + $0xc2] sm:$0xff]
        %v3513 = vld [vmem:[%s2715 + $0xca] sm:$0xff]
        %v3514 = vld [vmem:[%s2715 + $0xda] sm:$0xff]
        %v3515 = vld [vmem:[%s2715 + $0xe2] sm:$0xff]
        %v3516 = vld [vmem:[%s2715 + $0xf2] sm:$0xff]
        %v3517 = vld [vmem:[%s2715 + $0xfa] sm:$0xff]
        %v3518 = vld [vmem:[%s2715 + $0x10a] sm:$0xff]
        %v3519 = vld [vmem:[%s2715 + $0x112] sm:$0xff]
        %v3520 = vld [vmem:[%s2715 + $0x122] sm:$0xff]
        %v3521 = vld [vmem:[%s2715 + $0x12a] sm:$0xff]
        %v3522 = vld [vmem:[%s2715 + $0x13a] sm:$0xff]
        %v3523 = vld [vmem:[%s2715 + $0x142] sm:$0xff]
        %v3524 = vld [vmem:[%s2715 + $0x152] sm:$0xff]
        %v3525 = vld [vmem:[%s2715 + $0x15a] sm:$0xff]
        %v3526 = vld [vmem:[%s2715 + $0x16a] sm:$0xff]
        %v3527 = vld [vmem:[%s2715 + $0x172] sm:$0xff]
        %s3528 = scalar_lea.vmem %s2, 32
        %v3529 = vld [vmem:[%s3528] sm:$0xf]
        %v3531 = vsel %vm375, %v3496, 0
        %v3534 = vsel %vm375, %v3497, 0
        %v3537 = vsel %vm375, %v3498, 0
        %v3540 = vsel %vm375, %v3499, 0
        %v3543 = vsel %vm375, %v3500, 0
        %v3546 = vsel %vm375, %v3501, 0
        %v3549 = vsel %vm375, %v3502, 0
        %v3552 = vsel %vm375, %v3503, 0
        %v3555 = vsel %vm375, %v3504, 0
        %v3558 = vsel %vm375, %v3505, 0
        %v3561 = vsel %vm375, %v3506, 0
        %v3564 = vsel %vm375, %v3507, 0
        %v3567 = vsel %vm375, %v3508, 0
        %v3570 = vsel %vm375, %v3509, 0
        %v3573 = vsel %vm375, %v3510, 0
        %v3576 = vsel %vm375, %v3511, 0
        %v3579 = vsel %vm375, %v3512, 0
        %v3582 = vsel %vm375, %v3513, 0
        %v3585 = vsel %vm375, %v3514, 0
        %v3588 = vsel %vm375, %v3515, 0
        %v3591 = vsel %vm375, %v3516, 0
        %v3594 = vsel %vm375, %v3517, 0
        %v3597 = vsel %vm375, %v3518, 0
        %v3600 = vsel %vm375, %v3519, 0
        %v3603 = vsel %vm375, %v3520, 0
        %v3606 = vsel %vm375, %v3521, 0
        %v3609 = vsel %vm375, %v3522, 0
        %v3612 = vsel %vm375, %v3523, 0
        %v3615 = vsel %vm375, %v3524, 0
        %v3618 = vsel %vm375, %v3525, 0
        %v3621 = vsel %vm375, %v3526, 0
        %v3624 = vsel %vm375, %v3527, 0
        %v3627 = vsel %vm601, %v3529, 0
        %3629 = vmatprep.subr.mxu0 0.0
        %3630 = vmatpush1.msra.mxu0 0.0
        %3631 = vmatprep.subr.mxu0 0.0
        %3632 = vmatpush1.msra.mxu0 0.0
        %3633 = vmatprep.subr.mxu0 0.0
        %3634 = vmatpush1.msra.mxu0 0.0
        %3635 = vmatprep.subr.mxu0 0.0
        %3636 = vmatpush1.msra.mxu0 0.0
        %3637 = vmatprep.subr.mxu0 0.0
        %3638 = vmatpush1.msra.mxu0 0.0
        %3639 = vmatprep.subr.mxu0 0.0
        %3640 = vmatpush1.msra.mxu0 0.0
        %3641 = vmatprep.subr.mxu0 0.0
        %3642 = vmatpush1.msra.mxu0 0.0
        %3643 = vmatprep.subr.mxu0 0.0
        %3644 = vmatpush1.msra.mxu0 0.0
        %3645 = vmatprep.subr.mxu0 0.0
        %3646 = vmatpush1.msra.mxu0 0.0
        %3647 = vmatprep.subr.mxu0 0.0
        %3648 = vmatpush1.msra.mxu0 0.0
        %3649 = vmatprep.subr.mxu0 0.0
        %3650 = vmatpush1.msra.mxu0 0.0
        %3651 = vmatprep.subr.mxu0 0.0
        %3652 = vmatpush1.msra.mxu0 0.0
        %3653 = vmatprep.subr.mxu0 0.0
        %3654 = vmatpush1.msra.mxu0 0.0
        %3655 = vmatprep.subr.mxu0 0.0
        %3656 = vmatpush1.msra.mxu0 0.0
        %3657 = vmatprep.subr.mxu0 0.0
        %3658 = vmatpush1.msra.mxu0 0.0
        %3659 = vmatprep.subr.mxu0 0.0
        %3660 = vmatpush1.msra.mxu0 %v3627
        %3661 = vmatprep.subr.mxu0 0.0
        %3662 = vmatpush2.msra.mxu0 0.0
        %3663 = vmatprep.subr.mxu0 0.0
        %3664 = vmatpush2.msra.mxu0 0.0
        %3665 = vmatprep.subr.mxu0 0.0
        %3666 = vmatpush2.msra.mxu0 0.0
        %3667 = vmatprep.subr.mxu0 0.0
        %3668 = vmatpush2.msra.mxu0 0.0
        %3669 = vmatprep.subr.mxu0 0.0
        %3670 = vmatpush2.msra.mxu0 0.0
        %3671 = vmatprep.subr.mxu0 0.0
        %3672 = vmatpush2.msra.mxu0 0.0
        %3673 = vmatprep.subr.mxu0 0.0
        %3674 = vmatpush2.msra.mxu0 0.0
        %3675 = vmatprep.subr.mxu0 0.0
        %3676 = vmatpush2.msra.mxu0 0.0
        %3677 = vmatprep.subr.mxu0 0.0
        %3678 = vmatpush2.msra.mxu0 0.0
        %3679 = vmatprep.subr.mxu0 0.0
        %3680 = vmatpush2.msra.mxu0 0.0
        %3681 = vmatprep.subr.mxu0 0.0
        %3682 = vmatpush2.msra.mxu0 0.0
        %3683 = vmatprep.subr.mxu0 0.0
        %3684 = vmatpush2.msra.mxu0 0.0
        %3685 = vmatprep.subr.mxu0 0.0
        %3686 = vmatpush2.msra.mxu0 0.0
        %3687 = vmatprep.subr.mxu0 0.0
        %3688 = vmatpush2.msra.mxu0 0.0
        %3689 = vmatprep.subr.mxu0 0.0
        %3690 = vmatpush2.msra.mxu0 0.0
        %3691 = vmatprep.subr.mxu0 0.0
        %3692 = vmatpush2.msra.mxu0 0.0
        %3693 = vmatprep.mubr.f32.mxu0 0.0
        %3694 = vmatmul.mubr.f32.gmra.mxu0 %v3531
        %v3695 = vpop.f32.mrf.mxu0
        %v3696 = vadd.f32 0.0, %v3695
        %v3697 = vpop.f32.mrf.mxu0
        %3698 = vmatprep.mubr.f32.mxu0 0.0
        %3699 = vmatmul.mubr.f32.gmra.mxu0 %v3534
        %v3700 = vpop.f32.mrf.mxu0
        %v3701 = vadd.f32 0.0, %v3700
        %v3702 = vpop.f32.mrf.mxu0
        %3703 = vmatprep.mubr.f32.mxu0 0.0
        %3704 = vmatmul.mubr.f32.gmra.mxu0 %v3537
        %v3705 = vpop.f32.mrf.mxu0
        %v3706 = vadd.f32 0.0, %v3705
        %v3707 = vpop.f32.mrf.mxu0
        %3708 = vmatprep.mubr.f32.mxu0 0.0
        %3709 = vmatmul.mubr.f32.gmra.mxu0 %v3540
        %v3710 = vpop.f32.mrf.mxu0
        %v3711 = vadd.f32 0.0, %v3710
        %v3712 = vpop.f32.mrf.mxu0
        %3713 = vmatprep.mubr.f32.mxu0 0.0
        %3714 = vmatmul.mubr.f32.gmra.mxu0 %v3543
        %v3715 = vpop.f32.mrf.mxu0
        %v3716 = vadd.f32 0.0, %v3715
        %v3717 = vpop.f32.mrf.mxu0
        %3718 = vmatprep.mubr.f32.mxu0 0.0
        %3719 = vmatmul.mubr.f32.gmra.mxu0 %v3546
        %v3720 = vpop.f32.mrf.mxu0
        %v3721 = vadd.f32 0.0, %v3720
        %v3722 = vpop.f32.mrf.mxu0
        %3723 = vmatprep.mubr.f32.mxu0 0.0
        %3724 = vmatmul.mubr.f32.gmra.mxu0 %v3549
        %v3725 = vpop.f32.mrf.mxu0
        %v3726 = vadd.f32 0.0, %v3725
        %v3727 = vpop.f32.mrf.mxu0
        %3728 = vmatprep.mubr.f32.mxu0 0.0
        %3729 = vmatmul.mubr.f32.gmra.mxu0 %v3552
        %v3730 = vpop.f32.mrf.mxu0
        %v3731 = vadd.f32 0.0, %v3730
        %v3732 = vpop.f32.mrf.mxu0
        %3733 = vmatprep.mubr.f32.mxu0 0.0
        %3734 = vmatmul.mubr.f32.gmra.mxu0 %v3555
        %v3735 = vpop.f32.mrf.mxu0
        %v3736 = vadd.f32 0.0, %v3735
        %v3737 = vpop.f32.mrf.mxu0
        %3738 = vmatprep.mubr.f32.mxu0 0.0
        %3739 = vmatmul.mubr.f32.gmra.mxu0 %v3558
        %v3740 = vpop.f32.mrf.mxu0
        %v3741 = vadd.f32 0.0, %v3740
        %v3742 = vpop.f32.mrf.mxu0
        %3743 = vmatprep.mubr.f32.mxu0 0.0
        %3744 = vmatmul.mubr.f32.gmra.mxu0 %v3561
        %v3745 = vpop.f32.mrf.mxu0
        %v3746 = vadd.f32 0.0, %v3745
        %v3747 = vpop.f32.mrf.mxu0
        %3748 = vmatprep.mubr.f32.mxu0 0.0
        %3749 = vmatmul.mubr.f32.gmra.mxu0 %v3564
        %v3750 = vpop.f32.mrf.mxu0
        %v3751 = vadd.f32 0.0, %v3750
        %v3752 = vpop.f32.mrf.mxu0
        %3753 = vmatprep.mubr.f32.mxu0 0.0
        %3754 = vmatmul.mubr.f32.gmra.mxu0 %v3567
        %v3755 = vpop.f32.mrf.mxu0
        %v3756 = vadd.f32 0.0, %v3755
        %v3757 = vpop.f32.mrf.mxu0
        %3758 = vmatprep.mubr.f32.mxu0 0.0
        %3759 = vmatmul.mubr.f32.gmra.mxu0 %v3570
        %v3760 = vpop.f32.mrf.mxu0
        %v3761 = vadd.f32 0.0, %v3760
        %v3762 = vpop.f32.mrf.mxu0
        %3763 = vmatprep.mubr.f32.mxu0 0.0
        %3764 = vmatmul.mubr.f32.gmra.mxu0 %v3573
        %v3765 = vpop.f32.mrf.mxu0
        %v3766 = vadd.f32 0.0, %v3765
        %v3767 = vpop.f32.mrf.mxu0
        %3768 = vmatprep.mubr.f32.mxu0 0.0
        %3769 = vmatmul.mubr.f32.gmra.mxu0 %v3576
        %v3770 = vpop.f32.mrf.mxu0
        %v3771 = vadd.f32 0.0, %v3770
        %v3772 = vpop.f32.mrf.mxu0
        %3773 = vmatprep.mubr.f32.mxu0 0.0
        %3774 = vmatmul.mubr.f32.gmra.mxu0 %v3579
        %v3775 = vpop.f32.mrf.mxu0
        %v3776 = vadd.f32 0.0, %v3775
        %v3777 = vpop.f32.mrf.mxu0
        %3778 = vmatprep.mubr.f32.mxu0 0.0
        %3779 = vmatmul.mubr.f32.gmra.mxu0 %v3582
        %v3780 = vpop.f32.mrf.mxu0
        %v3781 = vadd.f32 0.0, %v3780
        %v3782 = vpop.f32.mrf.mxu0
        %3783 = vmatprep.mubr.f32.mxu0 0.0
        %3784 = vmatmul.mubr.f32.gmra.mxu0 %v3585
        %v3785 = vpop.f32.mrf.mxu0
        %v3786 = vadd.f32 0.0, %v3785
        %v3787 = vpop.f32.mrf.mxu0
        %3788 = vmatprep.mubr.f32.mxu0 0.0
        %3789 = vmatmul.mubr.f32.gmra.mxu0 %v3588
        %v3790 = vpop.f32.mrf.mxu0
        %v3791 = vadd.f32 0.0, %v3790
        %v3792 = vpop.f32.mrf.mxu0
        %3793 = vmatprep.mubr.f32.mxu0 0.0
        %3794 = vmatmul.mubr.f32.gmra.mxu0 %v3591
        %v3795 = vpop.f32.mrf.mxu0
        %v3796 = vadd.f32 0.0, %v3795
        %v3797 = vpop.f32.mrf.mxu0
        %3798 = vmatprep.mubr.f32.mxu0 0.0
        %3799 = vmatmul.mubr.f32.gmra.mxu0 %v3594
        %v3800 = vpop.f32.mrf.mxu0
        %v3801 = vadd.f32 0.0, %v3800
        %v3802 = vpop.f32.mrf.mxu0
        %3803 = vmatprep.mubr.f32.mxu0 0.0
        %3804 = vmatmul.mubr.f32.gmra.mxu0 %v3597
        %v3805 = vpop.f32.mrf.mxu0
        %v3806 = vadd.f32 0.0, %v3805
        %v3807 = vpop.f32.mrf.mxu0
        %3808 = vmatprep.mubr.f32.mxu0 0.0
        %3809 = vmatmul.mubr.f32.gmra.mxu0 %v3600
        %v3810 = vpop.f32.mrf.mxu0
        %v3811 = vadd.f32 0.0, %v3810
        %v3812 = vpop.f32.mrf.mxu0
        %3813 = vmatprep.mubr.f32.mxu0 0.0
        %3814 = vmatmul.mubr.f32.gmra.mxu0 %v3603
        %v3815 = vpop.f32.mrf.mxu0
        %v3816 = vadd.f32 0.0, %v3815
        %v3817 = vpop.f32.mrf.mxu0
        %3818 = vmatprep.mubr.f32.mxu0 0.0
        %3819 = vmatmul.mubr.f32.gmra.mxu0 %v3606
        %v3820 = vpop.f32.mrf.mxu0
        %v3821 = vadd.f32 0.0, %v3820
        %v3822 = vpop.f32.mrf.mxu0
        %3823 = vmatprep.mubr.f32.mxu0 0.0
        %3824 = vmatmul.mubr.f32.gmra.mxu0 %v3609
        %v3825 = vpop.f32.mrf.mxu0
        %v3826 = vadd.f32 0.0, %v3825
        %v3827 = vpop.f32.mrf.mxu0
        %3828 = vmatprep.mubr.f32.mxu0 0.0
        %3829 = vmatmul.mubr.f32.gmra.mxu0 %v3612
        %v3830 = vpop.f32.mrf.mxu0
        %v3831 = vadd.f32 0.0, %v3830
        %v3832 = vpop.f32.mrf.mxu0
        %3833 = vmatprep.mubr.f32.mxu0 0.0
        %3834 = vmatmul.mubr.f32.gmra.mxu0 %v3615
        %v3835 = vpop.f32.mrf.mxu0
        %v3836 = vadd.f32 0.0, %v3835
        %v3837 = vpop.f32.mrf.mxu0
        %3838 = vmatprep.mubr.f32.mxu0 0.0
        %3839 = vmatmul.mubr.f32.gmra.mxu0 %v3618
        %v3840 = vpop.f32.mrf.mxu0
        %v3841 = vadd.f32 0.0, %v3840
        %v3842 = vpop.f32.mrf.mxu0
        %3843 = vmatprep.mubr.f32.mxu0 0.0
        %3844 = vmatmul.mubr.f32.gmra.mxu0 %v3621
        %v3845 = vpop.f32.mrf.mxu0
        %v3846 = vadd.f32 0.0, %v3845
        %v3847 = vpop.f32.mrf.mxu0
        %3848 = vmatprep.mubr.f32.mxu0 0.0
        %3849 = vmatmul.mubr.f32.gmra.mxu0 %v3624
        %v3850 = vpop.f32.mrf.mxu0
        %v3851 = vadd.f32 0.0, %v3850
        %v3852 = vpop.f32.mrf.mxu0
        %3853 = vdwg.mxu0
        %v3854 = vadd.f32 %v3464, %v3696
        %v3855 = vadd.f32 %v3465, %v3701
        %v3856 = vadd.f32 %v3466, %v3706
        %v3857 = vadd.f32 %v3467, %v3711
        %v3858 = vadd.f32 %v3468, %v3716
        %v3859 = vadd.f32 %v3469, %v3721
        %v3860 = vadd.f32 %v3470, %v3726
        %v3861 = vadd.f32 %v3471, %v3731
        %v3862 = vadd.f32 %v3472, %v3736
        %v3863 = vadd.f32 %v3473, %v3741
        %v3864 = vadd.f32 %v3474, %v3746
        %v3865 = vadd.f32 %v3475, %v3751
        %v3866 = vadd.f32 %v3476, %v3756
        %v3867 = vadd.f32 %v3477, %v3761
        %v3868 = vadd.f32 %v3478, %v3766
        %v3869 = vadd.f32 %v3479, %v3771
        %v3870 = vadd.f32 %v3480, %v3776
        %v3871 = vadd.f32 %v3481, %v3781
        %v3872 = vadd.f32 %v3482, %v3786
        %v3873 = vadd.f32 %v3483, %v3791
        %v3874 = vadd.f32 %v3484, %v3796
        %v3875 = vadd.f32 %v3485, %v3801
        %v3876 = vadd.f32 %v3486, %v3806
        %v3877 = vadd.f32 %v3487, %v3811
        %v3878 = vadd.f32 %v3488, %v3816
        %v3879 = vadd.f32 %v3489, %v3821
        %v3880 = vadd.f32 %v3490, %v3826
        %v3881 = vadd.f32 %v3491, %v3831
        %v3882 = vadd.f32 %v3492, %v3836
        %v3883 = vadd.f32 %v3493, %v3841
        %v3884 = vadd.f32 %v3494, %v3846
        %v3885 = vadd.f32 %v3495, %v3851
        %vm3886 = vcmask 64512
        %3887 = vst.msk [vmem:[%s323] sm:$0xff] %vm3886, %v3854
        %3888 = vst.msk [vmem:[%s323 + $0x8] sm:$0xff] %vm3886, %v3855
        %3889 = vst.msk [vmem:[%s323 + $0x10] sm:$0xff] %vm3886, %v3856
        %3890 = vst.msk [vmem:[%s323 + $0x18] sm:$0xff] %vm3886, %v3857
        %3891 = vst.msk [vmem:[%s323 + $0x20] sm:$0xff] %vm3886, %v3858
        %3892 = vst.msk [vmem:[%s323 + $0x28] sm:$0xff] %vm3886, %v3859
        %3893 = vst.msk [vmem:[%s323 + $0x30] sm:$0xff] %vm3886, %v3860
        %3894 = vst.msk [vmem:[%s323 + $0x38] sm:$0xff] %vm3886, %v3861
        %3895 = vst.msk [vmem:[%s323 + $0x40] sm:$0xff] %vm3886, %v3862
        %3896 = vst.msk [vmem:[%s323 + $0x48] sm:$0xff] %vm3886, %v3863
        %3897 = vst.msk [vmem:[%s323 + $0x50] sm:$0xff] %vm3886, %v3864
        %3898 = vst.msk [vmem:[%s323 + $0x58] sm:$0xff] %vm3886, %v3865
        %3899 = vst.msk [vmem:[%s323 + $0x60] sm:$0xff] %vm3886, %v3866
        %3900 = vst.msk [vmem:[%s323 + $0x68] sm:$0xff] %vm3886, %v3867
        %3901 = vst.msk [vmem:[%s323 + $0x70] sm:$0xff] %vm3886, %v3868
        %3902 = vst.msk [vmem:[%s323 + $0x78] sm:$0xff] %vm3886, %v3869
        %3903 = vst.msk [vmem:[%s323 + $0x80] sm:$0xff] %vm3886, %v3870
        %3904 = vst.msk [vmem:[%s323 + $0x88] sm:$0xff] %vm3886, %v3871
        %3905 = vst.msk [vmem:[%s323 + $0x90] sm:$0xff] %vm3886, %v3872
        %3906 = vst.msk [vmem:[%s323 + $0x98] sm:$0xff] %vm3886, %v3873
        %3907 = vst.msk [vmem:[%s323 + $0xa0] sm:$0xff] %vm3886, %v3874
        %3908 = vst.msk [vmem:[%s323 + $0xa8] sm:$0xff] %vm3886, %v3875
        %3909 = vst.msk [vmem:[%s323 + $0xb0] sm:$0xff] %vm3886, %v3876
        %3910 = vst.msk [vmem:[%s323 + $0xb8] sm:$0xff] %vm3886, %v3877
        %3911 = vst.msk [vmem:[%s323 + $0xc0] sm:$0xff] %vm3886, %v3878
        %3912 = vst.msk [vmem:[%s323 + $0xc8] sm:$0xff] %vm3886, %v3879
        %3913 = vst.msk [vmem:[%s323 + $0xd0] sm:$0xff] %vm3886, %v3880
        %3914 = vst.msk [vmem:[%s323 + $0xd8] sm:$0xff] %vm3886, %v3881
        %3915 = vst.msk [vmem:[%s323 + $0xe0] sm:$0xff] %vm3886, %v3882
        %3916 = vst.msk [vmem:[%s323 + $0xe8] sm:$0xff] %vm3886, %v3883
        %3917 = vst.msk [vmem:[%s323 + $0xf0] sm:$0xff] %vm3886, %v3884
        %3918 = vst.msk [vmem:[%s323 + $0xf8] sm:$0xff] %vm3886, %v3885
        %v3919 = vsel %vm3886, %v3854, 0.0
        %v3920 = vsel %vm3886, %v3855, 0.0
        %v3921 = vadd.f32 %v3919, %v3920
        %v3922 = vsel %vm3886, %v3856, 0.0
        %v3923 = vadd.f32 %v3921, %v3922
        %v3924 = vsel %vm3886, %v3857, 0.0
        %v3925 = vadd.f32 %v3923, %v3924
        %v3926 = vsel %vm3886, %v3858, 0.0
        %v3927 = vadd.f32 %v3925, %v3926
        %v3928 = vsel %vm3886, %v3859, 0.0
        %v3929 = vadd.f32 %v3927, %v3928
        %v3930 = vsel %vm3886, %v3860, 0.0
        %v3931 = vadd.f32 %v3929, %v3930
        %v3932 = vsel %vm3886, %v3861, 0.0
        %v3933 = vadd.f32 %v3931, %v3932
        %v3934 = vsel %vm3886, %v3862, 0.0
        %v3935 = vadd.f32 %v3933, %v3934
        %v3936 = vsel %vm3886, %v3863, 0.0
        %v3937 = vadd.f32 %v3935, %v3936
        %v3938 = vsel %vm3886, %v3864, 0.0
        %v3939 = vadd.f32 %v3937, %v3938
        %v3940 = vsel %vm3886, %v3865, 0.0
        %v3941 = vadd.f32 %v3939, %v3940
        %v3942 = vsel %vm3886, %v3866, 0.0
        %v3943 = vadd.f32 %v3941, %v3942
        %v3944 = vsel %vm3886, %v3867, 0.0
        %v3945 = vadd.f32 %v3943, %v3944
        %v3946 = vsel %vm3886, %v3868, 0.0
        %v3947 = vadd.f32 %v3945, %v3946
        %v3948 = vsel %vm3886, %v3869, 0.0
        %v3949 = vadd.f32 %v3947, %v3948
        %v3950 = vsel %vm3886, %v3870, 0.0
        %v3951 = vadd.f32 %v3949, %v3950
        %v3952 = vsel %vm3886, %v3871, 0.0
        %v3953 = vadd.f32 %v3951, %v3952
        %v3954 = vsel %vm3886, %v3872, 0.0
        %v3955 = vadd.f32 %v3953, %v3954
        %v3956 = vsel %vm3886, %v3873, 0.0
        %v3957 = vadd.f32 %v3955, %v3956
        %v3958 = vsel %vm3886, %v3874, 0.0
        %v3959 = vadd.f32 %v3957, %v3958
        %v3960 = vsel %vm3886, %v3875, 0.0
        %v3961 = vadd.f32 %v3959, %v3960
        %v3962 = vsel %vm3886, %v3876, 0.0
        %v3963 = vadd.f32 %v3961, %v3962
        %v3964 = vsel %vm3886, %v3877, 0.0
        %v3965 = vadd.f32 %v3963, %v3964
        %v3966 = vsel %vm3886, %v3878, 0.0
        %v3967 = vadd.f32 %v3965, %v3966
        %v3968 = vsel %vm3886, %v3879, 0.0
        %v3969 = vadd.f32 %v3967, %v3968
        %v3970 = vsel %vm3886, %v3880, 0.0
        %v3971 = vadd.f32 %v3969, %v3970
        %v3972 = vsel %vm3886, %v3881, 0.0
        %v3973 = vadd.f32 %v3971, %v3972
        %v3974 = vsel %vm3886, %v3882, 0.0
        %v3975 = vadd.f32 %v3973, %v3974
        %v3976 = vsel %vm3886, %v3883, 0.0
        %v3977 = vadd.f32 %v3975, %v3976
        %v3978 = vsel %vm3886, %v3884, 0.0
        %v3979 = vadd.f32 %v3977, %v3978
        %v3980 = vsel %vm3886, %v3885, 0.0
        %v3981 = vadd.f32 %v3979, %v3980
        %v3982 = vrot.slane %v3981, 4
        %v3983 = vadd.f32 %v3981, %v3982
        %v3984 = vrot.slane %v3983, 2
        %v3985 = vadd.f32 %v3983, %v3984
        %v3986 = vrot.slane %v3985, 1
        %v3987 = vadd.f32 %v3985, %v3986
        %v3988 = vmul.f32 %v3854, %v3854
        %v3989 = vmul.f32 %v3855, %v3855
        %v3990 = vmul.f32 %v3856, %v3856
        %v3991 = vmul.f32 %v3857, %v3857
        %v3992 = vmul.f32 %v3858, %v3858
        %v3993 = vmul.f32 %v3859, %v3859
        %v3994 = vmul.f32 %v3860, %v3860
        %v3995 = vmul.f32 %v3861, %v3861
        %v3996 = vmul.f32 %v3862, %v3862
        %v3997 = vmul.f32 %v3863, %v3863
        %v3998 = vmul.f32 %v3864, %v3864
        %v3999 = vmul.f32 %v3865, %v3865
        %v4000 = vmul.f32 %v3866, %v3866
        %v4001 = vmul.f32 %v3867, %v3867
        %v4002 = vmul.f32 %v3868, %v3868
        %v4003 = vmul.f32 %v3869, %v3869
        %v4004 = vmul.f32 %v3870, %v3870
        %v4005 = vmul.f32 %v3871, %v3871
        %v4006 = vmul.f32 %v3872, %v3872
        %v4007 = vmul.f32 %v3873, %v3873
        %v4008 = vmul.f32 %v3874, %v3874
        %v4009 = vmul.f32 %v3875, %v3875
        %v4010 = vmul.f32 %v3876, %v3876
        %v4011 = vmul.f32 %v3877, %v3877
        %v4012 = vmul.f32 %v3878, %v3878
        %v4013 = vmul.f32 %v3879, %v3879
        %v4014 = vmul.f32 %v3880, %v3880
        %v4015 = vmul.f32 %v3881, %v3881
        %v4016 = vmul.f32 %v3882, %v3882
        %v4017 = vmul.f32 %v3883, %v3883
        %v4018 = vmul.f32 %v3884, %v3884
        %v4019 = vmul.f32 %v3885, %v3885
        %v4020 = vsel %vm3886, %v3988, 0.0
        %v4021 = vsel %vm3886, %v3989, 0.0
        %v4022 = vadd.f32 %v4020, %v4021
        %v4023 = vsel %vm3886, %v3990, 0.0
        %v4024 = vadd.f32 %v4022, %v4023
        %v4025 = vsel %vm3886, %v3991, 0.0
        %v4026 = vadd.f32 %v4024, %v4025
        %v4027 = vsel %vm3886, %v3992, 0.0
        %v4028 = vadd.f32 %v4026, %v4027
        %v4029 = vsel %vm3886, %v3993, 0.0
        %v4030 = vadd.f32 %v4028, %v4029
        %v4031 = vsel %vm3886, %v3994, 0.0
        %v4032 = vadd.f32 %v4030, %v4031
        %v4033 = vsel %vm3886, %v3995, 0.0
        %v4034 = vadd.f32 %v4032, %v4033
        %v4035 = vsel %vm3886, %v3996, 0.0
        %v4036 = vadd.f32 %v4034, %v4035
        %v4037 = vsel %vm3886, %v3997, 0.0
        %v4038 = vadd.f32 %v4036, %v4037
        %v4039 = vsel %vm3886, %v3998, 0.0
        %v4040 = vadd.f32 %v4038, %v4039
        %v4041 = vsel %vm3886, %v3999, 0.0
        %v4042 = vadd.f32 %v4040, %v4041
        %v4043 = vsel %vm3886, %v4000, 0.0
        %v4044 = vadd.f32 %v4042, %v4043
        %v4045 = vsel %vm3886, %v4001, 0.0
        %v4046 = vadd.f32 %v4044, %v4045
        %v4047 = vsel %vm3886, %v4002, 0.0
        %v4048 = vadd.f32 %v4046, %v4047
        %v4049 = vsel %vm3886, %v4003, 0.0
        %v4050 = vadd.f32 %v4048, %v4049
        %v4051 = vsel %vm3886, %v4004, 0.0
        %v4052 = vadd.f32 %v4050, %v4051
        %v4053 = vsel %vm3886, %v4005, 0.0
        %v4054 = vadd.f32 %v4052, %v4053
        %v4055 = vsel %vm3886, %v4006, 0.0
        %v4056 = vadd.f32 %v4054, %v4055
        %v4057 = vsel %vm3886, %v4007, 0.0
        %v4058 = vadd.f32 %v4056, %v4057
        %v4059 = vsel %vm3886, %v4008, 0.0
        %v4060 = vadd.f32 %v4058, %v4059
        %v4061 = vsel %vm3886, %v4009, 0.0
        %v4062 = vadd.f32 %v4060, %v4061
        %v4063 = vsel %vm3886, %v4010, 0.0
        %v4064 = vadd.f32 %v4062, %v4063
        %v4065 = vsel %vm3886, %v4011, 0.0
        %v4066 = vadd.f32 %v4064, %v4065
        %v4067 = vsel %vm3886, %v4012, 0.0
        %v4068 = vadd.f32 %v4066, %v4067
        %v4069 = vsel %vm3886, %v4013, 0.0
        %v4070 = vadd.f32 %v4068, %v4069
        %v4071 = vsel %vm3886, %v4014, 0.0
        %v4072 = vadd.f32 %v4070, %v4071
        %v4073 = vsel %vm3886, %v4015, 0.0
        %v4074 = vadd.f32 %v4072, %v4073
        %v4075 = vsel %vm3886, %v4016, 0.0
        %v4076 = vadd.f32 %v4074, %v4075
        %v4077 = vsel %vm3886, %v4017, 0.0
        %v4078 = vadd.f32 %v4076, %v4077
        %v4079 = vsel %vm3886, %v4018, 0.0
        %v4080 = vadd.f32 %v4078, %v4079
        %v4081 = vsel %vm3886, %v4019, 0.0
        %v4082 = vadd.f32 %v4080, %v4081
        %v4083 = vrot.slane %v4082, 4
        %v4084 = vadd.f32 %v4082, %v4083
        %v4085 = vrot.slane %v4084, 2
        %v4086 = vadd.f32 %v4084, %v4085
        %v4087 = vrot.slane %v4086, 1
        %v4088 = vadd.f32 %v4086, %v4087
        %v4089 = vlaneseq
        %v4090 = vshrl.u32 %v4089, 7
        %vm4091 = vcmp.eq.s32.totalorder %v4090, 0
        %v4092 = vsel %vm4091, %v3987, 0.0
        %vm4093 = vcmp.eq.s32.totalorder %v4090, 1
        %v4094 = vsel %vm4093, %v4088, 0.0
        %v4095 = vadd.f32 %v4092, %v4094
        %4096 = vst.msk [vmem:[%s281] sm:$0xff] %vm3886, %v4095
        %s4097 = sadd.s32 %s23, %s24
        %s4098 = smul.u32 32, %s4097
        %p4099 = scmp.lt.s32.totalorder %s4098, 63
        %s4100 = scalar_select %p4099, %s4098, 63
        %s4101 = smul.addr %s4100, 8
        %s4102 = scalar_lea.vmem %s3, %s4101
        %s4103 = sand.u32 %s150, 1
        %s4104 = scalar_lea.sflag [#allocation4], %s4103
        %s4105 = sand.u32 %s150, 1
        %s4106 = smul.addr %s4105, 8
        %s4107 = scalar_lea.vmem [#allocation3], %s4106
        // Predicated region
        $region33: #{tpu_custom_call.1} parent=31 // pred_check
          %p4108 = pneg %p132
        $region34: #{tpu_custom_call.1} parent=31 // pred_check_branch
          %4110 = sbr.rel (%p4108) target = $region36
        $region35: #{tpu_custom_call.1} parent=31 // pred_region
          %s4111 = sadd.s32 %s23, %s24
          %s4112 = smul.u32 32, %s4111
        $region36: #{tpu_custom_call.1} parent=31 // pred_fallthru
          _
        // Predicated region
        $region37: #{tpu_custom_call.1} parent=31 // pred_check
          %p4113 = pneg %p160
        $region38: #{tpu_custom_call.1} parent=31 // pred_check_branch
          %4115 = sbr.rel (%p4113) target = $region40
        $region39: #{tpu_custom_call.1} parent=31 // pred_region
          %s4116 = sadd.s32 %s23, %s24
          %s4118 = ssub.s32 128, 128
          %4119 = vsyncadd %s4104, %s4118
          %s4120 = smul.addr %s4116, 128
          %s4121 = scalar_lea.hbm %s4, %s4120
          %s4123 = sshll.u32 %s4107, 4
          %s4124 = int_to_ptr.vmem [resolvable:$true] %s4123
          %4126 = dma.vmem_to_hbm [thread:$0]  %s4124, 128, %s4121, %s4104
        $region40: #{tpu_custom_call.1} parent=31 // pred_fallthru
          _
      $region32: #{tpu_custom_call.1} parent=5 // pred_fallthru
        _
      %p4127 = scmp.le.s32.totalorder 2, %s14
      // Predicated region
      $region41: #{tpu_custom_call.1} parent=5 // pred_check
        %p4128 = pneg %p4127
      $region42: #{tpu_custom_call.1} parent=5 // pred_check_branch
        %4130 = sbr.rel (%p4128) target = $region44
      $region43: #{tpu_custom_call.1} parent=5 // pred_region
        %s4131 = ssub.s32 %s14, 2
        // Predicated region
        $region45: #{tpu_custom_call.1} parent=43 // pred_check
          %p4132 = pneg %p138
        $region46: #{tpu_custom_call.1} parent=43 // pred_check_branch
          %4134 = sbr.rel (%p4132) target = $region48
        $region47: #{tpu_custom_call.1} parent=43 // pred_region
          %s4135 = sadd.s32 %s25, %s26
          %s4136 = smul.u32 32, %s4135
          %p4137 = scmp.lt.s32.totalorder %s4136, 63
          %s4138 = scalar_select %p4137, %s4136, 63
          %s4139 = smul.addr %s4138, 8
          %s4140 = scalar_lea.vmem %s3, %s4139
        $region48: #{tpu_custom_call.1} parent=43 // pred_fallthru
          _
        // Predicated region
        $region49: #{tpu_custom_call.1} parent=43 // pred_check
          %p4141 = pneg %p166
        $region50: #{tpu_custom_call.1} parent=43 // pred_check_branch
          %4143 = sbr.rel (%p4141) target = $region52
        $region51: #{tpu_custom_call.1} parent=43 // pred_region
          %s4144 = sand.u32 %s151, 1
          %s4145 = scalar_lea.sflag [#allocation4], %s4144
          %s4146 = sand.u32 %s151, 1
          %s4147 = smul.addr %s4146, 8
          %s4148 = scalar_lea.vmem [#allocation3], %s4147
          %4149 = dma.done %s4145, 128
        $region52: #{tpu_custom_call.1} parent=43 // pred_fallthru
          _
      $region44: #{tpu_custom_call.1} parent=5 // pred_fallthru
        _
    $region6: #{tpu_custom_call.1} parent=1 // loop_footer
      %s18 = sadd.s32 1, %s14
    $region7: #{tpu_custom_call.1} parent=1 // loop_footer_branch
      %13 = sbr.rel target = $region3
    $region8: #{tpu_custom_call.1} parent=1 // loop_exit
      _
    %4150 = vsyncpa [#allocation4], 1
    %s4151 = scalar_lea.sflag [#allocation4], 1
    %4152 = vsyncpa %s4151, 1

</llo_original>
